<compile_context>
chip_gen: v7x
topology: tpu7x:2x2x1
jax: 0.10.0
libtpu: 0.0.40
codegen_flags: <defaults>
</compile_context>

<pallas_src>
import functools
import math

import jax
import jax.numpy as jnp
from jax import lax
from jax.experimental import pallas as pl
from jax.experimental.pallas import tpu as pltpu  # noqa: F401  (TPU namespace)

D_MODEL = 32
N_LAYERS = 2
HEADS = 4
D_FF = 4 * D_MODEL   # TODO(synk): reference FeedForward default is d_ff=2048; kept small here.
MAX_FRAMES = 16
EPS = 1e-6
NEG = -1e9


# ----------------------------- fused decoder kernel -----------------------------

def _decoder_kernel(trg_ref, enc_ref, pe_ref, tmask_ref, smask_ref,
                    na_ref, nb_ref,
                    wqkv_ref, bqkv_ref, wos_ref, bos_ref,
                    wqc_ref, bqc_ref, wkvc_ref, bkvc_ref, woc_ref, boc_ref,
                    w1_ref, b1_ref, w2_ref, b2_ref,
                    fa_ref, fb_ref,
                    out_ref, attn_ref,
                    *, n_layers, heads, b, sq, sk):
    d = trg_ref.shape[1]
    dk = d // heads
    scale = 1.0 / math.sqrt(dk)
    bf = jnp.bfloat16

    # ---- additive block-diagonal masks, built once (0 where attended, -1e9 otherwise) ----
    def block_mask(mask3_ref, sk_):
        # mask3_ref: (B, mq, sk_) with mq in {1, sq}; raw 0/1 mask (masked_fill(mask==0)).
        neg_blk = jnp.full((sq, sk_), NEG, jnp.float32)
        rows = []
        for bi in range(b):
            mb = jnp.where(jnp.broadcast_to(mask3_ref[bi], (sq, sk_)) != 0.0, 0.0, NEG)
            rows.append(jnp.concatenate(
                [mb if bj == bi else neg_blk for bj in range(b)], axis=1))
        return jnp.concatenate(rows, axis=0)            # (B*sq, B*sk_)

    tmask_add = block_mask(tmask_ref, sq)               # (B*Sq, B*Sq)
    smask_add = block_mask(smask_ref, sk)               # (B*Sq, B*Sk)

    def layer_norm(x2d, a, bb):
        mean = jnp.mean(x2d, axis=-1, keepdims=True)
        xc = x2d - mean
        # torch.Tensor.std is unbiased (ddof = 1)
        var = jnp.sum(xc * xc, axis=-1, keepdims=True) * (1.0 / (d - 1))
        inv = pl.reciprocal(jnp.sqrt(var) + EPS, approx=True)
        return a * xc * inv + bb

    def attend(q2d, k2d, v2d, add_mask, wo, bo, sk_, record):
        # q2d: (B*sq, D); k2d/v2d: (B*sk_, D); add_mask: (B*sq, B*sk_) block-diag additive.
        q_bf = q2d.astype(bf)
        k_bf = k2d.astype(bf)
        v_bf = v2d.astype(bf)
        wo_bf = wo.astype(bf)
        acc = jnp.zeros((b * sq, d), jnp.float32)
        recs = []
        for h in range(heads):
            qh = q_bf[:, h * dk:(h + 1) * dk]
            kh = k_bf[:, h * dk:(h + 1) * dk]
            vh = v_bf[:, h * dk:(h + 1) * dk]
            # Q @ K.T over the full batched matrix; off-diagonal batch blocks are masked
            # to -1e9 so their softmax weights are exactly 0 (no cross-batch leakage).
            s = lax.dot_general(qh, kh, (((1,), (1,)), ((), ())),
                                preferred_element_type=jnp.float32) * scale + add_mask
            s = s - jnp.max(s, axis=-1, keepdims=True)
            p = jnp.exp(s)
            p = p * pl.reciprocal(jnp.sum(p, axis=-1, keepdims=True), approx=True)
            if record:
                # Fold row blocks: off-diagonal entries are exactly 0, so summing the
                # per-batch row blocks yields the (Sq, B*Sk) per-batch weights layout.
                folded = p[0:sq, :]
                for bi in range(1, b):
                    folded = folded + p[bi * sq:(bi + 1) * sq, :]
                recs.append(folded)
            oh = jnp.dot(p.astype(bf), vh, preferred_element_type=jnp.float32)   # (B*sq, dk)
            # concat(heads) @ Wo == sum_h head_h @ Wo[h*dk:(h+1)*dk, :]
            acc = acc + jnp.dot(oh.astype(bf), wo_bf[h * dk:(h + 1) * dk, :],
                                preferred_element_type=jnp.float32)
        rec_slab = jnp.concatenate(recs, axis=1) if record else None             # (sq, H*B*sk_)
        return acc + bo, rec_slab

    # --- positional encoding: x = trg*sqrt(d) + pe (dropout identity in eval) ---
    pe = pe_ref[0:sq, :]                                                          # (Sq, D)
    x = trg_ref[...] * math.sqrt(float(d)) + jnp.concatenate([pe] * b, axis=0)    # (B*Sq, D)
    enc_bf = enc_ref[...].astype(bf)                                              # (B*Sk, D)

    # --- hoisted cross-attention K/V projections (depend only on encoder outputs) ---
    kv_all = [jnp.dot(enc_bf, wkvc_ref[li].astype(bf),
                      preferred_element_type=jnp.float32) + bkvc_ref[li]
              for li in range(n_layers)]

    for li in range(n_layers):
        lna = na_ref[li]                                                          # (3, D)
        lnb = nb_ref[li]

        # --- self attention (trg_mask) ---
        x2 = layer_norm(x, lna[0:1, :], lnb[0:1, :])
        qkv = jnp.dot(x2.astype(bf), wqkv_ref[li].astype(bf),
                      preferred_element_type=jnp.float32) + bqkv_ref[li]
        delta, _ = attend(qkv[:, 0:d], qkv[:, d:2 * d], qkv[:, 2 * d:3 * d],
                          tmask_add, wos_ref[li], bos_ref[li], sq, record=False)
        x = x + delta

        # --- cross attention over encoder outputs (src_mask); att_val recorded here ---
        # TODO(synk): Layers_Space_multihead source not provided; the `distances` spatial
        # term of the reference cross-attention cannot be reproduced and is left unused.
        x2 = layer_norm(x, lna[1:2, :], lnb[1:2, :])
        q = jnp.dot(x2.astype(bf), wqc_ref[li].astype(bf),
                    preferred_element_type=jnp.float32) + bqc_ref[li]
        kv = kv_all[li]
        delta, rec = attend(q, kv[:, 0:d], kv[:, d:2 * d],
                            smask_add, woc_ref[li], boc_ref[li], sk, record=True)
        x = x + delta
        col = li * heads * b * sk
        attn_ref[:, col:col + heads * b * sk] = rec                               # one wide store / layer

        # --- feed forward ---
        x2 = layer_norm(x, lna[2:3, :], lnb[2:3, :])
        h1 = jnp.maximum(
            jnp.dot(x2.astype(bf), w1_ref[li].astype(bf),
                    preferred_element_type=jnp.float32) + b1_ref[li], 0.0)
        x = x + jnp.dot(h1.astype(bf), w2_ref[li].astype(bf),
                        preferred_element_type=jnp.float32) + b2_ref[li]

    # --- final Norm ---
    out_ref[...] = layer_norm(x, fa_ref[...], fb_ref[...])


# ----------------------------- wrapper -----------------------------

def decoder_forward(params, trg, e_outputs, distances, src_mask, trg_mask,
                    is_test=True, heads=HEADS):
    """Matches Decoder.forward(trg, e_outputs, distances, src_mask, trg_mask, is_test).

    Returns (norm(x), att_val_dec) where att_val_dec['layer<i>'] holds the layer-i
    cross-attention weights of shape (B, H, S_trg, S_src).
    """
    del distances, is_test  # distances: see TODO in kernel; dropout is identity.
    b, sq, d = trg.shape
    sk = e_outputs.shape[1]
    n_layers = params["wqkv"].shape[0]

    trg2d = jnp.asarray(trg, jnp.float32).reshape(b * sq, d)
    enc2d = jnp.asarray(e_outputs, jnp.float32).reshape(b * sk, d)
    tmask = jnp.asarray(trg_mask, jnp.float32)          # (B, Sq, Sq) raw 0/1
    smask = jnp.asarray(src_mask, jnp.float32)          # (B, 1, Sk)  raw 0/1

    out2d, attn_flat = pl.pallas_call(
        functools.partial(_decoder_kernel, n_layers=n_layers, heads=heads,
                          b=b, sq=sq, sk=sk),
        out_shape=(
            jax.ShapeDtypeStruct((b * sq, d), jnp.float32),
            # lane-dense attention-weights slab: (Sq, L*H*B*Sk) -> (8, 128) at demo shapes
            jax.ShapeDtypeStruct((sq, n_layers * heads * b * sk), jnp.float32),
        ),
    )(trg2d, enc2d, params["pe"], tmask, smask,
      params["norm_a"], params["norm_b"],
      params["wqkv"], params["bqkv"], params["wo_s"], params["bo_s"],
      params["wq_c"], params["bq_c"], params["wkv_c"], params["bkv_c"],
      params["wo_c"], params["bo_c"],
      params["w1"], params["b1"], params["w2"], params["b2"],
      params["fnorm_a"], params["fnorm_b"])

    out = out2d.reshape(b, sq, d)
    # (Sq, L, H, B, Sk) -> (L, B, H, Sq, Sk); layout plumbing only.
    attn = attn_flat.reshape(sq, n_layers, heads, b, sk).transpose(1, 3, 2, 0, 4)
    att_val_dec = {f"layer{i}": attn[i] for i in range(n_layers)}
    return out, att_val_dec


# ----------------------------- parameters -----------------------------

def build_pe_table(max_len, d_model):
    # Reproduces the SLE PositionalEncoder table (including its exponent quirk).
    pos = jnp.arange(max_len, dtype=jnp.float32)[:, None]
    i = jnp.arange(0, d_model, 2, dtype=jnp.float32)[None, :]
    pe_sin = jnp.sin(pos / jnp.power(10000.0, (2 * i) / d_model))
    pe_cos = jnp.cos(pos / jnp.power(10000.0, (2 * (i + 1)) / d_model))
    return jnp.stack([pe_sin, pe_cos], axis=-1).reshape(max_len, d_model)


def init_params(key, d_model, n_layers, heads, d_ff, max_frames):
    keys = iter(jax.random.split(key, 64))

    def w(shape):
        return jax.random.normal(next(keys), shape, jnp.float32) * 0.02

    return dict(
        pe=build_pe_table(max_frames, d_model),
        # 3 pre-norms per layer (self-attn, cross-attn, FFN), stacked over layers.
        norm_a=jnp.ones((n_layers, 3, d_model), jnp.float32),
        norm_b=jnp.zeros((n_layers, 3, d_model), jnp.float32),
        # self-attention: fused QKV + output projection
        wqkv=w((n_layers, d_model, 3 * d_model)),
        bqkv=jnp.zeros((n_layers, 1, 3 * d_model), jnp.float32),
        wo_s=w((n_layers, d_model, d_model)),
        bo_s=jnp.zeros((n_layers, 1, d_model), jnp.float32),
        # cross-attention: Q from x, fused KV from e_outputs, output projection
        wq_c=w((n_layers, d_model, d_model)),
        bq_c=jnp.zeros((n_layers, 1, d_model), jnp.float32),
        wkv_c=w((n_layers, d_model, 2 * d_model)),
        bkv_c=jnp.zeros((n_layers, 1, 2 * d_model), jnp.float32),
        wo_c=w((n_layers, d_model, d_model)),
        bo_c=jnp.zeros((n_layers, 1, d_model), jnp.float32),
        # feed-forward
        w1=w((n_layers, d_model, d_ff)),
        b1=jnp.zeros((n_layers, 1, d_ff), jnp.float32),
        w2=w((n_layers, d_ff, d_model)),
        b2=jnp.zeros((n_layers, 1, d_model), jnp.float32),
        # final Norm of the Decoder
        fnorm_a=jnp.ones((1, d_model), jnp.float32),
        fnorm_b=jnp.zeros((1, d_model), jnp.float32),
    )


# ----------------------------- demo -----------------------------

if __name__ == "__main__":
    B, S_SRC, S_TRG = 2, 8, 8
    key = jax.random.PRNGKey(0)
    kp, ks, kt, kd = jax.random.split(key, 4)

    params = init_params(kp, D_MODEL, N_LAYERS, HEADS, D_FF, MAX_FRAMES)

    e_outputs = jax.random.normal(ks, (B, S_SRC, D_MODEL), jnp.float32)
    trg = jax.random.normal(kt, (B, S_TRG, D_MODEL), jnp.float32)
    distances = jax.random.normal(kd, (B, S_TRG, S_SRC), jnp.float32)

    src_mask = jnp.ones((B, 1, S_SRC), jnp.float32)                       # pad mask (all valid)
    trg_mask = jnp.broadcast_to(                                          # causal mask
        jnp.tril(jnp.ones((S_TRG, S_TRG), jnp.float32))[None], (B, S_TRG, S_TRG)
    )

    out, att_val_dec = decoder_forward(params, trg, e_outputs, distances,
                                       src_mask, trg_mask, is_test=True)
    jax.block_until_ready(out)

    assert out.shape == (B, S_TRG, D_MODEL)
    assert bool(jnp.all(jnp.isfinite(out)))
    for i in range(N_LAYERS):
        a = att_val_dec[f"layer{i}"]
        assert a.shape == (B, HEADS, S_TRG, S_SRC)
        assert bool(jnp.all(jnp.isfinite(a)))
        # softmax rows sum to ~1 (approx-reciprocal + bf16-operand matmuls => looser tol)
        assert bool(jnp.allclose(jnp.sum(a, axis=-1), 1.0, atol=5e-3))
    print("KERNEL_OK")
</pallas_src>

<mosaic_0001>
module attributes {stable_mosaic.version = 11 : i64} {
  func.func @_decoder_kernel(%arg0: memref<16x32xf32, #tpu.memory_space<vmem>>, %arg1: memref<16x32xf32, #tpu.memory_space<vmem>>, %arg2: memref<16x32xf32, #tpu.memory_space<vmem>>, %arg3: memref<2x8x8xf32, #tpu.memory_space<vmem>>, %arg4: memref<2x1x8xf32, #tpu.memory_space<vmem>>, %arg5: memref<2x3x32xf32, #tpu.memory_space<vmem>>, %arg6: memref<2x3x32xf32, #tpu.memory_space<vmem>>, %arg7: memref<2x32x96xf32, #tpu.memory_space<vmem>>, %arg8: memref<2x1x96xf32, #tpu.memory_space<vmem>>, %arg9: memref<2x32x32xf32, #tpu.memory_space<vmem>>, %arg10: memref<2x1x32xf32, #tpu.memory_space<vmem>>, %arg11: memref<2x32x32xf32, #tpu.memory_space<vmem>>, %arg12: memref<2x1x32xf32, #tpu.memory_space<vmem>>, %arg13: memref<2x32x64xf32, #tpu.memory_space<vmem>>, %arg14: memref<2x1x64xf32, #tpu.memory_space<vmem>>, %arg15: memref<2x32x32xf32, #tpu.memory_space<vmem>>, %arg16: memref<2x1x32xf32, #tpu.memory_space<vmem>>, %arg17: memref<2x32x128xf32, #tpu.memory_space<vmem>>, %arg18: memref<2x1x128xf32, #tpu.memory_space<vmem>>, %arg19: memref<2x128x32xf32, #tpu.memory_space<vmem>>, %arg20: memref<2x1x32xf32, #tpu.memory_space<vmem>>, %arg21: memref<1x32xf32, #tpu.memory_space<vmem>>, %arg22: memref<1x32xf32, #tpu.memory_space<vmem>>, %arg23: memref<16x32xf32, #tpu.memory_space<vmem>>, %arg24: memref<8x128xf32, #tpu.memory_space<vmem>>) attributes {dimension_semantics = [], scalar_prefetch = 0 : i64, scratch_operands = 0 : i64, tpu.core_type = #tpu.core_type<tc>} {
    %cst = arith.constant -1.000000e+09 : f32
    %0 = vector.broadcast %cst : f32 to vector<8x8xf32>
    %c0 = arith.constant 0 : index
    %c0_0 = arith.constant 0 : index
    %c0_1 = arith.constant 0 : index
    %1 = vector.load %arg3[%c0, %c0_0, %c0_1] : memref<2x8x8xf32, #tpu.memory_space<vmem>>, vector<1x8x8xf32>
    %2 = vector.shape_cast %1 : vector<1x8x8xf32> to vector<8x8xf32>
    %cst_2 = arith.constant 0.000000e+00 : f32
    %3 = vector.broadcast %cst_2 : f32 to vector<8x8xf32>
    %4 = arith.cmpf one, %2, %3 : vector<8x8xf32>
    %cst_3 = arith.constant 0.000000e+00 : f32
    %cst_4 = arith.constant -1.000000e+09 : f32
    %5 = vector.broadcast %cst_3 : f32 to vector<8x8xf32>
    %6 = vector.broadcast %cst_4 : f32 to vector<8x8xf32>
    %7 = arith.select %4, %5, %6 : vector<8x8xi1>, vector<8x8xf32>
    %8 = tpu.concatenate %7, %0 in 1 : vector<8x8xf32>, vector<8x8xf32> -> vector<8x16xf32>
    %c1 = arith.constant 1 : index
    %c0_5 = arith.constant 0 : index
    %c0_6 = arith.constant 0 : index
    %9 = vector.load %arg3[%c1, %c0_5, %c0_6] : memref<2x8x8xf32, #tpu.memory_space<vmem>>, vector<1x8x8xf32>
    %10 = vector.shape_cast %9 : vector<1x8x8xf32> to vector<8x8xf32>
    %cst_7 = arith.constant 0.000000e+00 : f32
    %11 = vector.broadcast %cst_7 : f32 to vector<8x8xf32>
    %12 = arith.cmpf one, %10, %11 : vector<8x8xf32>
    %cst_8 = arith.constant 0.000000e+00 : f32
    %cst_9 = arith.constant -1.000000e+09 : f32
    %13 = vector.broadcast %cst_8 : f32 to vector<8x8xf32>
    %14 = vector.broadcast %cst_9 : f32 to vector<8x8xf32>
    %15 = arith.select %12, %13, %14 : vector<8x8xi1>, vector<8x8xf32>
    %16 = tpu.concatenate %0, %15 in 1 : vector<8x8xf32>, vector<8x8xf32> -> vector<8x16xf32>
    %17 = tpu.concatenate %8, %16 in 0 : vector<8x16xf32>, vector<8x16xf32> -> vector<16x16xf32>
    %cst_10 = arith.constant -1.000000e+09 : f32
    %18 = vector.broadcast %cst_10 : f32 to vector<8x8xf32>
    %c0_11 = arith.constant 0 : index
    %c0_12 = arith.constant 0 : index
    %c0_13 = arith.constant 0 : index
    %19 = vector.load %arg4[%c0_11, %c0_12, %c0_13] : memref<2x1x8xf32, #tpu.memory_space<vmem>>, vector<1x1x8xf32>
    %20 = vector.shape_cast %19 : vector<1x1x8xf32> to vector<1x8xf32>
    %21 = vector.shape_cast %20 : vector<1x8xf32> to vector<1x8xf32>
    %22 = vector.broadcast %21 : vector<1x8xf32> to vector<8x8xf32>
    %cst_14 = arith.constant 0.000000e+00 : f32
    %23 = vector.broadcast %cst_14 : f32 to vector<8x8xf32>
    %24 = arith.cmpf one, %22, %23 : vector<8x8xf32>
    %cst_15 = arith.constant 0.000000e+00 : f32
    %cst_16 = arith.constant -1.000000e+09 : f32
    %25 = vector.broadcast %cst_15 : f32 to vector<8x8xf32>
    %26 = vector.broadcast %cst_16 : f32 to vector<8x8xf32>
    %27 = arith.select %24, %25, %26 : vector<8x8xi1>, vector<8x8xf32>
    %28 = tpu.concatenate %27, %18 in 1 : vector<8x8xf32>, vector<8x8xf32> -> vector<8x16xf32>
    %c1_17 = arith.constant 1 : index
    %c0_18 = arith.constant 0 : index
    %c0_19 = arith.constant 0 : index
    %29 = vector.load %arg4[%c1_17, %c0_18, %c0_19] : memref<2x1x8xf32, #tpu.memory_space<vmem>>, vector<1x1x8xf32>
    %30 = vector.shape_cast %29 : vector<1x1x8xf32> to vector<1x8xf32>
    %31 = vector.shape_cast %30 : vector<1x8xf32> to vector<1x8xf32>
    %32 = vector.broadcast %31 : vector<1x8xf32> to vector<8x8xf32>
    %cst_20 = arith.constant 0.000000e+00 : f32
    %33 = vector.broadcast %cst_20 : f32 to vector<8x8xf32>
    %34 = arith.cmpf one, %32, %33 : vector<8x8xf32>
    %cst_21 = arith.constant 0.000000e+00 : f32
    %cst_22 = arith.constant -1.000000e+09 : f32
    %35 = vector.broadcast %cst_21 : f32 to vector<8x8xf32>
    %36 = vector.broadcast %cst_22 : f32 to vector<8x8xf32>
    %37 = arith.select %34, %35, %36 : vector<8x8xi1>, vector<8x8xf32>
    %38 = tpu.concatenate %18, %37 in 1 : vector<8x8xf32>, vector<8x8xf32> -> vector<8x16xf32>
    %39 = tpu.concatenate %28, %38 in 0 : vector<8x16xf32>, vector<8x16xf32> -> vector<16x16xf32>
    %c0_23 = arith.constant 0 : index
    %c0_24 = arith.constant 0 : index
    %40 = vector.load %arg2[%c0_23, %c0_24] : memref<16x32xf32, #tpu.memory_space<vmem>>, vector<8x32xf32>
    %c0_25 = arith.constant 0 : index
    %c0_26 = arith.constant 0 : index
    %41 = vector.load %arg0[%c0_25, %c0_26] : memref<16x32xf32, #tpu.memory_space<vmem>>, vector<16x32xf32>
    %cst_27 = arith.constant 5.65685415 : f32
    %42 = vector.broadcast %cst_27 : f32 to vector<16x32xf32>
    %43 = arith.mulf %41, %42 : vector<16x32xf32>
    %44 = tpu.concatenate %40, %40 in 0 : vector<8x32xf32>, vector<8x32xf32> -> vector<16x32xf32>
    %45 = arith.addf %43, %44 : vector<16x32xf32>
    %c0_28 = arith.constant 0 : index
    %c0_29 = arith.constant 0 : index
    %46 = vector.load %arg1[%c0_28, %c0_29] : memref<16x32xf32, #tpu.memory_space<vmem>>, vector<16x32xf32>
    %47 = arith.truncf %46 : vector<16x32xf32> to vector<16x32xbf16>
    %c0_30 = arith.constant 0 : index
    %c0_31 = arith.constant 0 : index
    %c0_32 = arith.constant 0 : index
    %48 = vector.load %arg13[%c0_30, %c0_31, %c0_32] : memref<2x32x64xf32, #tpu.memory_space<vmem>>, vector<1x32x64xf32>
    %49 = vector.shape_cast %48 : vector<1x32x64xf32> to vector<32x64xf32>
    %50 = arith.truncf %49 : vector<32x64xf32> to vector<32x64xbf16>
    %cst_33 = arith.constant dense<0.000000e+00> : vector<16x64xf32>
    %51 = tpu.matmul %47, %50, %cst_33 {dimension_numbers = #tpu.dot_dimension_numbers<[1], [0], [0], [1], [0, 0, 1, 1], [], []>} : vector<16x32xbf16>, vector<32x64xbf16>, vector<16x64xf32> -> vector<16x64xf32>
    %c0_34 = arith.constant 0 : index
    %c0_35 = arith.constant 0 : index
    %c0_36 = arith.constant 0 : index
    %52 = vector.load %arg14[%c0_34, %c0_35, %c0_36] : memref<2x1x64xf32, #tpu.memory_space<vmem>>, vector<1x1x64xf32>
    %53 = vector.shape_cast %52 : vector<1x1x64xf32> to vector<1x64xf32>
    %54 = vector.broadcast %53 : vector<1x64xf32> to vector<16x64xf32>
    %55 = arith.addf %51, %54 : vector<16x64xf32>
    %c1_37 = arith.constant 1 : index
    %c0_38 = arith.constant 0 : index
    %c0_39 = arith.constant 0 : index
    %56 = vector.load %arg13[%c1_37, %c0_38, %c0_39] : memref<2x32x64xf32, #tpu.memory_space<vmem>>, vector<1x32x64xf32>
    %57 = vector.shape_cast %56 : vector<1x32x64xf32> to vector<32x64xf32>
    %58 = arith.truncf %57 : vector<32x64xf32> to vector<32x64xbf16>
    %cst_40 = arith.constant dense<0.000000e+00> : vector<16x64xf32>
    %59 = tpu.matmul %47, %58, %cst_40 {dimension_numbers = #tpu.dot_dimension_numbers<[1], [0], [0], [1], [0, 0, 1, 1], [], []>} : vector<16x32xbf16>, vector<32x64xbf16>, vector<16x64xf32> -> vector<16x64xf32>
    %c1_41 = arith.constant 1 : index
    %c0_42 = arith.constant 0 : index
    %c0_43 = arith.constant 0 : index
    %60 = vector.load %arg14[%c1_41, %c0_42, %c0_43] : memref<2x1x64xf32, #tpu.memory_space<vmem>>, vector<1x1x64xf32>
    %61 = vector.shape_cast %60 : vector<1x1x64xf32> to vector<1x64xf32>
    %62 = vector.broadcast %61 : vector<1x64xf32> to vector<16x64xf32>
    %63 = arith.addf %59, %62 : vector<16x64xf32>
    %c0_44 = arith.constant 0 : index
    %c0_45 = arith.constant 0 : index
    %c0_46 = arith.constant 0 : index
    %64 = vector.load %arg5[%c0_44, %c0_45, %c0_46] : memref<2x3x32xf32, #tpu.memory_space<vmem>>, vector<1x3x32xf32>
    %65 = vector.shape_cast %64 : vector<1x3x32xf32> to vector<3x32xf32>
    %c0_47 = arith.constant 0 : index
    %c0_48 = arith.constant 0 : index
    %c0_49 = arith.constant 0 : index
    %66 = vector.load %arg6[%c0_47, %c0_48, %c0_49] : memref<2x3x32xf32, #tpu.memory_space<vmem>>, vector<1x3x32xf32>
    %67 = vector.shape_cast %66 : vector<1x3x32xf32> to vector<3x32xf32>
    %68 = vector.extract_strided_slice %65 {offsets = [0, 0], sizes = [1, 32], strides = [1, 1]} : vector<3x32xf32> to vector<1x32xf32>
    %69 = vector.extract_strided_slice %67 {offsets = [0, 0], sizes = [1, 32], strides = [1, 1]} : vector<3x32xf32> to vector<1x32xf32>
    %cst_50 = arith.constant dense<0.000000e+00> : vector<16xf32>
    %70 = vector.multi_reduction <add>, %45, %cst_50 [1] : vector<16x32xf32> to vector<16xf32>
    %71 = vector.shape_cast %70 : vector<16xf32> to vector<16x1xf32>
    %cst_51 = arith.constant 3.200000e+01 : f32
    %72 = vector.broadcast %cst_51 : f32 to vector<16x1xf32>
    %73 = arith.divf %71, %72 : vector<16x1xf32>
    %74 = vector.broadcast %73 : vector<16x1xf32> to vector<16x32xf32>
    %75 = arith.subf %45, %74 : vector<16x32xf32>
    %76 = arith.mulf %75, %75 : vector<16x32xf32>
    %cst_52 = arith.constant dense<0.000000e+00> : vector<16xf32>
    %77 = vector.multi_reduction <add>, %76, %cst_52 [1] : vector<16x32xf32> to vector<16xf32>
    %78 = vector.shape_cast %77 : vector<16xf32> to vector<16x1xf32>
    %cst_53 = arith.constant 0.0322580636 : f32
    %79 = vector.broadcast %cst_53 : f32 to vector<16x1xf32>
    %80 = arith.mulf %78, %79 : vector<16x1xf32>
    %81 = math.sqrt %80 : vector<16x1xf32>
    %cst_54 = arith.constant 9.99999997E-7 : f32
    %82 = vector.broadcast %cst_54 : f32 to vector<16x1xf32>
    %83 = arith.addf %81, %82 : vector<16x1xf32>
    %84 = tpu.reciprocal %83 {approx = true} : vector<16x1xf32> -> vector<16x1xf32>
    %85 = vector.broadcast %68 : vector<1x32xf32> to vector<16x32xf32>
    %86 = arith.mulf %85, %75 : vector<16x32xf32>
    %87 = vector.broadcast %84 : vector<16x1xf32> to vector<16x32xf32>
    %88 = arith.mulf %86, %87 : vector<16x32xf32>
    %89 = vector.broadcast %69 : vector<1x32xf32> to vector<16x32xf32>
    %90 = arith.addf %88, %89 : vector<16x32xf32>
    %91 = arith.truncf %90 : vector<16x32xf32> to vector<16x32xbf16>
    %c0_55 = arith.constant 0 : index
    %c0_56 = arith.constant 0 : index
    %c0_57 = arith.constant 0 : index
    %92 = vector.load %arg7[%c0_55, %c0_56, %c0_57] : memref<2x32x96xf32, #tpu.memory_space<vmem>>, vector<1x32x96xf32>
    %93 = vector.shape_cast %92 : vector<1x32x96xf32> to vector<32x96xf32>
    %94 = arith.truncf %93 : vector<32x96xf32> to vector<32x96xbf16>
    %cst_58 = arith.constant dense<0.000000e+00> : vector<16x96xf32>
    %95 = tpu.matmul %91, %94, %cst_58 {dimension_numbers = #tpu.dot_dimension_numbers<[1], [0], [0], [1], [0, 0, 1, 1], [], []>} : vector<16x32xbf16>, vector<32x96xbf16>, vector<16x96xf32> -> vector<16x96xf32>
    %c0_59 = arith.constant 0 : index
    %c0_60 = arith.constant 0 : index
    %c0_61 = arith.constant 0 : index
    %96 = vector.load %arg8[%c0_59, %c0_60, %c0_61] : memref<2x1x96xf32, #tpu.memory_space<vmem>>, vector<1x1x96xf32>
    %97 = vector.shape_cast %96 : vector<1x1x96xf32> to vector<1x96xf32>
    %98 = vector.broadcast %97 : vector<1x96xf32> to vector<16x96xf32>
    %99 = arith.addf %95, %98 : vector<16x96xf32>
    %100 = vector.extract_strided_slice %99 {offsets = [0, 0], sizes = [16, 32], strides = [1, 1]} : vector<16x96xf32> to vector<16x32xf32>
    %101 = vector.extract_strided_slice %99 {offsets = [0, 32], sizes = [16, 32], strides = [1, 1]} : vector<16x96xf32> to vector<16x32xf32>
    %102 = vector.extract_strided_slice %99 {offsets = [0, 64], sizes = [16, 32], strides = [1, 1]} : vector<16x96xf32> to vector<16x32xf32>
    %c0_62 = arith.constant 0 : index
    %c0_63 = arith.constant 0 : index
    %c0_64 = arith.constant 0 : index
    %103 = vector.load %arg9[%c0_62, %c0_63, %c0_64] : memref<2x32x32xf32, #tpu.memory_space<vmem>>, vector<1x32x32xf32>
    %104 = vector.shape_cast %103 : vector<1x32x32xf32> to vector<32x32xf32>
    %c0_65 = arith.constant 0 : index
    %c0_66 = arith.constant 0 : index
    %c0_67 = arith.constant 0 : index
    %105 = vector.load %arg10[%c0_65, %c0_66, %c0_67] : memref<2x1x32xf32, #tpu.memory_space<vmem>>, vector<1x1x32xf32>
    %106 = vector.shape_cast %105 : vector<1x1x32xf32> to vector<1x32xf32>
    %107 = arith.truncf %100 : vector<16x32xf32> to vector<16x32xbf16>
    %108 = arith.truncf %101 : vector<16x32xf32> to vector<16x32xbf16>
    %109 = arith.truncf %102 : vector<16x32xf32> to vector<16x32xbf16>
    %110 = arith.truncf %104 : vector<32x32xf32> to vector<32x32xbf16>
    %cst_68 = arith.constant 0.000000e+00 : f32
    %111 = vector.broadcast %cst_68 : f32 to vector<16x32xf32>
    %112 = vector.extract_strided_slice %107 {offsets = [0, 0], sizes = [16, 8], strides = [1, 1]} : vector<16x32xbf16> to vector<16x8xbf16>
    %113 = vector.extract_strided_slice %108 {offsets = [0, 0], sizes = [16, 8], strides = [1, 1]} : vector<16x32xbf16> to vector<16x8xbf16>
    %114 = vector.extract_strided_slice %109 {offsets = [0, 0], sizes = [16, 8], strides = [1, 1]} : vector<16x32xbf16> to vector<16x8xbf16>
    %cst_69 = arith.constant dense<0.000000e+00> : vector<16x16xf32>
    %115 = tpu.matmul %112, %113, %cst_69 {dimension_numbers = #tpu.dot_dimension_numbers<[1], [1], [0], [0], [0, 0, 1, 0], [], []>} : vector<16x8xbf16>, vector<16x8xbf16>, vector<16x16xf32> -> vector<16x16xf32>
    %cst_70 = arith.constant 0.353553385 : f32
    %116 = vector.broadcast %cst_70 : f32 to vector<16x16xf32>
    %117 = arith.mulf %115, %116 : vector<16x16xf32>
    %118 = arith.addf %117, %17 : vector<16x16xf32>
    %cst_71 = arith.constant dense<0xFF800000> : vector<16xf32>
    %119 = vector.multi_reduction <maximumf>, %118, %cst_71 [1] : vector<16x16xf32> to vector<16xf32>
    %120 = vector.shape_cast %119 : vector<16xf32> to vector<16x1xf32>
    %121 = vector.broadcast %120 : vector<16x1xf32> to vector<16x16xf32>
    %122 = arith.subf %118, %121 : vector<16x16xf32>
    %123 = math.exp %122 : vector<16x16xf32>
    %cst_72 = arith.constant dense<0.000000e+00> : vector<16xf32>
    %124 = vector.multi_reduction <add>, %123, %cst_72 [1] : vector<16x16xf32> to vector<16xf32>
    %125 = vector.shape_cast %124 : vector<16xf32> to vector<16x1xf32>
    %126 = tpu.reciprocal %125 {approx = true} : vector<16x1xf32> -> vector<16x1xf32>
    %127 = vector.broadcast %126 : vector<16x1xf32> to vector<16x16xf32>
    %128 = arith.mulf %123, %127 : vector<16x16xf32>
    %129 = arith.truncf %128 : vector<16x16xf32> to vector<16x16xbf16>
    %cst_73 = arith.constant dense<0.000000e+00> : vector<16x8xf32>
    %130 = tpu.matmul %129, %114, %cst_73 {dimension_numbers = #tpu.dot_dimension_numbers<[1], [0], [0], [1], [0, 0, 1, 1], [], []>} : vector<16x16xbf16>, vector<16x8xbf16>, vector<16x8xf32> -> vector<16x8xf32>
    %131 = arith.truncf %130 : vector<16x8xf32> to vector<16x8xbf16>
    %132 = vector.extract_strided_slice %110 {offsets = [0, 0], sizes = [8, 32], strides = [1, 1]} : vector<32x32xbf16> to vector<8x32xbf16>
    %cst_74 = arith.constant dense<0.000000e+00> : vector<16x32xf32>
    %133 = tpu.matmul %131, %132, %cst_74 {dimension_numbers = #tpu.dot_dimension_numbers<[1], [0], [0], [1], [0, 0, 1, 1], [], []>} : vector<16x8xbf16>, vector<8x32xbf16>, vector<16x32xf32> -> vector<16x32xf32>
    %134 = arith.addf %111, %133 : vector<16x32xf32>
    %135 = vector.extract_strided_slice %107 {offsets = [0, 8], sizes = [16, 8], strides = [1, 1]} : vector<16x32xbf16> to vector<16x8xbf16>
    %136 = vector.extract_strided_slice %108 {offsets = [0, 8], sizes = [16, 8], strides = [1, 1]} : vector<16x32xbf16> to vector<16x8xbf16>
    %137 = vector.extract_strided_slice %109 {offsets = [0, 8], sizes = [16, 8], strides = [1, 1]} : vector<16x32xbf16> to vector<16x8xbf16>
    %cst_75 = arith.constant dense<0.000000e+00> : vector<16x16xf32>
    %138 = tpu.matmul %135, %136, %cst_75 {dimension_numbers = #tpu.dot_dimension_numbers<[1], [1], [0], [0], [0, 0, 1, 0], [], []>} : vector<16x8xbf16>, vector<16x8xbf16>, vector<16x16xf32> -> vector<16x16xf32>
    %cst_76 = arith.constant 0.353553385 : f32
    %139 = vector.broadcast %cst_76 : f32 to vector<16x16xf32>
    %140 = arith.mulf %138, %139 : vector<16x16xf32>
    %141 = arith.addf %140, %17 : vector<16x16xf32>
    %cst_77 = arith.constant dense<0xFF800000> : vector<16xf32>
    %142 = vector.multi_reduction <maximumf>, %141, %cst_77 [1] : vector<16x16xf32> to vector<16xf32>
    %143 = vector.shape_cast %142 : vector<16xf32> to vector<16x1xf32>
    %144 = vector.broadcast %143 : vector<16x1xf32> to vector<16x16xf32>
    %145 = arith.subf %141, %144 : vector<16x16xf32>
    %146 = math.exp %145 : vector<16x16xf32>
    %cst_78 = arith.constant dense<0.000000e+00> : vector<16xf32>
    %147 = vector.multi_reduction <add>, %146, %cst_78 [1] : vector<16x16xf32> to vector<16xf32>
    %148 = vector.shape_cast %147 : vector<16xf32> to vector<16x1xf32>
    %149 = tpu.reciprocal %148 {approx = true} : vector<16x1xf32> -> vector<16x1xf32>
    %150 = vector.broadcast %149 : vector<16x1xf32> to vector<16x16xf32>
    %151 = arith.mulf %146, %150 : vector<16x16xf32>
    %152 = arith.truncf %151 : vector<16x16xf32> to vector<16x16xbf16>
    %cst_79 = arith.constant dense<0.000000e+00> : vector<16x8xf32>
    %153 = tpu.matmul %152, %137, %cst_79 {dimension_numbers = #tpu.dot_dimension_numbers<[1], [0], [0], [1], [0, 0, 1, 1], [], []>} : vector<16x16xbf16>, vector<16x8xbf16>, vector<16x8xf32> -> vector<16x8xf32>
    %154 = arith.truncf %153 : vector<16x8xf32> to vector<16x8xbf16>
    %155 = vector.extract_strided_slice %110 {offsets = [8, 0], sizes = [8, 32], strides = [1, 1]} : vector<32x32xbf16> to vector<8x32xbf16>
    %cst_80 = arith.constant dense<0.000000e+00> : vector<16x32xf32>
    %156 = tpu.matmul %154, %155, %cst_80 {dimension_numbers = #tpu.dot_dimension_numbers<[1], [0], [0], [1], [0, 0, 1, 1], [], []>} : vector<16x8xbf16>, vector<8x32xbf16>, vector<16x32xf32> -> vector<16x32xf32>
    %157 = arith.addf %134, %156 : vector<16x32xf32>
    %158 = vector.extract_strided_slice %107 {offsets = [0, 16], sizes = [16, 8], strides = [1, 1]} : vector<16x32xbf16> to vector<16x8xbf16>
    %159 = vector.extract_strided_slice %108 {offsets = [0, 16], sizes = [16, 8], strides = [1, 1]} : vector<16x32xbf16> to vector<16x8xbf16>
    %160 = vector.extract_strided_slice %109 {offsets = [0, 16], sizes = [16, 8], strides = [1, 1]} : vector<16x32xbf16> to vector<16x8xbf16>
    %cst_81 = arith.constant dense<0.000000e+00> : vector<16x16xf32>
    %161 = tpu.matmul %158, %159, %cst_81 {dimension_numbers = #tpu.dot_dimension_numbers<[1], [1], [0], [0], [0, 0, 1, 0], [], []>} : vector<16x8xbf16>, vector<16x8xbf16>, vector<16x16xf32> -> vector<16x16xf32>
    %cst_82 = arith.constant 0.353553385 : f32
    %162 = vector.broadcast %cst_82 : f32 to vector<16x16xf32>
    %163 = arith.mulf %161, %162 : vector<16x16xf32>
    %164 = arith.addf %163, %17 : vector<16x16xf32>
    %cst_83 = arith.constant dense<0xFF800000> : vector<16xf32>
    %165 = vector.multi_reduction <maximumf>, %164, %cst_83 [1] : vector<16x16xf32> to vector<16xf32>
    %166 = vector.shape_cast %165 : vector<16xf32> to vector<16x1xf32>
    %167 = vector.broadcast %166 : vector<16x1xf32> to vector<16x16xf32>
    %168 = arith.subf %164, %167 : vector<16x16xf32>
    %169 = math.exp %168 : vector<16x16xf32>
    %cst_84 = arith.constant dense<0.000000e+00> : vector<16xf32>
    %170 = vector.multi_reduction <add>, %169, %cst_84 [1] : vector<16x16xf32> to vector<16xf32>
    %171 = vector.shape_cast %170 : vector<16xf32> to vector<16x1xf32>
    %172 = tpu.reciprocal %171 {approx = true} : vector<16x1xf32> -> vector<16x1xf32>
    %173 = vector.broadcast %172 : vector<16x1xf32> to vector<16x16xf32>
    %174 = arith.mulf %169, %173 : vector<16x16xf32>
    %175 = arith.truncf %174 : vector<16x16xf32> to vector<16x16xbf16>
    %cst_85 = arith.constant dense<0.000000e+00> : vector<16x8xf32>
    %176 = tpu.matmul %175, %160, %cst_85 {dimension_numbers = #tpu.dot_dimension_numbers<[1], [0], [0], [1], [0, 0, 1, 1], [], []>} : vector<16x16xbf16>, vector<16x8xbf16>, vector<16x8xf32> -> vector<16x8xf32>
    %177 = arith.truncf %176 : vector<16x8xf32> to vector<16x8xbf16>
    %178 = vector.extract_strided_slice %110 {offsets = [16, 0], sizes = [8, 32], strides = [1, 1]} : vector<32x32xbf16> to vector<8x32xbf16>
    %cst_86 = arith.constant dense<0.000000e+00> : vector<16x32xf32>
    %179 = tpu.matmul %177, %178, %cst_86 {dimension_numbers = #tpu.dot_dimension_numbers<[1], [0], [0], [1], [0, 0, 1, 1], [], []>} : vector<16x8xbf16>, vector<8x32xbf16>, vector<16x32xf32> -> vector<16x32xf32>
    %180 = arith.addf %157, %179 : vector<16x32xf32>
    %181 = vector.extract_strided_slice %107 {offsets = [0, 24], sizes = [16, 8], strides = [1, 1]} : vector<16x32xbf16> to vector<16x8xbf16>
    %182 = vector.extract_strided_slice %108 {offsets = [0, 24], sizes = [16, 8], strides = [1, 1]} : vector<16x32xbf16> to vector<16x8xbf16>
    %183 = vector.extract_strided_slice %109 {offsets = [0, 24], sizes = [16, 8], strides = [1, 1]} : vector<16x32xbf16> to vector<16x8xbf16>
    %cst_87 = arith.constant dense<0.000000e+00> : vector<16x16xf32>
    %184 = tpu.matmul %181, %182, %cst_87 {dimension_numbers = #tpu.dot_dimension_numbers<[1], [1], [0], [0], [0, 0, 1, 0], [], []>} : vector<16x8xbf16>, vector<16x8xbf16>, vector<16x16xf32> -> vector<16x16xf32>
    %cst_88 = arith.constant 0.353553385 : f32
    %185 = vector.broadcast %cst_88 : f32 to vector<16x16xf32>
    %186 = arith.mulf %184, %185 : vector<16x16xf32>
    %187 = arith.addf %186, %17 : vector<16x16xf32>
    %cst_89 = arith.constant dense<0xFF800000> : vector<16xf32>
    %188 = vector.multi_reduction <maximumf>, %187, %cst_89 [1] : vector<16x16xf32> to vector<16xf32>
    %189 = vector.shape_cast %188 : vector<16xf32> to vector<16x1xf32>
    %190 = vector.broadcast %189 : vector<16x1xf32> to vector<16x16xf32>
    %191 = arith.subf %187, %190 : vector<16x16xf32>
    %192 = math.exp %191 : vector<16x16xf32>
    %cst_90 = arith.constant dense<0.000000e+00> : vector<16xf32>
    %193 = vector.multi_reduction <add>, %192, %cst_90 [1] : vector<16x16xf32> to vector<16xf32>
    %194 = vector.shape_cast %193 : vector<16xf32> to vector<16x1xf32>
    %195 = tpu.reciprocal %194 {approx = true} : vector<16x1xf32> -> vector<16x1xf32>
    %196 = vector.broadcast %195 : vector<16x1xf32> to vector<16x16xf32>
    %197 = arith.mulf %192, %196 : vector<16x16xf32>
    %198 = arith.truncf %197 : vector<16x16xf32> to vector<16x16xbf16>
    %cst_91 = arith.constant dense<0.000000e+00> : vector<16x8xf32>
    %199 = tpu.matmul %198, %183, %cst_91 {dimension_numbers = #tpu.dot_dimension_numbers<[1], [0], [0], [1], [0, 0, 1, 1], [], []>} : vector<16x16xbf16>, vector<16x8xbf16>, vector<16x8xf32> -> vector<16x8xf32>
    %200 = arith.truncf %199 : vector<16x8xf32> to vector<16x8xbf16>
    %201 = vector.extract_strided_slice %110 {offsets = [24, 0], sizes = [8, 32], strides = [1, 1]} : vector<32x32xbf16> to vector<8x32xbf16>
    %cst_92 = arith.constant dense<0.000000e+00> : vector<16x32xf32>
    %202 = tpu.matmul %200, %201, %cst_92 {dimension_numbers = #tpu.dot_dimension_numbers<[1], [0], [0], [1], [0, 0, 1, 1], [], []>} : vector<16x8xbf16>, vector<8x32xbf16>, vector<16x32xf32> -> vector<16x32xf32>
    %203 = arith.addf %180, %202 : vector<16x32xf32>
    %204 = vector.broadcast %106 : vector<1x32xf32> to vector<16x32xf32>
    %205 = arith.addf %203, %204 : vector<16x32xf32>
    %206 = arith.addf %45, %205 : vector<16x32xf32>
    %207 = vector.extract_strided_slice %65 {offsets = [1, 0], sizes = [1, 32], strides = [1, 1]} : vector<3x32xf32> to vector<1x32xf32>
    %208 = vector.extract_strided_slice %67 {offsets = [1, 0], sizes = [1, 32], strides = [1, 1]} : vector<3x32xf32> to vector<1x32xf32>
    %cst_93 = arith.constant dense<0.000000e+00> : vector<16xf32>
    %209 = vector.multi_reduction <add>, %206, %cst_93 [1] : vector<16x32xf32> to vector<16xf32>
    %210 = vector.shape_cast %209 : vector<16xf32> to vector<16x1xf32>
    %cst_94 = arith.constant 3.200000e+01 : f32
    %211 = vector.broadcast %cst_94 : f32 to vector<16x1xf32>
    %212 = arith.divf %210, %211 : vector<16x1xf32>
    %213 = vector.broadcast %212 : vector<16x1xf32> to vector<16x32xf32>
    %214 = arith.subf %206, %213 : vector<16x32xf32>
    %215 = arith.mulf %214, %214 : vector<16x32xf32>
    %cst_95 = arith.constant dense<0.000000e+00> : vector<16xf32>
    %216 = vector.multi_reduction <add>, %215, %cst_95 [1] : vector<16x32xf32> to vector<16xf32>
    %217 = vector.shape_cast %216 : vector<16xf32> to vector<16x1xf32>
    %cst_96 = arith.constant 0.0322580636 : f32
    %218 = vector.broadcast %cst_96 : f32 to vector<16x1xf32>
    %219 = arith.mulf %217, %218 : vector<16x1xf32>
    %220 = math.sqrt %219 : vector<16x1xf32>
    %cst_97 = arith.constant 9.99999997E-7 : f32
    %221 = vector.broadcast %cst_97 : f32 to vector<16x1xf32>
    %222 = arith.addf %220, %221 : vector<16x1xf32>
    %223 = tpu.reciprocal %222 {approx = true} : vector<16x1xf32> -> vector<16x1xf32>
    %224 = vector.broadcast %207 : vector<1x32xf32> to vector<16x32xf32>
    %225 = arith.mulf %224, %214 : vector<16x32xf32>
    %226 = vector.broadcast %223 : vector<16x1xf32> to vector<16x32xf32>
    %227 = arith.mulf %225, %226 : vector<16x32xf32>
    %228 = vector.broadcast %208 : vector<1x32xf32> to vector<16x32xf32>
    %229 = arith.addf %227, %228 : vector<16x32xf32>
    %230 = arith.truncf %229 : vector<16x32xf32> to vector<16x32xbf16>
    %c0_98 = arith.constant 0 : index
    %c0_99 = arith.constant 0 : index
    %c0_100 = arith.constant 0 : index
    %231 = vector.load %arg11[%c0_98, %c0_99, %c0_100] : memref<2x32x32xf32, #tpu.memory_space<vmem>>, vector<1x32x32xf32>
    %232 = vector.shape_cast %231 : vector<1x32x32xf32> to vector<32x32xf32>
    %233 = arith.truncf %232 : vector<32x32xf32> to vector<32x32xbf16>
    %cst_101 = arith.constant dense<0.000000e+00> : vector<16x32xf32>
    %234 = tpu.matmul %230, %233, %cst_101 {dimension_numbers = #tpu.dot_dimension_numbers<[1], [0], [0], [1], [0, 0, 1, 1], [], []>} : vector<16x32xbf16>, vector<32x32xbf16>, vector<16x32xf32> -> vector<16x32xf32>
    %c0_102 = arith.constant 0 : index
    %c0_103 = arith.constant 0 : index
    %c0_104 = arith.constant 0 : index
    %235 = vector.load %arg12[%c0_102, %c0_103, %c0_104] : memref<2x1x32xf32, #tpu.memory_space<vmem>>, vector<1x1x32xf32>
    %236 = vector.shape_cast %235 : vector<1x1x32xf32> to vector<1x32xf32>
    %237 = vector.broadcast %236 : vector<1x32xf32> to vector<16x32xf32>
    %238 = arith.addf %234, %237 : vector<16x32xf32>
    %239 = vector.extract_strided_slice %55 {offsets = [0, 0], sizes = [16, 32], strides = [1, 1]} : vector<16x64xf32> to vector<16x32xf32>
    %240 = vector.extract_strided_slice %55 {offsets = [0, 32], sizes = [16, 32], strides = [1, 1]} : vector<16x64xf32> to vector<16x32xf32>
    %c0_105 = arith.constant 0 : index
    %c0_106 = arith.constant 0 : index
    %c0_107 = arith.constant 0 : index
    %241 = vector.load %arg15[%c0_105, %c0_106, %c0_107] : memref<2x32x32xf32, #tpu.memory_space<vmem>>, vector<1x32x32xf32>
    %242 = vector.shape_cast %241 : vector<1x32x32xf32> to vector<32x32xf32>
    %c0_108 = arith.constant 0 : index
    %c0_109 = arith.constant 0 : index
    %c0_110 = arith.constant 0 : index
    %243 = vector.load %arg16[%c0_108, %c0_109, %c0_110] : memref<2x1x32xf32, #tpu.memory_space<vmem>>, vector<1x1x32xf32>
    %244 = vector.shape_cast %243 : vector<1x1x32xf32> to vector<1x32xf32>
    %245 = arith.truncf %238 : vector<16x32xf32> to vector<16x32xbf16>
    %246 = arith.truncf %239 : vector<16x32xf32> to vector<16x32xbf16>
    %247 = arith.truncf %240 : vector<16x32xf32> to vector<16x32xbf16>
    %248 = arith.truncf %242 : vector<32x32xf32> to vector<32x32xbf16>
    %cst_111 = arith.constant 0.000000e+00 : f32
    %249 = vector.broadcast %cst_111 : f32 to vector<16x32xf32>
    %250 = vector.extract_strided_slice %245 {offsets = [0, 0], sizes = [16, 8], strides = [1, 1]} : vector<16x32xbf16> to vector<16x8xbf16>
    %251 = vector.extract_strided_slice %246 {offsets = [0, 0], sizes = [16, 8], strides = [1, 1]} : vector<16x32xbf16> to vector<16x8xbf16>
    %252 = vector.extract_strided_slice %247 {offsets = [0, 0], sizes = [16, 8], strides = [1, 1]} : vector<16x32xbf16> to vector<16x8xbf16>
    %cst_112 = arith.constant dense<0.000000e+00> : vector<16x16xf32>
    %253 = tpu.matmul %250, %251, %cst_112 {dimension_numbers = #tpu.dot_dimension_numbers<[1], [1], [0], [0], [0, 0, 1, 0], [], []>} : vector<16x8xbf16>, vector<16x8xbf16>, vector<16x16xf32> -> vector<16x16xf32>
    %cst_113 = arith.constant 0.353553385 : f32
    %254 = vector.broadcast %cst_113 : f32 to vector<16x16xf32>
    %255 = arith.mulf %253, %254 : vector<16x16xf32>
    %256 = arith.addf %255, %39 : vector<16x16xf32>
    %cst_114 = arith.constant dense<0xFF800000> : vector<16xf32>
    %257 = vector.multi_reduction <maximumf>, %256, %cst_114 [1] : vector<16x16xf32> to vector<16xf32>
    %258 = vector.shape_cast %257 : vector<16xf32> to vector<16x1xf32>
    %259 = vector.broadcast %258 : vector<16x1xf32> to vector<16x16xf32>
    %260 = arith.subf %256, %259 : vector<16x16xf32>
    %261 = math.exp %260 : vector<16x16xf32>
    %cst_115 = arith.constant dense<0.000000e+00> : vector<16xf32>
    %262 = vector.multi_reduction <add>, %261, %cst_115 [1] : vector<16x16xf32> to vector<16xf32>
    %263 = vector.shape_cast %262 : vector<16xf32> to vector<16x1xf32>
    %264 = tpu.reciprocal %263 {approx = true} : vector<16x1xf32> -> vector<16x1xf32>
    %265 = vector.broadcast %264 : vector<16x1xf32> to vector<16x16xf32>
    %266 = arith.mulf %261, %265 : vector<16x16xf32>
    %267 = vector.extract_strided_slice %266 {offsets = [0, 0], sizes = [8, 16], strides = [1, 1]} : vector<16x16xf32> to vector<8x16xf32>
    %268 = vector.extract_strided_slice %266 {offsets = [8, 0], sizes = [8, 16], strides = [1, 1]} : vector<16x16xf32> to vector<8x16xf32>
    %269 = arith.addf %267, %268 : vector<8x16xf32>
    %270 = arith.truncf %266 : vector<16x16xf32> to vector<16x16xbf16>
    %cst_116 = arith.constant dense<0.000000e+00> : vector<16x8xf32>
    %271 = tpu.matmul %270, %252, %cst_116 {dimension_numbers = #tpu.dot_dimension_numbers<[1], [0], [0], [1], [0, 0, 1, 1], [], []>} : vector<16x16xbf16>, vector<16x8xbf16>, vector<16x8xf32> -> vector<16x8xf32>
    %272 = arith.truncf %271 : vector<16x8xf32> to vector<16x8xbf16>
    %273 = vector.extract_strided_slice %248 {offsets = [0, 0], sizes = [8, 32], strides = [1, 1]} : vector<32x32xbf16> to vector<8x32xbf16>
    %cst_117 = arith.constant dense<0.000000e+00> : vector<16x32xf32>
    %274 = tpu.matmul %272, %273, %cst_117 {dimension_numbers = #tpu.dot_dimension_numbers<[1], [0], [0], [1], [0, 0, 1, 1], [], []>} : vector<16x8xbf16>, vector<8x32xbf16>, vector<16x32xf32> -> vector<16x32xf32>
    %275 = arith.addf %249, %274 : vector<16x32xf32>
    %276 = vector.extract_strided_slice %245 {offsets = [0, 8], sizes = [16, 8], strides = [1, 1]} : vector<16x32xbf16> to vector<16x8xbf16>
    %277 = vector.extract_strided_slice %246 {offsets = [0, 8], sizes = [16, 8], strides = [1, 1]} : vector<16x32xbf16> to vector<16x8xbf16>
    %278 = vector.extract_strided_slice %247 {offsets = [0, 8], sizes = [16, 8], strides = [1, 1]} : vector<16x32xbf16> to vector<16x8xbf16>
    %cst_118 = arith.constant dense<0.000000e+00> : vector<16x16xf32>
    %279 = tpu.matmul %276, %277, %cst_118 {dimension_numbers = #tpu.dot_dimension_numbers<[1], [1], [0], [0], [0, 0, 1, 0], [], []>} : vector<16x8xbf16>, vector<16x8xbf16>, vector<16x16xf32> -> vector<16x16xf32>
    %cst_119 = arith.constant 0.353553385 : f32
    %280 = vector.broadcast %cst_119 : f32 to vector<16x16xf32>
    %281 = arith.mulf %279, %280 : vector<16x16xf32>
    %282 = arith.addf %281, %39 : vector<16x16xf32>
    %cst_120 = arith.constant dense<0xFF800000> : vector<16xf32>
    %283 = vector.multi_reduction <maximumf>, %282, %cst_120 [1] : vector<16x16xf32> to vector<16xf32>
    %284 = vector.shape_cast %283 : vector<16xf32> to vector<16x1xf32>
    %285 = vector.broadcast %284 : vector<16x1xf32> to vector<16x16xf32>
    %286 = arith.subf %282, %285 : vector<16x16xf32>
    %287 = math.exp %286 : vector<16x16xf32>
    %cst_121 = arith.constant dense<0.000000e+00> : vector<16xf32>
    %288 = vector.multi_reduction <add>, %287, %cst_121 [1] : vector<16x16xf32> to vector<16xf32>
    %289 = vector.shape_cast %288 : vector<16xf32> to vector<16x1xf32>
    %290 = tpu.reciprocal %289 {approx = true} : vector<16x1xf32> -> vector<16x1xf32>
    %291 = vector.broadcast %290 : vector<16x1xf32> to vector<16x16xf32>
    %292 = arith.mulf %287, %291 : vector<16x16xf32>
    %293 = vector.extract_strided_slice %292 {offsets = [0, 0], sizes = [8, 16], strides = [1, 1]} : vector<16x16xf32> to vector<8x16xf32>
    %294 = vector.extract_strided_slice %292 {offsets = [8, 0], sizes = [8, 16], strides = [1, 1]} : vector<16x16xf32> to vector<8x16xf32>
    %295 = arith.addf %293, %294 : vector<8x16xf32>
    %296 = arith.truncf %292 : vector<16x16xf32> to vector<16x16xbf16>
    %cst_122 = arith.constant dense<0.000000e+00> : vector<16x8xf32>
    %297 = tpu.matmul %296, %278, %cst_122 {dimension_numbers = #tpu.dot_dimension_numbers<[1], [0], [0], [1], [0, 0, 1, 1], [], []>} : vector<16x16xbf16>, vector<16x8xbf16>, vector<16x8xf32> -> vector<16x8xf32>
    %298 = arith.truncf %297 : vector<16x8xf32> to vector<16x8xbf16>
    %299 = vector.extract_strided_slice %248 {offsets = [8, 0], sizes = [8, 32], strides = [1, 1]} : vector<32x32xbf16> to vector<8x32xbf16>
    %cst_123 = arith.constant dense<0.000000e+00> : vector<16x32xf32>
    %300 = tpu.matmul %298, %299, %cst_123 {dimension_numbers = #tpu.dot_dimension_numbers<[1], [0], [0], [1], [0, 0, 1, 1], [], []>} : vector<16x8xbf16>, vector<8x32xbf16>, vector<16x32xf32> -> vector<16x32xf32>
    %301 = arith.addf %275, %300 : vector<16x32xf32>
    %302 = vector.extract_strided_slice %245 {offsets = [0, 16], sizes = [16, 8], strides = [1, 1]} : vector<16x32xbf16> to vector<16x8xbf16>
    %303 = vector.extract_strided_slice %246 {offsets = [0, 16], sizes = [16, 8], strides = [1, 1]} : vector<16x32xbf16> to vector<16x8xbf16>
    %304 = vector.extract_strided_slice %247 {offsets = [0, 16], sizes = [16, 8], strides = [1, 1]} : vector<16x32xbf16> to vector<16x8xbf16>
    %cst_124 = arith.constant dense<0.000000e+00> : vector<16x16xf32>
    %305 = tpu.matmul %302, %303, %cst_124 {dimension_numbers = #tpu.dot_dimension_numbers<[1], [1], [0], [0], [0, 0, 1, 0], [], []>} : vector<16x8xbf16>, vector<16x8xbf16>, vector<16x16xf32> -> vector<16x16xf32>
    %cst_125 = arith.constant 0.353553385 : f32
    %306 = vector.broadcast %cst_125 : f32 to vector<16x16xf32>
    %307 = arith.mulf %305, %306 : vector<16x16xf32>
    %308 = arith.addf %307, %39 : vector<16x16xf32>
    %cst_126 = arith.constant dense<0xFF800000> : vector<16xf32>
    %309 = vector.multi_reduction <maximumf>, %308, %cst_126 [1] : vector<16x16xf32> to vector<16xf32>
    %310 = vector.shape_cast %309 : vector<16xf32> to vector<16x1xf32>
    %311 = vector.broadcast %310 : vector<16x1xf32> to vector<16x16xf32>
    %312 = arith.subf %308, %311 : vector<16x16xf32>
    %313 = math.exp %312 : vector<16x16xf32>
    %cst_127 = arith.constant dense<0.000000e+00> : vector<16xf32>
    %314 = vector.multi_reduction <add>, %313, %cst_127 [1] : vector<16x16xf32> to vector<16xf32>
    %315 = vector.shape_cast %314 : vector<16xf32> to vector<16x1xf32>
    %316 = tpu.reciprocal %315 {approx = true} : vector<16x1xf32> -> vector<16x1xf32>
    %317 = vector.broadcast %316 : vector<16x1xf32> to vector<16x16xf32>
    %318 = arith.mulf %313, %317 : vector<16x16xf32>
    %319 = vector.extract_strided_slice %318 {offsets = [0, 0], sizes = [8, 16], strides = [1, 1]} : vector<16x16xf32> to vector<8x16xf32>
    %320 = vector.extract_strided_slice %318 {offsets = [8, 0], sizes = [8, 16], strides = [1, 1]} : vector<16x16xf32> to vector<8x16xf32>
    %321 = arith.addf %319, %320 : vector<8x16xf32>
    %322 = arith.truncf %318 : vector<16x16xf32> to vector<16x16xbf16>
    %cst_128 = arith.constant dense<0.000000e+00> : vector<16x8xf32>
    %323 = tpu.matmul %322, %304, %cst_128 {dimension_numbers = #tpu.dot_dimension_numbers<[1], [0], [0], [1], [0, 0, 1, 1], [], []>} : vector<16x16xbf16>, vector<16x8xbf16>, vector<16x8xf32> -> vector<16x8xf32>
    %324 = arith.truncf %323 : vector<16x8xf32> to vector<16x8xbf16>
    %325 = vector.extract_strided_slice %248 {offsets = [16, 0], sizes = [8, 32], strides = [1, 1]} : vector<32x32xbf16> to vector<8x32xbf16>
    %cst_129 = arith.constant dense<0.000000e+00> : vector<16x32xf32>
    %326 = tpu.matmul %324, %325, %cst_129 {dimension_numbers = #tpu.dot_dimension_numbers<[1], [0], [0], [1], [0, 0, 1, 1], [], []>} : vector<16x8xbf16>, vector<8x32xbf16>, vector<16x32xf32> -> vector<16x32xf32>
    %327 = arith.addf %301, %326 : vector<16x32xf32>
    %328 = vector.extract_strided_slice %245 {offsets = [0, 24], sizes = [16, 8], strides = [1, 1]} : vector<16x32xbf16> to vector<16x8xbf16>
    %329 = vector.extract_strided_slice %246 {offsets = [0, 24], sizes = [16, 8], strides = [1, 1]} : vector<16x32xbf16> to vector<16x8xbf16>
    %330 = vector.extract_strided_slice %247 {offsets = [0, 24], sizes = [16, 8], strides = [1, 1]} : vector<16x32xbf16> to vector<16x8xbf16>
    %cst_130 = arith.constant dense<0.000000e+00> : vector<16x16xf32>
    %331 = tpu.matmul %328, %329, %cst_130 {dimension_numbers = #tpu.dot_dimension_numbers<[1], [1], [0], [0], [0, 0, 1, 0], [], []>} : vector<16x8xbf16>, vector<16x8xbf16>, vector<16x16xf32> -> vector<16x16xf32>
    %cst_131 = arith.constant 0.353553385 : f32
    %332 = vector.broadcast %cst_131 : f32 to vector<16x16xf32>
    %333 = arith.mulf %331, %332 : vector<16x16xf32>
    %334 = arith.addf %333, %39 : vector<16x16xf32>
    %cst_132 = arith.constant dense<0xFF800000> : vector<16xf32>
    %335 = vector.multi_reduction <maximumf>, %334, %cst_132 [1] : vector<16x16xf32> to vector<16xf32>
    %336 = vector.shape_cast %335 : vector<16xf32> to vector<16x1xf32>
    %337 = vector.broadcast %336 : vector<16x1xf32> to vector<16x16xf32>
    %338 = arith.subf %334, %337 : vector<16x16xf32>
    %339 = math.exp %338 : vector<16x16xf32>
    %cst_133 = arith.constant dense<0.000000e+00> : vector<16xf32>
    %340 = vector.multi_reduction <add>, %339, %cst_133 [1] : vector<16x16xf32> to vector<16xf32>
    %341 = vector.shape_cast %340 : vector<16xf32> to vector<16x1xf32>
    %342 = tpu.reciprocal %341 {approx = true} : vector<16x1xf32> -> vector<16x1xf32>
    %343 = vector.broadcast %342 : vector<16x1xf32> to vector<16x16xf32>
    %344 = arith.mulf %339, %343 : vector<16x16xf32>
    %345 = vector.extract_strided_slice %344 {offsets = [0, 0], sizes = [8, 16], strides = [1, 1]} : vector<16x16xf32> to vector<8x16xf32>
    %346 = vector.extract_strided_slice %344 {offsets = [8, 0], sizes = [8, 16], strides = [1, 1]} : vector<16x16xf32> to vector<8x16xf32>
    %347 = arith.addf %345, %346 : vector<8x16xf32>
    %348 = arith.truncf %344 : vector<16x16xf32> to vector<16x16xbf16>
    %cst_134 = arith.constant dense<0.000000e+00> : vector<16x8xf32>
    %349 = tpu.matmul %348, %330, %cst_134 {dimension_numbers = #tpu.dot_dimension_numbers<[1], [0], [0], [1], [0, 0, 1, 1], [], []>} : vector<16x16xbf16>, vector<16x8xbf16>, vector<16x8xf32> -> vector<16x8xf32>
    %350 = arith.truncf %349 : vector<16x8xf32> to vector<16x8xbf16>
    %351 = vector.extract_strided_slice %248 {offsets = [24, 0], sizes = [8, 32], strides = [1, 1]} : vector<32x32xbf16> to vector<8x32xbf16>
    %cst_135 = arith.constant dense<0.000000e+00> : vector<16x32xf32>
    %352 = tpu.matmul %350, %351, %cst_135 {dimension_numbers = #tpu.dot_dimension_numbers<[1], [0], [0], [1], [0, 0, 1, 1], [], []>} : vector<16x8xbf16>, vector<8x32xbf16>, vector<16x32xf32> -> vector<16x32xf32>
    %353 = arith.addf %327, %352 : vector<16x32xf32>
    %354 = tpu.concatenate %269, %295, %321, %347 in 1 : vector<8x16xf32>, vector<8x16xf32>, vector<8x16xf32>, vector<8x16xf32> -> vector<8x64xf32>
    %355 = vector.broadcast %244 : vector<1x32xf32> to vector<16x32xf32>
    %356 = arith.addf %353, %355 : vector<16x32xf32>
    %357 = arith.addf %206, %356 : vector<16x32xf32>
    %c0_136 = arith.constant 0 : index
    %c0_137 = arith.constant 0 : index
    %358 = vector.load %arg24[%c0_136, %c0_137] : memref<8x128xf32, #tpu.memory_space<vmem>>, vector<8x64xf32>
    tpu.vector_store %arg24[%c0_136, %c0_137], %354 {strides = array<i32>} : memref<8x128xf32, #tpu.memory_space<vmem>>, vector<8x64xf32>,
    %359 = vector.extract_strided_slice %65 {offsets = [2, 0], sizes = [1, 32], strides = [1, 1]} : vector<3x32xf32> to vector<1x32xf32>
    %360 = vector.extract_strided_slice %67 {offsets = [2, 0], sizes = [1, 32], strides = [1, 1]} : vector<3x32xf32> to vector<1x32xf32>
    %cst_138 = arith.constant dense<0.000000e+00> : vector<16xf32>
    %361 = vector.multi_reduction <add>, %357, %cst_138 [1] : vector<16x32xf32> to vector<16xf32>
    %362 = vector.shape_cast %361 : vector<16xf32> to vector<16x1xf32>
    %cst_139 = arith.constant 3.200000e+01 : f32
    %363 = vector.broadcast %cst_139 : f32 to vector<16x1xf32>
    %364 = arith.divf %362, %363 : vector<16x1xf32>
    %365 = vector.broadcast %364 : vector<16x1xf32> to vector<16x32xf32>
    %366 = arith.subf %357, %365 : vector<16x32xf32>
    %367 = arith.mulf %366, %366 : vector<16x32xf32>
    %cst_140 = arith.constant dense<0.000000e+00> : vector<16xf32>
    %368 = vector.multi_reduction <add>, %367, %cst_140 [1] : vector<16x32xf32> to vector<16xf32>
    %369 = vector.shape_cast %368 : vector<16xf32> to vector<16x1xf32>
    %cst_141 = arith.constant 0.0322580636 : f32
    %370 = vector.broadcast %cst_141 : f32 to vector<16x1xf32>
    %371 = arith.mulf %369, %370 : vector<16x1xf32>
    %372 = math.sqrt %371 : vector<16x1xf32>
    %cst_142 = arith.constant 9.99999997E-7 : f32
    %373 = vector.broadcast %cst_142 : f32 to vector<16x1xf32>
    %374 = arith.addf %372, %373 : vector<16x1xf32>
    %375 = tpu.reciprocal %374 {approx = true} : vector<16x1xf32> -> vector<16x1xf32>
    %376 = vector.broadcast %359 : vector<1x32xf32> to vector<16x32xf32>
    %377 = arith.mulf %376, %366 : vector<16x32xf32>
    %378 = vector.broadcast %375 : vector<16x1xf32> to vector<16x32xf32>
    %379 = arith.mulf %377, %378 : vector<16x32xf32>
    %380 = vector.broadcast %360 : vector<1x32xf32> to vector<16x32xf32>
    %381 = arith.addf %379, %380 : vector<16x32xf32>
    %382 = arith.truncf %381 : vector<16x32xf32> to vector<16x32xbf16>
    %c0_143 = arith.constant 0 : index
    %c0_144 = arith.constant 0 : index
    %c0_145 = arith.constant 0 : index
    %383 = vector.load %arg17[%c0_143, %c0_144, %c0_145] : memref<2x32x128xf32, #tpu.memory_space<vmem>>, vector<1x32x128xf32>
    %384 = vector.shape_cast %383 : vector<1x32x128xf32> to vector<32x128xf32>
    %385 = arith.truncf %384 : vector<32x128xf32> to vector<32x128xbf16>
    %cst_146 = arith.constant dense<0.000000e+00> : vector<16x128xf32>
    %386 = tpu.matmul %382, %385, %cst_146 {dimension_numbers = #tpu.dot_dimension_numbers<[1], [0], [0], [1], [0, 0, 1, 1], [], []>} : vector<16x32xbf16>, vector<32x128xbf16>, vector<16x128xf32> -> vector<16x128xf32>
    %c0_147 = arith.constant 0 : index
    %c0_148 = arith.constant 0 : index
    %c0_149 = arith.constant 0 : index
    %387 = vector.load %arg18[%c0_147, %c0_148, %c0_149] : memref<2x1x128xf32, #tpu.memory_space<vmem>>, vector<1x1x128xf32>
    %388 = vector.shape_cast %387 : vector<1x1x128xf32> to vector<1x128xf32>
    %389 = vector.broadcast %388 : vector<1x128xf32> to vector<16x128xf32>
    %390 = arith.addf %386, %389 : vector<16x128xf32>
    %cst_150 = arith.constant 0.000000e+00 : f32
    %391 = vector.broadcast %cst_150 : f32 to vector<16x128xf32>
    %392 = arith.maximumf %390, %391 : vector<16x128xf32>
    %393 = arith.truncf %392 : vector<16x128xf32> to vector<16x128xbf16>
    %c0_151 = arith.constant 0 : index
    %c0_152 = arith.constant 0 : index
    %c0_153 = arith.constant 0 : index
    %394 = vector.load %arg19[%c0_151, %c0_152, %c0_153] : memref<2x128x32xf32, #tpu.memory_space<vmem>>, vector<1x128x32xf32>
    %395 = vector.shape_cast %394 : vector<1x128x32xf32> to vector<128x32xf32>
    %396 = arith.truncf %395 : vector<128x32xf32> to vector<128x32xbf16>
    %cst_154 = arith.constant dense<0.000000e+00> : vector<16x32xf32>
    %397 = tpu.matmul %393, %396, %cst_154 {dimension_numbers = #tpu.dot_dimension_numbers<[1], [0], [0], [1], [0, 0, 1, 1], [], []>} : vector<16x128xbf16>, vector<128x32xbf16>, vector<16x32xf32> -> vector<16x32xf32>
    %398 = arith.addf %357, %397 : vector<16x32xf32>
    %c0_155 = arith.constant 0 : index
    %c0_156 = arith.constant 0 : index
    %c0_157 = arith.constant 0 : index
    %399 = vector.load %arg20[%c0_155, %c0_156, %c0_157] : memref<2x1x32xf32, #tpu.memory_space<vmem>>, vector<1x1x32xf32>
    %400 = vector.shape_cast %399 : vector<1x1x32xf32> to vector<1x32xf32>
    %401 = vector.broadcast %400 : vector<1x32xf32> to vector<16x32xf32>
    %402 = arith.addf %398, %401 : vector<16x32xf32>
    %c1_158 = arith.constant 1 : index
    %c0_159 = arith.constant 0 : index
    %c0_160 = arith.constant 0 : index
    %403 = vector.load %arg5[%c1_158, %c0_159, %c0_160] : memref<2x3x32xf32, #tpu.memory_space<vmem>>, vector<1x3x32xf32>
    %404 = vector.shape_cast %403 : vector<1x3x32xf32> to vector<3x32xf32>
    %c1_161 = arith.constant 1 : index
    %c0_162 = arith.constant 0 : index
    %c0_163 = arith.constant 0 : index
    %405 = vector.load %arg6[%c1_161, %c0_162, %c0_163] : memref<2x3x32xf32, #tpu.memory_space<vmem>>, vector<1x3x32xf32>
    %406 = vector.shape_cast %405 : vector<1x3x32xf32> to vector<3x32xf32>
    %407 = vector.extract_strided_slice %404 {offsets = [0, 0], sizes = [1, 32], strides = [1, 1]} : vector<3x32xf32> to vector<1x32xf32>
    %408 = vector.extract_strided_slice %406 {offsets = [0, 0], sizes = [1, 32], strides = [1, 1]} : vector<3x32xf32> to vector<1x32xf32>
    %cst_164 = arith.constant dense<0.000000e+00> : vector<16xf32>
    %409 = vector.multi_reduction <add>, %402, %cst_164 [1] : vector<16x32xf32> to vector<16xf32>
    %410 = vector.shape_cast %409 : vector<16xf32> to vector<16x1xf32>
    %cst_165 = arith.constant 3.200000e+01 : f32
    %411 = vector.broadcast %cst_165 : f32 to vector<16x1xf32>
    %412 = arith.divf %410, %411 : vector<16x1xf32>
    %413 = vector.broadcast %412 : vector<16x1xf32> to vector<16x32xf32>
    %414 = arith.subf %402, %413 : vector<16x32xf32>
    %415 = arith.mulf %414, %414 : vector<16x32xf32>
    %cst_166 = arith.constant dense<0.000000e+00> : vector<16xf32>
    %416 = vector.multi_reduction <add>, %415, %cst_166 [1] : vector<16x32xf32> to vector<16xf32>
    %417 = vector.shape_cast %416 : vector<16xf32> to vector<16x1xf32>
    %cst_167 = arith.constant 0.0322580636 : f32
    %418 = vector.broadcast %cst_167 : f32 to vector<16x1xf32>
    %419 = arith.mulf %417, %418 : vector<16x1xf32>
    %420 = math.sqrt %419 : vector<16x1xf32>
    %cst_168 = arith.constant 9.99999997E-7 : f32
    %421 = vector.broadcast %cst_168 : f32 to vector<16x1xf32>
    %422 = arith.addf %420, %421 : vector<16x1xf32>
    %423 = tpu.reciprocal %422 {approx = true} : vector<16x1xf32> -> vector<16x1xf32>
    %424 = vector.broadcast %407 : vector<1x32xf32> to vector<16x32xf32>
    %425 = arith.mulf %424, %414 : vector<16x32xf32>
    %426 = vector.broadcast %423 : vector<16x1xf32> to vector<16x32xf32>
    %427 = arith.mulf %425, %426 : vector<16x32xf32>
    %428 = vector.broadcast %408 : vector<1x32xf32> to vector<16x32xf32>
    %429 = arith.addf %427, %428 : vector<16x32xf32>
    %430 = arith.truncf %429 : vector<16x32xf32> to vector<16x32xbf16>
    %c1_169 = arith.constant 1 : index
    %c0_170 = arith.constant 0 : index
    %c0_171 = arith.constant 0 : index
    %431 = vector.load %arg7[%c1_169, %c0_170, %c0_171] : memref<2x32x96xf32, #tpu.memory_space<vmem>>, vector<1x32x96xf32>
    %432 = vector.shape_cast %431 : vector<1x32x96xf32> to vector<32x96xf32>
    %433 = arith.truncf %432 : vector<32x96xf32> to vector<32x96xbf16>
    %cst_172 = arith.constant dense<0.000000e+00> : vector<16x96xf32>
    %434 = tpu.matmul %430, %433, %cst_172 {dimension_numbers = #tpu.dot_dimension_numbers<[1], [0], [0], [1], [0, 0, 1, 1], [], []>} : vector<16x32xbf16>, vector<32x96xbf16>, vector<16x96xf32> -> vector<16x96xf32>
    %c1_173 = arith.constant 1 : index
    %c0_174 = arith.constant 0 : index
    %c0_175 = arith.constant 0 : index
    %435 = vector.load %arg8[%c1_173, %c0_174, %c0_175] : memref<2x1x96xf32, #tpu.memory_space<vmem>>, vector<1x1x96xf32>
    %436 = vector.shape_cast %435 : vector<1x1x96xf32> to vector<1x96xf32>
    %437 = vector.broadcast %436 : vector<1x96xf32> to vector<16x96xf32>
    %438 = arith.addf %434, %437 : vector<16x96xf32>
    %439 = vector.extract_strided_slice %438 {offsets = [0, 0], sizes = [16, 32], strides = [1, 1]} : vector<16x96xf32> to vector<16x32xf32>
    %440 = vector.extract_strided_slice %438 {offsets = [0, 32], sizes = [16, 32], strides = [1, 1]} : vector<16x96xf32> to vector<16x32xf32>
    %441 = vector.extract_strided_slice %438 {offsets = [0, 64], sizes = [16, 32], strides = [1, 1]} : vector<16x96xf32> to vector<16x32xf32>
    %c1_176 = arith.constant 1 : index
    %c0_177 = arith.constant 0 : index
    %c0_178 = arith.constant 0 : index
    %442 = vector.load %arg9[%c1_176, %c0_177, %c0_178] : memref<2x32x32xf32, #tpu.memory_space<vmem>>, vector<1x32x32xf32>
    %443 = vector.shape_cast %442 : vector<1x32x32xf32> to vector<32x32xf32>
    %c1_179 = arith.constant 1 : index
    %c0_180 = arith.constant 0 : index
    %c0_181 = arith.constant 0 : index
    %444 = vector.load %arg10[%c1_179, %c0_180, %c0_181] : memref<2x1x32xf32, #tpu.memory_space<vmem>>, vector<1x1x32xf32>
    %445 = vector.shape_cast %444 : vector<1x1x32xf32> to vector<1x32xf32>
    %446 = arith.truncf %439 : vector<16x32xf32> to vector<16x32xbf16>
    %447 = arith.truncf %440 : vector<16x32xf32> to vector<16x32xbf16>
    %448 = arith.truncf %441 : vector<16x32xf32> to vector<16x32xbf16>
    %449 = arith.truncf %443 : vector<32x32xf32> to vector<32x32xbf16>
    %cst_182 = arith.constant 0.000000e+00 : f32
    %450 = vector.broadcast %cst_182 : f32 to vector<16x32xf32>
    %451 = vector.extract_strided_slice %446 {offsets = [0, 0], sizes = [16, 8], strides = [1, 1]} : vector<16x32xbf16> to vector<16x8xbf16>
    %452 = vector.extract_strided_slice %447 {offsets = [0, 0], sizes = [16, 8], strides = [1, 1]} : vector<16x32xbf16> to vector<16x8xbf16>
    %453 = vector.extract_strided_slice %448 {offsets = [0, 0], sizes = [16, 8], strides = [1, 1]} : vector<16x32xbf16> to vector<16x8xbf16>
    %cst_183 = arith.constant dense<0.000000e+00> : vector<16x16xf32>
    %454 = tpu.matmul %451, %452, %cst_183 {dimension_numbers = #tpu.dot_dimension_numbers<[1], [1], [0], [0], [0, 0, 1, 0], [], []>} : vector<16x8xbf16>, vector<16x8xbf16>, vector<16x16xf32> -> vector<16x16xf32>
    %cst_184 = arith.constant 0.353553385 : f32
    %455 = vector.broadcast %cst_184 : f32 to vector<16x16xf32>
    %456 = arith.mulf %454, %455 : vector<16x16xf32>
    %457 = arith.addf %456, %17 : vector<16x16xf32>
    %cst_185 = arith.constant dense<0xFF800000> : vector<16xf32>
    %458 = vector.multi_reduction <maximumf>, %457, %cst_185 [1] : vector<16x16xf32> to vector<16xf32>
    %459 = vector.shape_cast %458 : vector<16xf32> to vector<16x1xf32>
    %460 = vector.broadcast %459 : vector<16x1xf32> to vector<16x16xf32>
    %461 = arith.subf %457, %460 : vector<16x16xf32>
    %462 = math.exp %461 : vector<16x16xf32>
    %cst_186 = arith.constant dense<0.000000e+00> : vector<16xf32>
    %463 = vector.multi_reduction <add>, %462, %cst_186 [1] : vector<16x16xf32> to vector<16xf32>
    %464 = vector.shape_cast %463 : vector<16xf32> to vector<16x1xf32>
    %465 = tpu.reciprocal %464 {approx = true} : vector<16x1xf32> -> vector<16x1xf32>
    %466 = vector.broadcast %465 : vector<16x1xf32> to vector<16x16xf32>
    %467 = arith.mulf %462, %466 : vector<16x16xf32>
    %468 = arith.truncf %467 : vector<16x16xf32> to vector<16x16xbf16>
    %cst_187 = arith.constant dense<0.000000e+00> : vector<16x8xf32>
    %469 = tpu.matmul %468, %453, %cst_187 {dimension_numbers = #tpu.dot_dimension_numbers<[1], [0], [0], [1], [0, 0, 1, 1], [], []>} : vector<16x16xbf16>, vector<16x8xbf16>, vector<16x8xf32> -> vector<16x8xf32>
    %470 = arith.truncf %469 : vector<16x8xf32> to vector<16x8xbf16>
    %471 = vector.extract_strided_slice %449 {offsets = [0, 0], sizes = [8, 32], strides = [1, 1]} : vector<32x32xbf16> to vector<8x32xbf16>
    %cst_188 = arith.constant dense<0.000000e+00> : vector<16x32xf32>
    %472 = tpu.matmul %470, %471, %cst_188 {dimension_numbers = #tpu.dot_dimension_numbers<[1], [0], [0], [1], [0, 0, 1, 1], [], []>} : vector<16x8xbf16>, vector<8x32xbf16>, vector<16x32xf32> -> vector<16x32xf32>
    %473 = arith.addf %450, %472 : vector<16x32xf32>
    %474 = vector.extract_strided_slice %446 {offsets = [0, 8], sizes = [16, 8], strides = [1, 1]} : vector<16x32xbf16> to vector<16x8xbf16>
    %475 = vector.extract_strided_slice %447 {offsets = [0, 8], sizes = [16, 8], strides = [1, 1]} : vector<16x32xbf16> to vector<16x8xbf16>
    %476 = vector.extract_strided_slice %448 {offsets = [0, 8], sizes = [16, 8], strides = [1, 1]} : vector<16x32xbf16> to vector<16x8xbf16>
    %cst_189 = arith.constant dense<0.000000e+00> : vector<16x16xf32>
    %477 = tpu.matmul %474, %475, %cst_189 {dimension_numbers = #tpu.dot_dimension_numbers<[1], [1], [0], [0], [0, 0, 1, 0], [], []>} : vector<16x8xbf16>, vector<16x8xbf16>, vector<16x16xf32> -> vector<16x16xf32>
    %cst_190 = arith.constant 0.353553385 : f32
    %478 = vector.broadcast %cst_190 : f32 to vector<16x16xf32>
    %479 = arith.mulf %477, %478 : vector<16x16xf32>
    %480 = arith.addf %479, %17 : vector<16x16xf32>
    %cst_191 = arith.constant dense<0xFF800000> : vector<16xf32>
    %481 = vector.multi_reduction <maximumf>, %480, %cst_191 [1] : vector<16x16xf32> to vector<16xf32>
    %482 = vector.shape_cast %481 : vector<16xf32> to vector<16x1xf32>
    %483 = vector.broadcast %482 : vector<16x1xf32> to vector<16x16xf32>
    %484 = arith.subf %480, %483 : vector<16x16xf32>
    %485 = math.exp %484 : vector<16x16xf32>
    %cst_192 = arith.constant dense<0.000000e+00> : vector<16xf32>
    %486 = vector.multi_reduction <add>, %485, %cst_192 [1] : vector<16x16xf32> to vector<16xf32>
    %487 = vector.shape_cast %486 : vector<16xf32> to vector<16x1xf32>
    %488 = tpu.reciprocal %487 {approx = true} : vector<16x1xf32> -> vector<16x1xf32>
    %489 = vector.broadcast %488 : vector<16x1xf32> to vector<16x16xf32>
    %490 = arith.mulf %485, %489 : vector<16x16xf32>
    %491 = arith.truncf %490 : vector<16x16xf32> to vector<16x16xbf16>
    %cst_193 = arith.constant dense<0.000000e+00> : vector<16x8xf32>
    %492 = tpu.matmul %491, %476, %cst_193 {dimension_numbers = #tpu.dot_dimension_numbers<[1], [0], [0], [1], [0, 0, 1, 1], [], []>} : vector<16x16xbf16>, vector<16x8xbf16>, vector<16x8xf32> -> vector<16x8xf32>
    %493 = arith.truncf %492 : vector<16x8xf32> to vector<16x8xbf16>
    %494 = vector.extract_strided_slice %449 {offsets = [8, 0], sizes = [8, 32], strides = [1, 1]} : vector<32x32xbf16> to vector<8x32xbf16>
    %cst_194 = arith.constant dense<0.000000e+00> : vector<16x32xf32>
    %495 = tpu.matmul %493, %494, %cst_194 {dimension_numbers = #tpu.dot_dimension_numbers<[1], [0], [0], [1], [0, 0, 1, 1], [], []>} : vector<16x8xbf16>, vector<8x32xbf16>, vector<16x32xf32> -> vector<16x32xf32>
    %496 = arith.addf %473, %495 : vector<16x32xf32>
    %497 = vector.extract_strided_slice %446 {offsets = [0, 16], sizes = [16, 8], strides = [1, 1]} : vector<16x32xbf16> to vector<16x8xbf16>
    %498 = vector.extract_strided_slice %447 {offsets = [0, 16], sizes = [16, 8], strides = [1, 1]} : vector<16x32xbf16> to vector<16x8xbf16>
    %499 = vector.extract_strided_slice %448 {offsets = [0, 16], sizes = [16, 8], strides = [1, 1]} : vector<16x32xbf16> to vector<16x8xbf16>
    %cst_195 = arith.constant dense<0.000000e+00> : vector<16x16xf32>
    %500 = tpu.matmul %497, %498, %cst_195 {dimension_numbers = #tpu.dot_dimension_numbers<[1], [1], [0], [0], [0, 0, 1, 0], [], []>} : vector<16x8xbf16>, vector<16x8xbf16>, vector<16x16xf32> -> vector<16x16xf32>
    %cst_196 = arith.constant 0.353553385 : f32
    %501 = vector.broadcast %cst_196 : f32 to vector<16x16xf32>
    %502 = arith.mulf %500, %501 : vector<16x16xf32>
    %503 = arith.addf %502, %17 : vector<16x16xf32>
    %cst_197 = arith.constant dense<0xFF800000> : vector<16xf32>
    %504 = vector.multi_reduction <maximumf>, %503, %cst_197 [1] : vector<16x16xf32> to vector<16xf32>
    %505 = vector.shape_cast %504 : vector<16xf32> to vector<16x1xf32>
    %506 = vector.broadcast %505 : vector<16x1xf32> to vector<16x16xf32>
    %507 = arith.subf %503, %506 : vector<16x16xf32>
    %508 = math.exp %507 : vector<16x16xf32>
    %cst_198 = arith.constant dense<0.000000e+00> : vector<16xf32>
    %509 = vector.multi_reduction <add>, %508, %cst_198 [1] : vector<16x16xf32> to vector<16xf32>
    %510 = vector.shape_cast %509 : vector<16xf32> to vector<16x1xf32>
    %511 = tpu.reciprocal %510 {approx = true} : vector<16x1xf32> -> vector<16x1xf32>
    %512 = vector.broadcast %511 : vector<16x1xf32> to vector<16x16xf32>
    %513 = arith.mulf %508, %512 : vector<16x16xf32>
    %514 = arith.truncf %513 : vector<16x16xf32> to vector<16x16xbf16>
    %cst_199 = arith.constant dense<0.000000e+00> : vector<16x8xf32>
    %515 = tpu.matmul %514, %499, %cst_199 {dimension_numbers = #tpu.dot_dimension_numbers<[1], [0], [0], [1], [0, 0, 1, 1], [], []>} : vector<16x16xbf16>, vector<16x8xbf16>, vector<16x8xf32> -> vector<16x8xf32>
    %516 = arith.truncf %515 : vector<16x8xf32> to vector<16x8xbf16>
    %517 = vector.extract_strided_slice %449 {offsets = [16, 0], sizes = [8, 32], strides = [1, 1]} : vector<32x32xbf16> to vector<8x32xbf16>
    %cst_200 = arith.constant dense<0.000000e+00> : vector<16x32xf32>
    %518 = tpu.matmul %516, %517, %cst_200 {dimension_numbers = #tpu.dot_dimension_numbers<[1], [0], [0], [1], [0, 0, 1, 1], [], []>} : vector<16x8xbf16>, vector<8x32xbf16>, vector<16x32xf32> -> vector<16x32xf32>
    %519 = arith.addf %496, %518 : vector<16x32xf32>
    %520 = vector.extract_strided_slice %446 {offsets = [0, 24], sizes = [16, 8], strides = [1, 1]} : vector<16x32xbf16> to vector<16x8xbf16>
    %521 = vector.extract_strided_slice %447 {offsets = [0, 24], sizes = [16, 8], strides = [1, 1]} : vector<16x32xbf16> to vector<16x8xbf16>
    %522 = vector.extract_strided_slice %448 {offsets = [0, 24], sizes = [16, 8], strides = [1, 1]} : vector<16x32xbf16> to vector<16x8xbf16>
    %cst_201 = arith.constant dense<0.000000e+00> : vector<16x16xf32>
    %523 = tpu.matmul %520, %521, %cst_201 {dimension_numbers = #tpu.dot_dimension_numbers<[1], [1], [0], [0], [0, 0, 1, 0], [], []>} : vector<16x8xbf16>, vector<16x8xbf16>, vector<16x16xf32> -> vector<16x16xf32>
    %cst_202 = arith.constant 0.353553385 : f32
    %524 = vector.broadcast %cst_202 : f32 to vector<16x16xf32>
    %525 = arith.mulf %523, %524 : vector<16x16xf32>
    %526 = arith.addf %525, %17 : vector<16x16xf32>
    %cst_203 = arith.constant dense<0xFF800000> : vector<16xf32>
    %527 = vector.multi_reduction <maximumf>, %526, %cst_203 [1] : vector<16x16xf32> to vector<16xf32>
    %528 = vector.shape_cast %527 : vector<16xf32> to vector<16x1xf32>
    %529 = vector.broadcast %528 : vector<16x1xf32> to vector<16x16xf32>
    %530 = arith.subf %526, %529 : vector<16x16xf32>
    %531 = math.exp %530 : vector<16x16xf32>
    %cst_204 = arith.constant dense<0.000000e+00> : vector<16xf32>
    %532 = vector.multi_reduction <add>, %531, %cst_204 [1] : vector<16x16xf32> to vector<16xf32>
    %533 = vector.shape_cast %532 : vector<16xf32> to vector<16x1xf32>
    %534 = tpu.reciprocal %533 {approx = true} : vector<16x1xf32> -> vector<16x1xf32>
    %535 = vector.broadcast %534 : vector<16x1xf32> to vector<16x16xf32>
    %536 = arith.mulf %531, %535 : vector<16x16xf32>
    %537 = arith.truncf %536 : vector<16x16xf32> to vector<16x16xbf16>
    %cst_205 = arith.constant dense<0.000000e+00> : vector<16x8xf32>
    %538 = tpu.matmul %537, %522, %cst_205 {dimension_numbers = #tpu.dot_dimension_numbers<[1], [0], [0], [1], [0, 0, 1, 1], [], []>} : vector<16x16xbf16>, vector<16x8xbf16>, vector<16x8xf32> -> vector<16x8xf32>
    %539 = arith.truncf %538 : vector<16x8xf32> to vector<16x8xbf16>
    %540 = vector.extract_strided_slice %449 {offsets = [24, 0], sizes = [8, 32], strides = [1, 1]} : vector<32x32xbf16> to vector<8x32xbf16>
    %cst_206 = arith.constant dense<0.000000e+00> : vector<16x32xf32>
    %541 = tpu.matmul %539, %540, %cst_206 {dimension_numbers = #tpu.dot_dimension_numbers<[1], [0], [0], [1], [0, 0, 1, 1], [], []>} : vector<16x8xbf16>, vector<8x32xbf16>, vector<16x32xf32> -> vector<16x32xf32>
    %542 = arith.addf %519, %541 : vector<16x32xf32>
    %543 = vector.broadcast %445 : vector<1x32xf32> to vector<16x32xf32>
    %544 = arith.addf %542, %543 : vector<16x32xf32>
    %545 = arith.addf %402, %544 : vector<16x32xf32>
    %546 = vector.extract_strided_slice %404 {offsets = [1, 0], sizes = [1, 32], strides = [1, 1]} : vector<3x32xf32> to vector<1x32xf32>
    %547 = vector.extract_strided_slice %406 {offsets = [1, 0], sizes = [1, 32], strides = [1, 1]} : vector<3x32xf32> to vector<1x32xf32>
    %cst_207 = arith.constant dense<0.000000e+00> : vector<16xf32>
    %548 = vector.multi_reduction <add>, %545, %cst_207 [1] : vector<16x32xf32> to vector<16xf32>
    %549 = vector.shape_cast %548 : vector<16xf32> to vector<16x1xf32>
    %cst_208 = arith.constant 3.200000e+01 : f32
    %550 = vector.broadcast %cst_208 : f32 to vector<16x1xf32>
    %551 = arith.divf %549, %550 : vector<16x1xf32>
    %552 = vector.broadcast %551 : vector<16x1xf32> to vector<16x32xf32>
    %553 = arith.subf %545, %552 : vector<16x32xf32>
    %554 = arith.mulf %553, %553 : vector<16x32xf32>
    %cst_209 = arith.constant dense<0.000000e+00> : vector<16xf32>
    %555 = vector.multi_reduction <add>, %554, %cst_209 [1] : vector<16x32xf32> to vector<16xf32>
    %556 = vector.shape_cast %555 : vector<16xf32> to vector<16x1xf32>
    %cst_210 = arith.constant 0.0322580636 : f32
    %557 = vector.broadcast %cst_210 : f32 to vector<16x1xf32>
    %558 = arith.mulf %556, %557 : vector<16x1xf32>
    %559 = math.sqrt %558 : vector<16x1xf32>
    %cst_211 = arith.constant 9.99999997E-7 : f32
    %560 = vector.broadcast %cst_211 : f32 to vector<16x1xf32>
    %561 = arith.addf %559, %560 : vector<16x1xf32>
    %562 = tpu.reciprocal %561 {approx = true} : vector<16x1xf32> -> vector<16x1xf32>
    %563 = vector.broadcast %546 : vector<1x32xf32> to vector<16x32xf32>
    %564 = arith.mulf %563, %553 : vector<16x32xf32>
    %565 = vector.broadcast %562 : vector<16x1xf32> to vector<16x32xf32>
    %566 = arith.mulf %564, %565 : vector<16x32xf32>
    %567 = vector.broadcast %547 : vector<1x32xf32> to vector<16x32xf32>
    %568 = arith.addf %566, %567 : vector<16x32xf32>
    %569 = arith.truncf %568 : vector<16x32xf32> to vector<16x32xbf16>
    %c1_212 = arith.constant 1 : index
    %c0_213 = arith.constant 0 : index
    %c0_214 = arith.constant 0 : index
    %570 = vector.load %arg11[%c1_212, %c0_213, %c0_214] : memref<2x32x32xf32, #tpu.memory_space<vmem>>, vector<1x32x32xf32>
    %571 = vector.shape_cast %570 : vector<1x32x32xf32> to vector<32x32xf32>
    %572 = arith.truncf %571 : vector<32x32xf32> to vector<32x32xbf16>
    %cst_215 = arith.constant dense<0.000000e+00> : vector<16x32xf32>
    %573 = tpu.matmul %569, %572, %cst_215 {dimension_numbers = #tpu.dot_dimension_numbers<[1], [0], [0], [1], [0, 0, 1, 1], [], []>} : vector<16x32xbf16>, vector<32x32xbf16>, vector<16x32xf32> -> vector<16x32xf32>
    %c1_216 = arith.constant 1 : index
    %c0_217 = arith.constant 0 : index
    %c0_218 = arith.constant 0 : index
    %574 = vector.load %arg12[%c1_216, %c0_217, %c0_218] : memref<2x1x32xf32, #tpu.memory_space<vmem>>, vector<1x1x32xf32>
    %575 = vector.shape_cast %574 : vector<1x1x32xf32> to vector<1x32xf32>
    %576 = vector.broadcast %575 : vector<1x32xf32> to vector<16x32xf32>
    %577 = arith.addf %573, %576 : vector<16x32xf32>
    %578 = vector.extract_strided_slice %63 {offsets = [0, 0], sizes = [16, 32], strides = [1, 1]} : vector<16x64xf32> to vector<16x32xf32>
    %579 = vector.extract_strided_slice %63 {offsets = [0, 32], sizes = [16, 32], strides = [1, 1]} : vector<16x64xf32> to vector<16x32xf32>
    %c1_219 = arith.constant 1 : index
    %c0_220 = arith.constant 0 : index
    %c0_221 = arith.constant 0 : index
    %580 = vector.load %arg15[%c1_219, %c0_220, %c0_221] : memref<2x32x32xf32, #tpu.memory_space<vmem>>, vector<1x32x32xf32>
    %581 = vector.shape_cast %580 : vector<1x32x32xf32> to vector<32x32xf32>
    %c1_222 = arith.constant 1 : index
    %c0_223 = arith.constant 0 : index
    %c0_224 = arith.constant 0 : index
    %582 = vector.load %arg16[%c1_222, %c0_223, %c0_224] : memref<2x1x32xf32, #tpu.memory_space<vmem>>, vector<1x1x32xf32>
    %583 = vector.shape_cast %582 : vector<1x1x32xf32> to vector<1x32xf32>
    %584 = arith.truncf %577 : vector<16x32xf32> to vector<16x32xbf16>
    %585 = arith.truncf %578 : vector<16x32xf32> to vector<16x32xbf16>
    %586 = arith.truncf %579 : vector<16x32xf32> to vector<16x32xbf16>
    %587 = arith.truncf %581 : vector<32x32xf32> to vector<32x32xbf16>
    %cst_225 = arith.constant 0.000000e+00 : f32
    %588 = vector.broadcast %cst_225 : f32 to vector<16x32xf32>
    %589 = vector.extract_strided_slice %584 {offsets = [0, 0], sizes = [16, 8], strides = [1, 1]} : vector<16x32xbf16> to vector<16x8xbf16>
    %590 = vector.extract_strided_slice %585 {offsets = [0, 0], sizes = [16, 8], strides = [1, 1]} : vector<16x32xbf16> to vector<16x8xbf16>
    %591 = vector.extract_strided_slice %586 {offsets = [0, 0], sizes = [16, 8], strides = [1, 1]} : vector<16x32xbf16> to vector<16x8xbf16>
    %cst_226 = arith.constant dense<0.000000e+00> : vector<16x16xf32>
    %592 = tpu.matmul %589, %590, %cst_226 {dimension_numbers = #tpu.dot_dimension_numbers<[1], [1], [0], [0], [0, 0, 1, 0], [], []>} : vector<16x8xbf16>, vector<16x8xbf16>, vector<16x16xf32> -> vector<16x16xf32>
    %cst_227 = arith.constant 0.353553385 : f32
    %593 = vector.broadcast %cst_227 : f32 to vector<16x16xf32>
    %594 = arith.mulf %592, %593 : vector<16x16xf32>
    %595 = arith.addf %594, %39 : vector<16x16xf32>
    %cst_228 = arith.constant dense<0xFF800000> : vector<16xf32>
    %596 = vector.multi_reduction <maximumf>, %595, %cst_228 [1] : vector<16x16xf32> to vector<16xf32>
    %597 = vector.shape_cast %596 : vector<16xf32> to vector<16x1xf32>
    %598 = vector.broadcast %597 : vector<16x1xf32> to vector<16x16xf32>
    %599 = arith.subf %595, %598 : vector<16x16xf32>
    %600 = math.exp %599 : vector<16x16xf32>
    %cst_229 = arith.constant dense<0.000000e+00> : vector<16xf32>
    %601 = vector.multi_reduction <add>, %600, %cst_229 [1] : vector<16x16xf32> to vector<16xf32>
    %602 = vector.shape_cast %601 : vector<16xf32> to vector<16x1xf32>
    %603 = tpu.reciprocal %602 {approx = true} : vector<16x1xf32> -> vector<16x1xf32>
    %604 = vector.broadcast %603 : vector<16x1xf32> to vector<16x16xf32>
    %605 = arith.mulf %600, %604 : vector<16x16xf32>
    %606 = vector.extract_strided_slice %605 {offsets = [0, 0], sizes = [8, 16], strides = [1, 1]} : vector<16x16xf32> to vector<8x16xf32>
    %607 = vector.extract_strided_slice %605 {offsets = [8, 0], sizes = [8, 16], strides = [1, 1]} : vector<16x16xf32> to vector<8x16xf32>
    %608 = arith.addf %606, %607 : vector<8x16xf32>
    %609 = arith.truncf %605 : vector<16x16xf32> to vector<16x16xbf16>
    %cst_230 = arith.constant dense<0.000000e+00> : vector<16x8xf32>
    %610 = tpu.matmul %609, %591, %cst_230 {dimension_numbers = #tpu.dot_dimension_numbers<[1], [0], [0], [1], [0, 0, 1, 1], [], []>} : vector<16x16xbf16>, vector<16x8xbf16>, vector<16x8xf32> -> vector<16x8xf32>
    %611 = arith.truncf %610 : vector<16x8xf32> to vector<16x8xbf16>
    %612 = vector.extract_strided_slice %587 {offsets = [0, 0], sizes = [8, 32], strides = [1, 1]} : vector<32x32xbf16> to vector<8x32xbf16>
    %cst_231 = arith.constant dense<0.000000e+00> : vector<16x32xf32>
    %613 = tpu.matmul %611, %612, %cst_231 {dimension_numbers = #tpu.dot_dimension_numbers<[1], [0], [0], [1], [0, 0, 1, 1], [], []>} : vector<16x8xbf16>, vector<8x32xbf16>, vector<16x32xf32> -> vector<16x32xf32>
    %614 = arith.addf %588, %613 : vector<16x32xf32>
    %615 = vector.extract_strided_slice %584 {offsets = [0, 8], sizes = [16, 8], strides = [1, 1]} : vector<16x32xbf16> to vector<16x8xbf16>
    %616 = vector.extract_strided_slice %585 {offsets = [0, 8], sizes = [16, 8], strides = [1, 1]} : vector<16x32xbf16> to vector<16x8xbf16>
    %617 = vector.extract_strided_slice %586 {offsets = [0, 8], sizes = [16, 8], strides = [1, 1]} : vector<16x32xbf16> to vector<16x8xbf16>
    %cst_232 = arith.constant dense<0.000000e+00> : vector<16x16xf32>
    %618 = tpu.matmul %615, %616, %cst_232 {dimension_numbers = #tpu.dot_dimension_numbers<[1], [1], [0], [0], [0, 0, 1, 0], [], []>} : vector<16x8xbf16>, vector<16x8xbf16>, vector<16x16xf32> -> vector<16x16xf32>
    %cst_233 = arith.constant 0.353553385 : f32
    %619 = vector.broadcast %cst_233 : f32 to vector<16x16xf32>
    %620 = arith.mulf %618, %619 : vector<16x16xf32>
    %621 = arith.addf %620, %39 : vector<16x16xf32>
    %cst_234 = arith.constant dense<0xFF800000> : vector<16xf32>
    %622 = vector.multi_reduction <maximumf>, %621, %cst_234 [1] : vector<16x16xf32> to vector<16xf32>
    %623 = vector.shape_cast %622 : vector<16xf32> to vector<16x1xf32>
    %624 = vector.broadcast %623 : vector<16x1xf32> to vector<16x16xf32>
    %625 = arith.subf %621, %624 : vector<16x16xf32>
    %626 = math.exp %625 : vector<16x16xf32>
    %cst_235 = arith.constant dense<0.000000e+00> : vector<16xf32>
    %627 = vector.multi_reduction <add>, %626, %cst_235 [1] : vector<16x16xf32> to vector<16xf32>
    %628 = vector.shape_cast %627 : vector<16xf32> to vector<16x1xf32>
    %629 = tpu.reciprocal %628 {approx = true} : vector<16x1xf32> -> vector<16x1xf32>
    %630 = vector.broadcast %629 : vector<16x1xf32> to vector<16x16xf32>
    %631 = arith.mulf %626, %630 : vector<16x16xf32>
    %632 = vector.extract_strided_slice %631 {offsets = [0, 0], sizes = [8, 16], strides = [1, 1]} : vector<16x16xf32> to vector<8x16xf32>
    %633 = vector.extract_strided_slice %631 {offsets = [8, 0], sizes = [8, 16], strides = [1, 1]} : vector<16x16xf32> to vector<8x16xf32>
    %634 = arith.addf %632, %633 : vector<8x16xf32>
    %635 = arith.truncf %631 : vector<16x16xf32> to vector<16x16xbf16>
    %cst_236 = arith.constant dense<0.000000e+00> : vector<16x8xf32>
    %636 = tpu.matmul %635, %617, %cst_236 {dimension_numbers = #tpu.dot_dimension_numbers<[1], [0], [0], [1], [0, 0, 1, 1], [], []>} : vector<16x16xbf16>, vector<16x8xbf16>, vector<16x8xf32> -> vector<16x8xf32>
    %637 = arith.truncf %636 : vector<16x8xf32> to vector<16x8xbf16>
    %638 = vector.extract_strided_slice %587 {offsets = [8, 0], sizes = [8, 32], strides = [1, 1]} : vector<32x32xbf16> to vector<8x32xbf16>
    %cst_237 = arith.constant dense<0.000000e+00> : vector<16x32xf32>
    %639 = tpu.matmul %637, %638, %cst_237 {dimension_numbers = #tpu.dot_dimension_numbers<[1], [0], [0], [1], [0, 0, 1, 1], [], []>} : vector<16x8xbf16>, vector<8x32xbf16>, vector<16x32xf32> -> vector<16x32xf32>
    %640 = arith.addf %614, %639 : vector<16x32xf32>
    %641 = vector.extract_strided_slice %584 {offsets = [0, 16], sizes = [16, 8], strides = [1, 1]} : vector<16x32xbf16> to vector<16x8xbf16>
    %642 = vector.extract_strided_slice %585 {offsets = [0, 16], sizes = [16, 8], strides = [1, 1]} : vector<16x32xbf16> to vector<16x8xbf16>
    %643 = vector.extract_strided_slice %586 {offsets = [0, 16], sizes = [16, 8], strides = [1, 1]} : vector<16x32xbf16> to vector<16x8xbf16>
    %cst_238 = arith.constant dense<0.000000e+00> : vector<16x16xf32>
    %644 = tpu.matmul %641, %642, %cst_238 {dimension_numbers = #tpu.dot_dimension_numbers<[1], [1], [0], [0], [0, 0, 1, 0], [], []>} : vector<16x8xbf16>, vector<16x8xbf16>, vector<16x16xf32> -> vector<16x16xf32>
    %cst_239 = arith.constant 0.353553385 : f32
    %645 = vector.broadcast %cst_239 : f32 to vector<16x16xf32>
    %646 = arith.mulf %644, %645 : vector<16x16xf32>
    %647 = arith.addf %646, %39 : vector<16x16xf32>
    %cst_240 = arith.constant dense<0xFF800000> : vector<16xf32>
    %648 = vector.multi_reduction <maximumf>, %647, %cst_240 [1] : vector<16x16xf32> to vector<16xf32>
    %649 = vector.shape_cast %648 : vector<16xf32> to vector<16x1xf32>
    %650 = vector.broadcast %649 : vector<16x1xf32> to vector<16x16xf32>
    %651 = arith.subf %647, %650 : vector<16x16xf32>
    %652 = math.exp %651 : vector<16x16xf32>
    %cst_241 = arith.constant dense<0.000000e+00> : vector<16xf32>
    %653 = vector.multi_reduction <add>, %652, %cst_241 [1] : vector<16x16xf32> to vector<16xf32>
    %654 = vector.shape_cast %653 : vector<16xf32> to vector<16x1xf32>
    %655 = tpu.reciprocal %654 {approx = true} : vector<16x1xf32> -> vector<16x1xf32>
    %656 = vector.broadcast %655 : vector<16x1xf32> to vector<16x16xf32>
    %657 = arith.mulf %652, %656 : vector<16x16xf32>
    %658 = vector.extract_strided_slice %657 {offsets = [0, 0], sizes = [8, 16], strides = [1, 1]} : vector<16x16xf32> to vector<8x16xf32>
    %659 = vector.extract_strided_slice %657 {offsets = [8, 0], sizes = [8, 16], strides = [1, 1]} : vector<16x16xf32> to vector<8x16xf32>
    %660 = arith.addf %658, %659 : vector<8x16xf32>
    %661 = arith.truncf %657 : vector<16x16xf32> to vector<16x16xbf16>
    %cst_242 = arith.constant dense<0.000000e+00> : vector<16x8xf32>
    %662 = tpu.matmul %661, %643, %cst_242 {dimension_numbers = #tpu.dot_dimension_numbers<[1], [0], [0], [1], [0, 0, 1, 1], [], []>} : vector<16x16xbf16>, vector<16x8xbf16>, vector<16x8xf32> -> vector<16x8xf32>
    %663 = arith.truncf %662 : vector<16x8xf32> to vector<16x8xbf16>
    %664 = vector.extract_strided_slice %587 {offsets = [16, 0], sizes = [8, 32], strides = [1, 1]} : vector<32x32xbf16> to vector<8x32xbf16>
    %cst_243 = arith.constant dense<0.000000e+00> : vector<16x32xf32>
    %665 = tpu.matmul %663, %664, %cst_243 {dimension_numbers = #tpu.dot_dimension_numbers<[1], [0], [0], [1], [0, 0, 1, 1], [], []>} : vector<16x8xbf16>, vector<8x32xbf16>, vector<16x32xf32> -> vector<16x32xf32>
    %666 = arith.addf %640, %665 : vector<16x32xf32>
    %667 = vector.extract_strided_slice %584 {offsets = [0, 24], sizes = [16, 8], strides = [1, 1]} : vector<16x32xbf16> to vector<16x8xbf16>
    %668 = vector.extract_strided_slice %585 {offsets = [0, 24], sizes = [16, 8], strides = [1, 1]} : vector<16x32xbf16> to vector<16x8xbf16>
    %669 = vector.extract_strided_slice %586 {offsets = [0, 24], sizes = [16, 8], strides = [1, 1]} : vector<16x32xbf16> to vector<16x8xbf16>
    %cst_244 = arith.constant dense<0.000000e+00> : vector<16x16xf32>
    %670 = tpu.matmul %667, %668, %cst_244 {dimension_numbers = #tpu.dot_dimension_numbers<[1], [1], [0], [0], [0, 0, 1, 0], [], []>} : vector<16x8xbf16>, vector<16x8xbf16>, vector<16x16xf32> -> vector<16x16xf32>
    %cst_245 = arith.constant 0.353553385 : f32
    %671 = vector.broadcast %cst_245 : f32 to vector<16x16xf32>
    %672 = arith.mulf %670, %671 : vector<16x16xf32>
    %673 = arith.addf %672, %39 : vector<16x16xf32>
    %cst_246 = arith.constant dense<0xFF800000> : vector<16xf32>
    %674 = vector.multi_reduction <maximumf>, %673, %cst_246 [1] : vector<16x16xf32> to vector<16xf32>
    %675 = vector.shape_cast %674 : vector<16xf32> to vector<16x1xf32>
    %676 = vector.broadcast %675 : vector<16x1xf32> to vector<16x16xf32>
    %677 = arith.subf %673, %676 : vector<16x16xf32>
    %678 = math.exp %677 : vector<16x16xf32>
    %cst_247 = arith.constant dense<0.000000e+00> : vector<16xf32>
    %679 = vector.multi_reduction <add>, %678, %cst_247 [1] : vector<16x16xf32> to vector<16xf32>
    %680 = vector.shape_cast %679 : vector<16xf32> to vector<16x1xf32>
    %681 = tpu.reciprocal %680 {approx = true} : vector<16x1xf32> -> vector<16x1xf32>
    %682 = vector.broadcast %681 : vector<16x1xf32> to vector<16x16xf32>
    %683 = arith.mulf %678, %682 : vector<16x16xf32>
    %684 = vector.extract_strided_slice %683 {offsets = [0, 0], sizes = [8, 16], strides = [1, 1]} : vector<16x16xf32> to vector<8x16xf32>
    %685 = vector.extract_strided_slice %683 {offsets = [8, 0], sizes = [8, 16], strides = [1, 1]} : vector<16x16xf32> to vector<8x16xf32>
    %686 = arith.addf %684, %685 : vector<8x16xf32>
    %687 = arith.truncf %683 : vector<16x16xf32> to vector<16x16xbf16>
    %cst_248 = arith.constant dense<0.000000e+00> : vector<16x8xf32>
    %688 = tpu.matmul %687, %669, %cst_248 {dimension_numbers = #tpu.dot_dimension_numbers<[1], [0], [0], [1], [0, 0, 1, 1], [], []>} : vector<16x16xbf16>, vector<16x8xbf16>, vector<16x8xf32> -> vector<16x8xf32>
    %689 = arith.truncf %688 : vector<16x8xf32> to vector<16x8xbf16>
    %690 = vector.extract_strided_slice %587 {offsets = [24, 0], sizes = [8, 32], strides = [1, 1]} : vector<32x32xbf16> to vector<8x32xbf16>
    %cst_249 = arith.constant dense<0.000000e+00> : vector<16x32xf32>
    %691 = tpu.matmul %689, %690, %cst_249 {dimension_numbers = #tpu.dot_dimension_numbers<[1], [0], [0], [1], [0, 0, 1, 1], [], []>} : vector<16x8xbf16>, vector<8x32xbf16>, vector<16x32xf32> -> vector<16x32xf32>
    %692 = arith.addf %666, %691 : vector<16x32xf32>
    %693 = tpu.concatenate %608, %634, %660, %686 in 1 : vector<8x16xf32>, vector<8x16xf32>, vector<8x16xf32>, vector<8x16xf32> -> vector<8x64xf32>
    %694 = vector.broadcast %583 : vector<1x32xf32> to vector<16x32xf32>
    %695 = arith.addf %692, %694 : vector<16x32xf32>
    %696 = arith.addf %545, %695 : vector<16x32xf32>
    %c0_250 = arith.constant 0 : index
    %c64 = arith.constant 64 : index
    %697 = vector.load %arg24[%c0_250, %c64] : memref<8x128xf32, #tpu.memory_space<vmem>>, vector<8x64xf32>
    tpu.vector_store %arg24[%c0_250, %c64], %693 {strides = array<i32>} : memref<8x128xf32, #tpu.memory_space<vmem>>, vector<8x64xf32>,
    %698 = vector.extract_strided_slice %404 {offsets = [2, 0], sizes = [1, 32], strides = [1, 1]} : vector<3x32xf32> to vector<1x32xf32>
    %699 = vector.extract_strided_slice %406 {offsets = [2, 0], sizes = [1, 32], strides = [1, 1]} : vector<3x32xf32> to vector<1x32xf32>
    %cst_251 = arith.constant dense<0.000000e+00> : vector<16xf32>
    %700 = vector.multi_reduction <add>, %696, %cst_251 [1] : vector<16x32xf32> to vector<16xf32>
    %701 = vector.shape_cast %700 : vector<16xf32> to vector<16x1xf32>
    %cst_252 = arith.constant 3.200000e+01 : f32
    %702 = vector.broadcast %cst_252 : f32 to vector<16x1xf32>
    %703 = arith.divf %701, %702 : vector<16x1xf32>
    %704 = vector.broadcast %703 : vector<16x1xf32> to vector<16x32xf32>
    %705 = arith.subf %696, %704 : vector<16x32xf32>
    %706 = arith.mulf %705, %705 : vector<16x32xf32>
    %cst_253 = arith.constant dense<0.000000e+00> : vector<16xf32>
    %707 = vector.multi_reduction <add>, %706, %cst_253 [1] : vector<16x32xf32> to vector<16xf32>
    %708 = vector.shape_cast %707 : vector<16xf32> to vector<16x1xf32>
    %cst_254 = arith.constant 0.0322580636 : f32
    %709 = vector.broadcast %cst_254 : f32 to vector<16x1xf32>
    %710 = arith.mulf %708, %709 : vector<16x1xf32>
    %711 = math.sqrt %710 : vector<16x1xf32>
    %cst_255 = arith.constant 9.99999997E-7 : f32
    %712 = vector.broadcast %cst_255 : f32 to vector<16x1xf32>
    %713 = arith.addf %711, %712 : vector<16x1xf32>
    %714 = tpu.reciprocal %713 {approx = true} : vector<16x1xf32> -> vector<16x1xf32>
    %715 = vector.broadcast %698 : vector<1x32xf32> to vector<16x32xf32>
    %716 = arith.mulf %715, %705 : vector<16x32xf32>
    %717 = vector.broadcast %714 : vector<16x1xf32> to vector<16x32xf32>
    %718 = arith.mulf %716, %717 : vector<16x32xf32>
    %719 = vector.broadcast %699 : vector<1x32xf32> to vector<16x32xf32>
    %720 = arith.addf %718, %719 : vector<16x32xf32>
    %721 = arith.truncf %720 : vector<16x32xf32> to vector<16x32xbf16>
    %c1_256 = arith.constant 1 : index
    %c0_257 = arith.constant 0 : index
    %c0_258 = arith.constant 0 : index
    %722 = vector.load %arg17[%c1_256, %c0_257, %c0_258] : memref<2x32x128xf32, #tpu.memory_space<vmem>>, vector<1x32x128xf32>
    %723 = vector.shape_cast %722 : vector<1x32x128xf32> to vector<32x128xf32>
    %724 = arith.truncf %723 : vector<32x128xf32> to vector<32x128xbf16>
    %cst_259 = arith.constant dense<0.000000e+00> : vector<16x128xf32>
    %725 = tpu.matmul %721, %724, %cst_259 {dimension_numbers = #tpu.dot_dimension_numbers<[1], [0], [0], [1], [0, 0, 1, 1], [], []>} : vector<16x32xbf16>, vector<32x128xbf16>, vector<16x128xf32> -> vector<16x128xf32>
    %c1_260 = arith.constant 1 : index
    %c0_261 = arith.constant 0 : index
    %c0_262 = arith.constant 0 : index
    %726 = vector.load %arg18[%c1_260, %c0_261, %c0_262] : memref<2x1x128xf32, #tpu.memory_space<vmem>>, vector<1x1x128xf32>
    %727 = vector.shape_cast %726 : vector<1x1x128xf32> to vector<1x128xf32>
    %728 = vector.broadcast %727 : vector<1x128xf32> to vector<16x128xf32>
    %729 = arith.addf %725, %728 : vector<16x128xf32>
    %cst_263 = arith.constant 0.000000e+00 : f32
    %730 = vector.broadcast %cst_263 : f32 to vector<16x128xf32>
    %731 = arith.maximumf %729, %730 : vector<16x128xf32>
    %732 = arith.truncf %731 : vector<16x128xf32> to vector<16x128xbf16>
    %c1_264 = arith.constant 1 : index
    %c0_265 = arith.constant 0 : index
    %c0_266 = arith.constant 0 : index
    %733 = vector.load %arg19[%c1_264, %c0_265, %c0_266] : memref<2x128x32xf32, #tpu.memory_space<vmem>>, vector<1x128x32xf32>
    %734 = vector.shape_cast %733 : vector<1x128x32xf32> to vector<128x32xf32>
    %735 = arith.truncf %734 : vector<128x32xf32> to vector<128x32xbf16>
    %cst_267 = arith.constant dense<0.000000e+00> : vector<16x32xf32>
    %736 = tpu.matmul %732, %735, %cst_267 {dimension_numbers = #tpu.dot_dimension_numbers<[1], [0], [0], [1], [0, 0, 1, 1], [], []>} : vector<16x128xbf16>, vector<128x32xbf16>, vector<16x32xf32> -> vector<16x32xf32>
    %737 = arith.addf %696, %736 : vector<16x32xf32>
    %c1_268 = arith.constant 1 : index
    %c0_269 = arith.constant 0 : index
    %c0_270 = arith.constant 0 : index
    %738 = vector.load %arg20[%c1_268, %c0_269, %c0_270] : memref<2x1x32xf32, #tpu.memory_space<vmem>>, vector<1x1x32xf32>
    %739 = vector.shape_cast %738 : vector<1x1x32xf32> to vector<1x32xf32>
    %740 = vector.broadcast %739 : vector<1x32xf32> to vector<16x32xf32>
    %741 = arith.addf %737, %740 : vector<16x32xf32>
    %c0_271 = arith.constant 0 : index
    %c0_272 = arith.constant 0 : index
    %742 = vector.load %arg21[%c0_271, %c0_272] : memref<1x32xf32, #tpu.memory_space<vmem>>, vector<1x32xf32>
    %c0_273 = arith.constant 0 : index
    %c0_274 = arith.constant 0 : index
    %743 = vector.load %arg22[%c0_273, %c0_274] : memref<1x32xf32, #tpu.memory_space<vmem>>, vector<1x32xf32>
    %cst_275 = arith.constant dense<0.000000e+00> : vector<16xf32>
    %744 = vector.multi_reduction <add>, %741, %cst_275 [1] : vector<16x32xf32> to vector<16xf32>
    %745 = vector.shape_cast %744 : vector<16xf32> to vector<16x1xf32>
    %cst_276 = arith.constant 3.200000e+01 : f32
    %746 = vector.broadcast %cst_276 : f32 to vector<16x1xf32>
    %747 = arith.divf %745, %746 : vector<16x1xf32>
    %748 = vector.broadcast %747 : vector<16x1xf32> to vector<16x32xf32>
    %749 = arith.subf %741, %748 : vector<16x32xf32>
    %750 = arith.mulf %749, %749 : vector<16x32xf32>
    %cst_277 = arith.constant dense<0.000000e+00> : vector<16xf32>
    %751 = vector.multi_reduction <add>, %750, %cst_277 [1] : vector<16x32xf32> to vector<16xf32>
    %752 = vector.shape_cast %751 : vector<16xf32> to vector<16x1xf32>
    %cst_278 = arith.constant 0.0322580636 : f32
    %753 = vector.broadcast %cst_278 : f32 to vector<16x1xf32>
    %754 = arith.mulf %752, %753 : vector<16x1xf32>
    %755 = math.sqrt %754 : vector<16x1xf32>
    %cst_279 = arith.constant 9.99999997E-7 : f32
    %756 = vector.broadcast %cst_279 : f32 to vector<16x1xf32>
    %757 = arith.addf %755, %756 : vector<16x1xf32>
    %758 = tpu.reciprocal %757 {approx = true} : vector<16x1xf32> -> vector<16x1xf32>
    %759 = vector.broadcast %742 : vector<1x32xf32> to vector<16x32xf32>
    %760 = arith.mulf %759, %749 : vector<16x32xf32>
    %761 = vector.broadcast %758 : vector<16x1xf32> to vector<16x32xf32>
    %762 = arith.mulf %760, %761 : vector<16x32xf32>
    %763 = vector.broadcast %743 : vector<1x32xf32> to vector<16x32xf32>
    %764 = arith.addf %762, %763 : vector<16x32xf32>
    %c0_280 = arith.constant 0 : index
    %c0_281 = arith.constant 0 : index
    %765 = vector.load %arg23[%c0_280, %c0_281] : memref<16x32xf32, #tpu.memory_space<vmem>>, vector<16x32xf32>
    tpu.vector_store %arg23[%c0_280, %c0_281], %764 {strides = array<i32>} : memref<16x32xf32, #tpu.memory_space<vmem>>, vector<16x32xf32>,
    return
  }
}

</mosaic_0001>

<llo_original>
// kernel: tpu_custom_call.1
$region0: #{tpu_custom_call.1}
  #allocation0 [shape = 'u32[]', space=smem, size = 0x4, offset = 0x4, fixed_abs, tag = 'smem constant byte address 0x4 - core index']
  #allocation1 [shape = 'u32[144,128]{1,0:T(1,128)}', space=vmem, size = 0x12000, scoped, tag = 'internal scratch']
  %s0 = inlined_call_operand.vmem [shape: f32[16,32], index: 0, kind: input, shape index: {}]
  %s1 = inlined_call_operand.hbm [shape: f32[16,32], index: 1, kind: input, shape index: {}]
  %s2 = inlined_call_operand.vmem [shape: f32[16,32], index: 2, kind: input, shape index: {}]
  %s3 = inlined_call_operand.hbm [shape: f32[2,8,8], index: 3, kind: input, shape index: {}]
  %s4 = inlined_call_operand.vmem [shape: f32[2,1,8], index: 4, kind: input, shape index: {}]
  %s5 = inlined_call_operand.vmem [shape: f32[2,3,32], index: 5, kind: input, shape index: {}]
  %s6 = inlined_call_operand.vmem [shape: f32[2,3,32], index: 6, kind: input, shape index: {}]
  %s7 = inlined_call_operand.vmem [shape: f32[2,32,96], index: 7, kind: input, shape index: {}]
  %s8 = inlined_call_operand.hbm [shape: f32[2,1,96], index: 8, kind: input, shape index: {}]
  %s9 = inlined_call_operand.vmem [shape: f32[2,32,32], index: 9, kind: input, shape index: {}]
  %s10 = inlined_call_operand.hbm [shape: f32[2,1,32], index: 10, kind: input, shape index: {}]
  %s11 = inlined_call_operand.vmem [shape: f32[2,32,32], index: 11, kind: input, shape index: {}]
  %s12 = inlined_call_operand.hbm [shape: f32[2,1,32], index: 12, kind: input, shape index: {}]
  %s13 = inlined_call_operand.vmem [shape: f32[2,32,64], index: 13, kind: input, shape index: {}]
  %s14 = inlined_call_operand.hbm [shape: f32[2,1,64], index: 14, kind: input, shape index: {}]
  %s15 = inlined_call_operand.vmem [shape: f32[2,32,32], index: 15, kind: input, shape index: {}]
  %s16 = inlined_call_operand.hbm [shape: f32[2,1,32], index: 16, kind: input, shape index: {}]
  %s17 = inlined_call_operand.hbm [shape: f32[2,32,128], index: 17, kind: input, shape index: {}]
  %s18 = inlined_call_operand.hbm [shape: f32[2,1,128], index: 18, kind: input, shape index: {}]
  %s19 = inlined_call_operand.vmem [shape: f32[2,128,32], index: 19, kind: input, shape index: {}]
  %s20 = inlined_call_operand.vmem [shape: f32[2,1,32], index: 20, kind: input, shape index: {}]
  %s21 = inlined_call_operand.vmem [shape: f32[1,32], index: 21, kind: input, shape index: {}]
  %s22 = inlined_call_operand.vmem [shape: f32[1,32], index: 22, kind: input, shape index: {}]
  %s23 = inlined_call_operand.hbm [shape: f32[16,32], index: 23, kind: output, shape index: {0}]
  %s24 = inlined_call_operand.hbm [shape: f32[8,128], index: 24, kind: output, shape index: {1}]
  %25 = xla_tuple %s23, %s24
  %s26 = sld [smem:[#allocation0]]
  $region146: #{tpu_custom_call.1} parent=0
    _
  %s28 = ssub.s32 1, %s26
  %s29 = scalar_select 0, %s28, %s26
  $region1: #{tpu_custom_call.1} parent=0
    #allocation2 [shape = 'u8[8192]{0}', space=vmem, size = 0x2000, scoped, tag = 'input window, operand 1, single buffered']
    #allocation3 [shape = 's32[1]{0}', space=sflag, size = 0x4, scoped, tag = 'scoped memory for tpu_custom_call.1']
    #allocation4 [shape = 's32[1]{0}', space=sflag, size = 0x4, scoped, tag = 'scoped memory for tpu_custom_call.1']
    #allocation5 [shape = 'u8[8192]{0}', space=vmem, size = 0x2000, scoped, tag = 'input window, operand 3, single buffered']
    #allocation6 [shape = 's32[1]{0}', space=sflag, size = 0x4, scoped, tag = 'scoped memory for tpu_custom_call.1']
    #allocation7 [shape = 'u8[1024]{0}', space=vmem, size = 0x400, scoped, tag = 'input window, operand 8, single buffered']
    #allocation8 [shape = 'u8[1024]{0}', space=vmem, size = 0x400, scoped, tag = 'input window, operand 10, single buffered']
    #allocation9 [shape = 's32[1]{0}', space=sflag, size = 0x4, scoped, tag = 'scoped memory for tpu_custom_call.1']
    #allocation10 [shape = 'u8[1024]{0}', space=vmem, size = 0x400, scoped, tag = 'input window, operand 12, single buffered']
    #allocation11 [shape = 'u8[1024]{0}', space=vmem, size = 0x400, scoped, tag = 'input window, operand 14, single buffered']
    #allocation12 [shape = 's32[1]{0}', space=sflag, size = 0x4, scoped, tag = 'scoped memory for tpu_custom_call.1']
    #allocation13 [shape = 'u8[1024]{0}', space=vmem, size = 0x400, scoped, tag = 'input window, operand 16, single buffered']
    #allocation14 [shape = 'u8[32768]{0}', space=vmem, size = 0x8000, scoped, tag = 'input window, operand 17, single buffered']
    #allocation15 [shape = 's32[1]{0}', space=sflag, size = 0x4, scoped, tag = 'scoped memory for tpu_custom_call.1']
    #allocation16 [shape = 'u8[1024]{0}', space=vmem, size = 0x400, scoped, tag = 'input window, operand 18, single buffered']
    #allocation17 [shape = 'u8[8192]{0}', space=vmem, size = 0x2000, scoped, tag = 'output window, operand 0, single buffered']
    #allocation18 [shape = 'u8[4096]{0}', space=vmem, size = 0x1000, scoped, tag = 'output window, operand 1, single buffered']
    #allocation19 [shape = 's32[1]{0}', space=sflag, size = 0x4, scoped, tag = 'scoped memory for tpu_custom_call.1']
    %30 = vsyncpa [#allocation3], 0
    %31 = vsyncpa [#allocation6], 0
    %32 = vsyncpa [#allocation9], 0
    %33 = vsyncpa [#allocation12], 0
    %34 = vsyncpa [#allocation15], 0
    %35 = vsyncpa [#allocation4], 0
    %36 = vsyncpa [#allocation19], 0
    // Predicated region
    $region2: #{tpu_custom_call.1} parent=1 // pred_check
      _
    $region3: #{tpu_custom_call.1} parent=1 // pred_check_branch
      %38 = sbr.rel (0) target = $region5
    $region4: #{tpu_custom_call.1} parent=1 // pred_region
      _
    $region5: #{tpu_custom_call.1} parent=1 // pred_fallthru
      _
    // Predicated region
    $region6: #{tpu_custom_call.1} parent=1 // pred_check
      _
    $region7: #{tpu_custom_call.1} parent=1 // pred_check_branch
      %40 = sbr.rel (0) target = $region9
    $region8: #{tpu_custom_call.1} parent=1 // pred_region
      %s42 = ssub.s32 256, 256
      %43 = vsyncadd [#allocation3], %s42
      %s44 = sshll.u32 [#allocation2], 4
      %s45 = int_to_ptr.vmem [resolvable:$true] %s44
      %50 = dma.hbm_to_vmem [thread:$0]  %s1, 256, %s45, [#allocation3], 128, 128, 8
    $region9: #{tpu_custom_call.1} parent=1 // pred_fallthru
      _
    // Predicated region
    $region10: #{tpu_custom_call.1} parent=1 // pred_check
      _
    $region11: #{tpu_custom_call.1} parent=1 // pred_check_branch
      %52 = sbr.rel (0) target = $region13
    $region12: #{tpu_custom_call.1} parent=1 // pred_region
      _
    $region13: #{tpu_custom_call.1} parent=1 // pred_fallthru
      _
    // Predicated region
    $region14: #{tpu_custom_call.1} parent=1 // pred_check
      _
    $region15: #{tpu_custom_call.1} parent=1 // pred_check_branch
      %54 = sbr.rel (0) target = $region17
    $region16: #{tpu_custom_call.1} parent=1 // pred_region
      %s56 = ssub.s32 256, 256
      %57 = vsyncadd [#allocation6], %s56
      %s58 = sshll.u32 [#allocation5], 4
      %s59 = int_to_ptr.vmem [resolvable:$true] %s58
      %64 = dma.hbm_to_vmem [thread:$0]  %s3, 256, %s59, [#allocation6], 128, 128, 8
    $region17: #{tpu_custom_call.1} parent=1 // pred_fallthru
      _
    // Predicated region
    $region18: #{tpu_custom_call.1} parent=1 // pred_check
      _
    $region19: #{tpu_custom_call.1} parent=1 // pred_check_branch
      %66 = sbr.rel (0) target = $region21
    $region20: #{tpu_custom_call.1} parent=1 // pred_region
      _
    $region21: #{tpu_custom_call.1} parent=1 // pred_fallthru
      _
    // Predicated region
    $region22: #{tpu_custom_call.1} parent=1 // pred_check
      _
    $region23: #{tpu_custom_call.1} parent=1 // pred_check_branch
      %68 = sbr.rel (0) target = $region25
    $region24: #{tpu_custom_call.1} parent=1 // pred_region
      _
    $region25: #{tpu_custom_call.1} parent=1 // pred_fallthru
      _
    // Predicated region
    $region26: #{tpu_custom_call.1} parent=1 // pred_check
      _
    $region27: #{tpu_custom_call.1} parent=1 // pred_check_branch
      %70 = sbr.rel (0) target = $region29
    $region28: #{tpu_custom_call.1} parent=1 // pred_region
      _
    $region29: #{tpu_custom_call.1} parent=1 // pred_fallthru
      _
    // Predicated region
    $region30: #{tpu_custom_call.1} parent=1 // pred_check
      _
    $region31: #{tpu_custom_call.1} parent=1 // pred_check_branch
      %72 = sbr.rel (0) target = $region33
    $region32: #{tpu_custom_call.1} parent=1 // pred_region
      _
    $region33: #{tpu_custom_call.1} parent=1 // pred_fallthru
      _
    // Predicated region
    $region34: #{tpu_custom_call.1} parent=1 // pred_check
      _
    $region35: #{tpu_custom_call.1} parent=1 // pred_check_branch
      %74 = sbr.rel (0) target = $region37
    $region36: #{tpu_custom_call.1} parent=1 // pred_region
      %s76 = ssub.s32 32, 32
      %77 = vsyncadd [#allocation6], %s76
      %s78 = sshll.u32 [#allocation7], 4
      %s79 = int_to_ptr.vmem [resolvable:$true] %s78
      %84 = dma.hbm_to_vmem [thread:$0]  %s8, 32, %s79, [#allocation6], 16, 16, 1
    $region37: #{tpu_custom_call.1} parent=1 // pred_fallthru
      _
    // Predicated region
    $region38: #{tpu_custom_call.1} parent=1 // pred_check
      _
    $region39: #{tpu_custom_call.1} parent=1 // pred_check_branch
      %86 = sbr.rel (0) target = $region41
    $region40: #{tpu_custom_call.1} parent=1 // pred_region
      _
    $region41: #{tpu_custom_call.1} parent=1 // pred_fallthru
      _
    // Predicated region
    $region42: #{tpu_custom_call.1} parent=1 // pred_check
      _
    $region43: #{tpu_custom_call.1} parent=1 // pred_check_branch
      %88 = sbr.rel (0) target = $region45
    $region44: #{tpu_custom_call.1} parent=1 // pred_region
      %s90 = ssub.s32 32, 32
      %91 = vsyncadd [#allocation9], %s90
      %s92 = sshll.u32 [#allocation8], 4
      %s93 = int_to_ptr.vmem [resolvable:$true] %s92
      %98 = dma.hbm_to_vmem [thread:$0]  %s10, 32, %s93, [#allocation9], 16, 16, 1
    $region45: #{tpu_custom_call.1} parent=1 // pred_fallthru
      _
    // Predicated region
    $region46: #{tpu_custom_call.1} parent=1 // pred_check
      _
    $region47: #{tpu_custom_call.1} parent=1 // pred_check_branch
      %100 = sbr.rel (0) target = $region49
    $region48: #{tpu_custom_call.1} parent=1 // pred_region
      _
    $region49: #{tpu_custom_call.1} parent=1 // pred_fallthru
      _
    // Predicated region
    $region50: #{tpu_custom_call.1} parent=1 // pred_check
      _
    $region51: #{tpu_custom_call.1} parent=1 // pred_check_branch
      %102 = sbr.rel (0) target = $region53
    $region52: #{tpu_custom_call.1} parent=1 // pred_region
      %s104 = ssub.s32 32, 32
      %105 = vsyncadd [#allocation9], %s104
      %s106 = sshll.u32 [#allocation10], 4
      %s107 = int_to_ptr.vmem [resolvable:$true] %s106
      %112 = dma.hbm_to_vmem [thread:$0]  %s12, 32, %s107, [#allocation9], 16, 16, 1
    $region53: #{tpu_custom_call.1} parent=1 // pred_fallthru
      _
    // Predicated region
    $region54: #{tpu_custom_call.1} parent=1 // pred_check
      _
    $region55: #{tpu_custom_call.1} parent=1 // pred_check_branch
      %114 = sbr.rel (0) target = $region57
    $region56: #{tpu_custom_call.1} parent=1 // pred_region
      _
    $region57: #{tpu_custom_call.1} parent=1 // pred_fallthru
      _
    // Predicated region
    $region58: #{tpu_custom_call.1} parent=1 // pred_check
      _
    $region59: #{tpu_custom_call.1} parent=1 // pred_check_branch
      %116 = sbr.rel (0) target = $region61
    $region60: #{tpu_custom_call.1} parent=1 // pred_region
      %s118 = ssub.s32 32, 32
      %119 = vsyncadd [#allocation12], %s118
      %s120 = sshll.u32 [#allocation11], 4
      %s121 = int_to_ptr.vmem [resolvable:$true] %s120
      %126 = dma.hbm_to_vmem [thread:$0]  %s14, 32, %s121, [#allocation12], 16, 16, 1
    $region61: #{tpu_custom_call.1} parent=1 // pred_fallthru
      _
    // Predicated region
    $region62: #{tpu_custom_call.1} parent=1 // pred_check
      _
    $region63: #{tpu_custom_call.1} parent=1 // pred_check_branch
      %128 = sbr.rel (0) target = $region65
    $region64: #{tpu_custom_call.1} parent=1 // pred_region
      _
    $region65: #{tpu_custom_call.1} parent=1 // pred_fallthru
      _
    // Predicated region
    $region66: #{tpu_custom_call.1} parent=1 // pred_check
      _
    $region67: #{tpu_custom_call.1} parent=1 // pred_check_branch
      %130 = sbr.rel (0) target = $region69
    $region68: #{tpu_custom_call.1} parent=1 // pred_region
      %s132 = ssub.s32 32, 32
      %133 = vsyncadd [#allocation12], %s132
      %s134 = sshll.u32 [#allocation13], 4
      %s135 = int_to_ptr.vmem [resolvable:$true] %s134
      %140 = dma.hbm_to_vmem [thread:$0]  %s16, 32, %s135, [#allocation12], 16, 16, 1
    $region69: #{tpu_custom_call.1} parent=1 // pred_fallthru
      _
    // Predicated region
    $region70: #{tpu_custom_call.1} parent=1 // pred_check
      _
    $region71: #{tpu_custom_call.1} parent=1 // pred_check_branch
      %142 = sbr.rel (0) target = $region73
    $region72: #{tpu_custom_call.1} parent=1 // pred_region
      %s144 = ssub.s32 1024, 1024
      %145 = vsyncadd [#allocation15], %s144
      %s146 = sshll.u32 [#allocation14], 4
      %s147 = int_to_ptr.vmem [resolvable:$true] %s146
      %152 = dma.hbm_to_vmem [thread:$0]  %s17, 1024, %s147, [#allocation15], 128, 128, 8
    $region73: #{tpu_custom_call.1} parent=1 // pred_fallthru
      _
    // Predicated region
    $region74: #{tpu_custom_call.1} parent=1 // pred_check
      _
    $region75: #{tpu_custom_call.1} parent=1 // pred_check_branch
      %154 = sbr.rel (0) target = $region77
    $region76: #{tpu_custom_call.1} parent=1 // pred_region
      %s156 = ssub.s32 32, 32
      %157 = vsyncadd [#allocation15], %s156
      %s158 = sshll.u32 [#allocation16], 4
      %s159 = int_to_ptr.vmem [resolvable:$true] %s158
      %164 = dma.hbm_to_vmem [thread:$0]  %s18, 32, %s159, [#allocation15], 16, 16, 1
    $region77: #{tpu_custom_call.1} parent=1 // pred_fallthru
      _
    // Predicated region
    $region78: #{tpu_custom_call.1} parent=1 // pred_check
      _
    $region79: #{tpu_custom_call.1} parent=1 // pred_check_branch
      %166 = sbr.rel (0) target = $region81
    $region80: #{tpu_custom_call.1} parent=1 // pred_region
      _
    $region81: #{tpu_custom_call.1} parent=1 // pred_fallthru
      _
    // Predicated region
    $region82: #{tpu_custom_call.1} parent=1 // pred_check
      _
    $region83: #{tpu_custom_call.1} parent=1 // pred_check_branch
      %168 = sbr.rel (0) target = $region85
    $region84: #{tpu_custom_call.1} parent=1 // pred_region
      _
    $region85: #{tpu_custom_call.1} parent=1 // pred_fallthru
      _
    // Predicated region
    $region86: #{tpu_custom_call.1} parent=1 // pred_check
      _
    $region87: #{tpu_custom_call.1} parent=1 // pred_check_branch
      %170 = sbr.rel (0) target = $region89
    $region88: #{tpu_custom_call.1} parent=1 // pred_region
      _
    $region89: #{tpu_custom_call.1} parent=1 // pred_fallthru
      _
    // Predicated region
    $region90: #{tpu_custom_call.1} parent=1 // pred_check
      _
    $region91: #{tpu_custom_call.1} parent=1 // pred_check_branch
      %172 = sbr.rel (0) target = $region93
    $region92: #{tpu_custom_call.1} parent=1 // pred_region
      _
    $region93: #{tpu_custom_call.1} parent=1 // pred_fallthru
      _
    // Predicated region
    $region94: #{tpu_custom_call.1} parent=1 // pred_check
      _
    $region95: #{tpu_custom_call.1} parent=1 // pred_check_branch
      %174 = sbr.rel (0) target = $region97
    $region96: #{tpu_custom_call.1} parent=1 // pred_region
      %175 = dma.done [#allocation3], 256
    $region97: #{tpu_custom_call.1} parent=1 // pred_fallthru
      _
    // Predicated region
    $region98: #{tpu_custom_call.1} parent=1 // pred_check
      _
    $region99: #{tpu_custom_call.1} parent=1 // pred_check_branch
      %177 = sbr.rel (0) target = $region101
    $region100: #{tpu_custom_call.1} parent=1 // pred_region
      %178 = dma.done [#allocation6], 256
    $region101: #{tpu_custom_call.1} parent=1 // pred_fallthru
      _
    // Predicated region
    $region102: #{tpu_custom_call.1} parent=1 // pred_check
      _
    $region103: #{tpu_custom_call.1} parent=1 // pred_check_branch
      %180 = sbr.rel (0) target = $region105
    $region104: #{tpu_custom_call.1} parent=1 // pred_region
      %181 = dma.done [#allocation6], 32
    $region105: #{tpu_custom_call.1} parent=1 // pred_fallthru
      _
    // Predicated region
    $region106: #{tpu_custom_call.1} parent=1 // pred_check
      _
    $region107: #{tpu_custom_call.1} parent=1 // pred_check_branch
      %183 = sbr.rel (0) target = $region109
    $region108: #{tpu_custom_call.1} parent=1 // pred_region
      %184 = dma.done [#allocation9], 32
    $region109: #{tpu_custom_call.1} parent=1 // pred_fallthru
      _
    // Predicated region
    $region110: #{tpu_custom_call.1} parent=1 // pred_check
      _
    $region111: #{tpu_custom_call.1} parent=1 // pred_check_branch
      %186 = sbr.rel (0) target = $region113
    $region112: #{tpu_custom_call.1} parent=1 // pred_region
      %187 = dma.done [#allocation9], 32
    $region113: #{tpu_custom_call.1} parent=1 // pred_fallthru
      _
    // Predicated region
    $region114: #{tpu_custom_call.1} parent=1 // pred_check
      _
    $region115: #{tpu_custom_call.1} parent=1 // pred_check_branch
      %189 = sbr.rel (0) target = $region117
    $region116: #{tpu_custom_call.1} parent=1 // pred_region
      %190 = dma.done [#allocation12], 32
    $region117: #{tpu_custom_call.1} parent=1 // pred_fallthru
      _
    // Predicated region
    $region118: #{tpu_custom_call.1} parent=1 // pred_check
      _
    $region119: #{tpu_custom_call.1} parent=1 // pred_check_branch
      %192 = sbr.rel (0) target = $region121
    $region120: #{tpu_custom_call.1} parent=1 // pred_region
      %193 = dma.done [#allocation12], 32
    $region121: #{tpu_custom_call.1} parent=1 // pred_fallthru
      _
    // Predicated region
    $region122: #{tpu_custom_call.1} parent=1 // pred_check
      _
    $region123: #{tpu_custom_call.1} parent=1 // pred_check_branch
      %195 = sbr.rel (0) target = $region125
    $region124: #{tpu_custom_call.1} parent=1 // pred_region
      %196 = dma.done [#allocation15], 1024
    $region125: #{tpu_custom_call.1} parent=1 // pred_fallthru
      _
    // Predicated region
    $region126: #{tpu_custom_call.1} parent=1 // pred_check
      _
    $region127: #{tpu_custom_call.1} parent=1 // pred_check_branch
      %198 = sbr.rel (0) target = $region129
    $region128: #{tpu_custom_call.1} parent=1 // pred_region
      %199 = dma.done [#allocation15], 32
    $region129: #{tpu_custom_call.1} parent=1 // pred_fallthru
      _
    %v201 = vld [vmem:[#allocation5] sm:$0xff]
    %vm202 = vcmp.ne.f32.partialorder %v201, 0.0
    %v203 = vsel %vm202, 0.0, -1e+09
    %vm204 = vcmask 64512
    %v205 = vsel %vm204, %v203, -1e+09
    %s206 = scalar_lea.vmem [#allocation5], 8
    %v207 = vld [vmem:[%s206] sm:$0xff]
    %vm208 = vcmp.ne.f32.partialorder %v207, 0.0
    %v209 = vsel %vm208, 0.0, -1e+09
    %211 = vrot.lane.b32.xlu0 %v209, 8
    %v212 = vpop.permute.xlu0 %211
    %v214 = vsel %vm204, -1e+09, %v212
    %v215 = vld [vmem:[%s4] sm:$0x1]
    %v217 = vlaneseq
    %v218 = vshrl.u32 %v217, 7
    %v219 = vsub.s32 0, %v218
    %v220 = vrot.slane %v215, %v219
    %vm222 = vcmp.ne.f32.partialorder %v220, 0.0
    %v223 = vsel %vm222, 0.0, -1e+09
    %v224 = vsel %vm204, %v223, -1e+09
    %s225 = scalar_lea.vmem %s4, 1
    %v226 = vld [vmem:[%s225] sm:$0x1]
    %v228 = vlaneseq
    %v229 = vshrl.u32 %v228, 7
    %v230 = vsub.s32 0, %v229
    %v231 = vrot.slane %v226, %v230
    %vm233 = vcmp.ne.f32.partialorder %v231, 0.0
    %v234 = vsel %vm233, 0.0, -1e+09
    %236 = vrot.lane.b32.xlu0 %v234, 8
    %v237 = vpop.permute.xlu0 %236
    %v239 = vsel %vm204, -1e+09, %v237
    %v240 = vld [vmem:[%s2] sm:$0xff]
    %v241 = vld [vmem:[%s0] sm:$0xff]
    %v242 = vld [vmem:[%s0 + $0x8] sm:$0xff]
    %v243 = vmul.f32 %v241, 5.656854
    %v244 = vmul.f32 %v242, 5.656854
    %v245 = vadd.f32 %v243, %v240
    %v246 = vadd.f32 %v244, %v240
    %v247 = vld [vmem:[#allocation2] sm:$0xff]
    %v248 = vld [vmem:[#allocation2 + $0x8] sm:$0xff]
    %v249 = vpack.c.bf16 %v248, %v247
    %v250 = vld [vmem:[%s13] sm:$0xff]
    %v251 = vld [vmem:[%s13 + $0x8] sm:$0xff]
    %v252 = vld [vmem:[%s13 + $0x10] sm:$0xff]
    %v253 = vld [vmem:[%s13 + $0x18] sm:$0xff]
    %v254 = vpack.c.bf16 %v251, %v250
    %v255 = vpack.c.bf16 %v253, %v252
    %v256 = vld [vmem:[#allocation11] sm:$0x1]
    %v258 = vlaneseq
    %v259 = vshrl.u32 %v258, 7
    %v260 = vsub.s32 0, %v259
    %v261 = vrot.slane %v256, %v260
    %vm263 = vcmask 261120
    %v265 = vsel %vm263, %v249, 0
    %267 = vmatprep.subr.bf16.mxu0 0
    %268 = vmatpush1.bf16.msra.mxu0 %v254
    %269 = vmatprep.subr.bf16.mxu0 0
    %270 = vmatpush1.bf16.msra.mxu0 %v255
    %271 = vmatprep.subr.bf16.mxu0 0
    %272 = vmatpush1.bf16.msra.mxu0 0
    %273 = vmatprep.subr.bf16.mxu0 0
    %274 = vmatpush1.bf16.msra.mxu0 0
    %275 = vmatprep.subr.bf16.mxu0 0
    %276 = vmatpush1.bf16.msra.mxu0 0
    %277 = vmatprep.subr.bf16.mxu0 0
    %278 = vmatpush1.bf16.msra.mxu0 0
    %279 = vmatprep.subr.bf16.mxu0 0
    %280 = vmatpush1.bf16.msra.mxu0 0
    %281 = vmatprep.subr.bf16.mxu0 0
    %282 = vmatpush1.bf16.msra.mxu0 0
    %283 = vmatprep.subr.bf16.mxu0 0
    %284 = vmatpush1.bf16.msra.mxu0 0
    %285 = vmatprep.subr.bf16.mxu0 0
    %286 = vmatpush1.bf16.msra.mxu0 0
    %287 = vmatprep.subr.bf16.mxu0 0
    %288 = vmatpush1.bf16.msra.mxu0 0
    %289 = vmatprep.subr.bf16.mxu0 0
    %290 = vmatpush1.bf16.msra.mxu0 0
    %291 = vmatprep.subr.bf16.mxu0 0
    %292 = vmatpush1.bf16.msra.mxu0 0
    %293 = vmatprep.subr.bf16.mxu0 0
    %294 = vmatpush1.bf16.msra.mxu0 0
    %295 = vmatprep.subr.bf16.mxu0 0
    %296 = vmatpush1.bf16.msra.mxu0 0
    %297 = vmatprep.subr.bf16.mxu0 0
    %298 = vmatpush1.bf16.msra.mxu0 0
    %299 = vmatprep.mubr.bf16.mxu0 0
    %300 = vmatmul.mubr.bf16.gmra.mrb[0].mxu0 %v265
    %v301 = vpop.f32.mrb[0].mxu0
    %v302 = vadd.f32 %v261, %v301
    %v303 = vpop.f32.mrb[0].mxu0
    %v304 = vpop.f32.mrb[0].mxu0
    %v305 = vadd.f32 %v261, %v304
    %v306 = vpop.f32.mrb[0].mxu0
    %307 = vdwg.mxu0
    %s308 = scalar_lea.vmem %s13, 32
    %v309 = vld [vmem:[%s308] sm:$0xff]
    %v310 = vld [vmem:[%s308 + $0x8] sm:$0xff]
    %v311 = vld [vmem:[%s308 + $0x10] sm:$0xff]
    %v312 = vld [vmem:[%s308 + $0x18] sm:$0xff]
    %v313 = vpack.c.bf16 %v310, %v309
    %v314 = vpack.c.bf16 %v312, %v311
    %s315 = scalar_lea.vmem [#allocation11], 1
    %v316 = vld [vmem:[%s315] sm:$0x1]
    %v318 = vlaneseq
    %v319 = vshrl.u32 %v318, 7
    %v320 = vsub.s32 0, %v319
    %v321 = vrot.slane %v316, %v320
    %323 = vmatprep.subr.bf16.mxu0 0
    %324 = vmatpush1.bf16.msra.mxu0 %v313
    %325 = vmatprep.subr.bf16.mxu0 0
    %326 = vmatpush1.bf16.msra.mxu0 %v314
    %327 = vmatprep.subr.bf16.mxu0 0
    %328 = vmatpush1.bf16.msra.mxu0 0
    %329 = vmatprep.subr.bf16.mxu0 0
    %330 = vmatpush1.bf16.msra.mxu0 0
    %331 = vmatprep.subr.bf16.mxu0 0
    %332 = vmatpush1.bf16.msra.mxu0 0
    %333 = vmatprep.subr.bf16.mxu0 0
    %334 = vmatpush1.bf16.msra.mxu0 0
    %335 = vmatprep.subr.bf16.mxu0 0
    %336 = vmatpush1.bf16.msra.mxu0 0
    %337 = vmatprep.subr.bf16.mxu0 0
    %338 = vmatpush1.bf16.msra.mxu0 0
    %339 = vmatprep.subr.bf16.mxu0 0
    %340 = vmatpush1.bf16.msra.mxu0 0
    %341 = vmatprep.subr.bf16.mxu0 0
    %342 = vmatpush1.bf16.msra.mxu0 0
    %343 = vmatprep.subr.bf16.mxu0 0
    %344 = vmatpush1.bf16.msra.mxu0 0
    %345 = vmatprep.subr.bf16.mxu0 0
    %346 = vmatpush1.bf16.msra.mxu0 0
    %347 = vmatprep.subr.bf16.mxu0 0
    %348 = vmatpush1.bf16.msra.mxu0 0
    %349 = vmatprep.subr.bf16.mxu0 0
    %350 = vmatpush1.bf16.msra.mxu0 0
    %351 = vmatprep.subr.bf16.mxu0 0
    %352 = vmatpush1.bf16.msra.mxu0 0
    %353 = vmatprep.subr.bf16.mxu0 0
    %354 = vmatpush1.bf16.msra.mxu0 0
    %355 = vmatprep.mubr.bf16.mxu0 0
    %356 = vmatmul.mubr.bf16.gmra.mrb[0].mxu0 %v265
    %v357 = vpop.f32.mrb[0].mxu0
    %v358 = vadd.f32 %v321, %v357
    %v359 = vpop.f32.mrb[0].mxu0
    %v360 = vpop.f32.mrb[0].mxu0
    %v361 = vadd.f32 %v321, %v360
    %v362 = vpop.f32.mrb[0].mxu0
    %363 = vdwg.mxu0
    %v364 = vld [vmem:[%s5] sm:$0x7]
    %v365 = vld [vmem:[%s6] sm:$0x7]
    %v366 = vsel %vm263, %v245, 0.0
    %367 = vadd.xlane.f32.xlu0 %v366
    %v368 = vpop.xlane.xlu0 %367
    %v369 = vsel %vm263, %v246, 0.0
    %370 = vadd.xlane.f32.xlu0 %v369
    %v371 = vpop.xlane.xlu0 %370
    %v372 = vrcp.pop 32.0
    %v373 = vmul.f32 %v368, %v372
    %v374 = vmul.f32 %v371, %v372
    %v375 = vsub.f32 %v245, %v373
    %v376 = vsub.f32 %v246, %v374
    %v377 = vmul.f32 %v375, %v375
    %v378 = vmul.f32 %v376, %v376
    %v379 = vsel %vm263, %v377, 0.0
    %380 = vadd.xlane.f32.xlu0 %v379
    %v381 = vpop.xlane.xlu0 %380
    %v382 = vsel %vm263, %v378, 0.0
    %383 = vadd.xlane.f32.xlu0 %v382
    %v384 = vpop.xlane.xlu0 %383
    %v385 = vmul.f32 %v381, 0.032258064
    %v386 = vmul.f32 %v384, 0.032258064
    %v387 = vrsqrt.pop %v385
    %v388 = vmul.f32 %v385, %v387
    %vm389 = vcmp.eq.f32.partialorder %v385, inf
    %v390 = vsel %vm389, %v385, %v388
    %vm391 = vcmp.eq.f32.partialorder %v385, 0.0
    %v392 = vand.u32 %v385, 2147483648
    %v393 = vsel %vm391, %v392, %v390
    %v394 = vrsqrt.pop %v386
    %v395 = vmul.f32 %v386, %v394
    %vm396 = vcmp.eq.f32.partialorder %v386, inf
    %v397 = vsel %vm396, %v386, %v395
    %vm398 = vcmp.eq.f32.partialorder %v386, 0.0
    %v399 = vand.u32 %v386, 2147483648
    %v400 = vsel %vm398, %v399, %v397
    %v401 = vadd.f32 %v393, 1e-06
    %v402 = vadd.f32 %v400, 1e-06
    %v403 = vrcp.pop %v401
    %v404 = vrcp.pop %v402
    %v405 = vlaneseq
    %v406 = vshrl.u32 %v405, 7
    %v407 = vsub.s32 0, %v406
    %v408 = vrot.slane %v364, %v407
    %v409 = vmul.f32 %v408, %v375
    %v410 = vmul.f32 %v408, %v376
    %v411 = vmul.f32 %v409, %v403
    %v412 = vmul.f32 %v410, %v404
    %v413 = vlaneseq
    %v414 = vshrl.u32 %v413, 7
    %v415 = vsub.s32 0, %v414
    %v416 = vrot.slane %v365, %v415
    %v417 = vadd.f32 %v411, %v416
    %v418 = vadd.f32 %v412, %v416
    %v419 = vpack.c.bf16 %v418, %v417
    %v420 = vld [vmem:[%s7] sm:$0xff]
    %v421 = vld [vmem:[%s7 + $0x8] sm:$0xff]
    %v422 = vld [vmem:[%s7 + $0x10] sm:$0xff]
    %v423 = vld [vmem:[%s7 + $0x18] sm:$0xff]
    %v424 = vpack.c.bf16 %v421, %v420
    %v425 = vpack.c.bf16 %v423, %v422
    %v426 = vld [vmem:[#allocation7] sm:$0x1]
    %v428 = vlaneseq
    %v429 = vshrl.u32 %v428, 7
    %v430 = vsub.s32 0, %v429
    %v431 = vrot.slane %v426, %v430
    %v434 = vsel %vm263, %v419, 0
    %436 = vmatprep.subr.bf16.mxu0 0
    %437 = vmatpush1.bf16.msra.mxu0 %v424
    %438 = vmatprep.subr.bf16.mxu0 0
    %439 = vmatpush1.bf16.msra.mxu0 %v425
    %440 = vmatprep.subr.bf16.mxu0 0
    %441 = vmatpush1.bf16.msra.mxu0 0
    %442 = vmatprep.subr.bf16.mxu0 0
    %443 = vmatpush1.bf16.msra.mxu0 0
    %444 = vmatprep.subr.bf16.mxu0 0
    %445 = vmatpush1.bf16.msra.mxu0 0
    %446 = vmatprep.subr.bf16.mxu0 0
    %447 = vmatpush1.bf16.msra.mxu0 0
    %448 = vmatprep.subr.bf16.mxu0 0
    %449 = vmatpush1.bf16.msra.mxu0 0
    %450 = vmatprep.subr.bf16.mxu0 0
    %451 = vmatpush1.bf16.msra.mxu0 0
    %452 = vmatprep.subr.bf16.mxu0 0
    %453 = vmatpush1.bf16.msra.mxu0 0
    %454 = vmatprep.subr.bf16.mxu0 0
    %455 = vmatpush1.bf16.msra.mxu0 0
    %456 = vmatprep.subr.bf16.mxu0 0
    %457 = vmatpush1.bf16.msra.mxu0 0
    %458 = vmatprep.subr.bf16.mxu0 0
    %459 = vmatpush1.bf16.msra.mxu0 0
    %460 = vmatprep.subr.bf16.mxu0 0
    %461 = vmatpush1.bf16.msra.mxu0 0
    %462 = vmatprep.subr.bf16.mxu0 0
    %463 = vmatpush1.bf16.msra.mxu0 0
    %464 = vmatprep.subr.bf16.mxu0 0
    %465 = vmatpush1.bf16.msra.mxu0 0
    %466 = vmatprep.subr.bf16.mxu0 0
    %467 = vmatpush1.bf16.msra.mxu0 0
    %468 = vmatprep.mubr.bf16.mxu0 0
    %469 = vmatmul.mubr.bf16.gmra.mrb[0].mxu0 %v434
    %v470 = vpop.f32.mrb[0].mxu0
    %v471 = vadd.f32 %v431, %v470
    %v472 = vpop.f32.mrb[0].mxu0
    %v473 = vpop.f32.mrb[0].mxu0
    %v474 = vadd.f32 %v431, %v473
    %v475 = vpop.f32.mrb[0].mxu0
    %476 = vdwg.mxu0
    %v477 = vld [vmem:[%s9] sm:$0xff]
    %v478 = vld [vmem:[%s9 + $0x8] sm:$0xff]
    %v479 = vld [vmem:[%s9 + $0x10] sm:$0xff]
    %v480 = vld [vmem:[%s9 + $0x18] sm:$0xff]
    %v481 = vld [vmem:[#allocation8] sm:$0x1]
    %v482 = vpack.c.bf16 %v474, %v471
    %v483 = vpack.c.bf16 %v478, %v477
    %v484 = vpack.c.bf16 %v480, %v479
    %486 = vrot.lane.b32.xlu0 %v482, 96
    %v487 = vpop.permute.xlu0 %486
    %v489 = vsel %vm204, %v482, 0
    %v492 = vsel %vm204, %v487, 0
    %494 = vmatprep.subr.bf16.mxu0 0
    %495 = vmatpush1.bf16.xpose.msra.mxu0 %v492
    %496 = vmatprep.subr.bf16.mxu0 0
    %497 = vmatpush1.bf16.xpose.msra.mxu0 0
    %498 = vmatprep.subr.bf16.mxu0 0
    %499 = vmatpush1.bf16.xpose.msra.mxu0 0
    %500 = vmatprep.subr.bf16.mxu0 0
    %501 = vmatpush1.bf16.xpose.msra.mxu0 0
    %502 = vmatprep.subr.bf16.mxu0 0
    %503 = vmatpush1.bf16.xpose.msra.mxu0 0
    %504 = vmatprep.subr.bf16.mxu0 0
    %505 = vmatpush1.bf16.xpose.msra.mxu0 0
    %506 = vmatprep.subr.bf16.mxu0 0
    %507 = vmatpush1.bf16.xpose.msra.mxu0 0
    %508 = vmatprep.subr.bf16.mxu0 0
    %509 = vmatpush1.bf16.xpose.msra.mxu0 0
    %510 = vmatprep.subr.bf16.mxu0 0
    %511 = vmatpush1.bf16.xpose.msra.mxu0 0
    %512 = vmatprep.subr.bf16.mxu0 0
    %513 = vmatpush1.bf16.xpose.msra.mxu0 0
    %514 = vmatprep.subr.bf16.mxu0 0
    %515 = vmatpush1.bf16.xpose.msra.mxu0 0
    %516 = vmatprep.subr.bf16.mxu0 0
    %517 = vmatpush1.bf16.xpose.msra.mxu0 0
    %518 = vmatprep.subr.bf16.mxu0 0
    %519 = vmatpush1.bf16.xpose.msra.mxu0 0
    %520 = vmatprep.subr.bf16.mxu0 0
    %521 = vmatpush1.bf16.xpose.msra.mxu0 0
    %522 = vmatprep.subr.bf16.mxu0 0
    %523 = vmatpush1.bf16.xpose.msra.mxu0 0
    %524 = vmatprep.subr.bf16.mxu0 0
    %525 = vmatpush1.bf16.xpose.msra.mxu0 0
    %526 = vmatprep.mubr.bf16.mxu0 0
    %527 = vmatmul.mubr.bf16.gmra.mrb[0].mxu0 %v489
    %v528 = vpop.f32.mrb[0].mxu0
    %v529 = vadd.f32 0.0, %v528
    %v530 = vpop.f32.mrb[0].mxu0
    %v531 = vpop.f32.mrb[0].mxu0
    %v532 = vadd.f32 0.0, %v531
    %v533 = vpop.f32.mrb[0].mxu0
    %534 = vdwg.mxu0
    %v535 = vmul.f32 %v529, 0.35355338
    %v536 = vmul.f32 %v532, 0.35355338
    %v537 = vadd.f32 %v535, %v205
    %v538 = vadd.f32 %v536, %v214
    %vm539 = vcmask 130048
    %v540 = vsel %vm539, %v537, -inf
    %541 = vmax.xlane.f32.xlu0 %v540
    %v542 = vpop.xlane.xlu0 %541
    %v543 = vsel %vm539, %v538, -inf
    %544 = vmax.xlane.f32.xlu0 %v543
    %v545 = vpop.xlane.xlu0 %544
    %v546 = vsub.f32 %v537, %v542
    %v547 = vsub.f32 %v538, %v545
    %v548 = vmul.f32 %v546, 1.442695
    %v549 = vpow.pop %v548
    %v550 = vmul.f32 %v547, 1.442695
    %v551 = vpow.pop %v550
    %v552 = vsel %vm539, %v549, 0.0
    %553 = vadd.xlane.f32.xlu0 %v552
    %v554 = vpop.xlane.xlu0 %553
    %v555 = vsel %vm539, %v551, 0.0
    %556 = vadd.xlane.f32.xlu0 %v555
    %v557 = vpop.xlane.xlu0 %556
    %v558 = vrcp.pop %v554
    %v559 = vrcp.pop %v557
    %v560 = vmul.f32 %v549, %v558
    %v561 = vmul.f32 %v551, %v559
    %v562 = vpack.c.bf16 %v561, %v560
    %563 = vrot.lane.b32.xlu0 %v482, 64
    %v564 = vpop.permute.xlu0 %563
    %v567 = vsel %vm539, %v562, 0
    %569 = vmatprep.subr.bf16.mxu0 0
    %570 = vmatpush1.bf16.msra.mxu0 %v564
    %571 = vmatprep.subr.bf16.mxu0 0
    %572 = vmatpush1.bf16.msra.mxu0 0
    %573 = vmatprep.subr.bf16.mxu0 0
    %574 = vmatpush1.bf16.msra.mxu0 0
    %575 = vmatprep.subr.bf16.mxu0 0
    %576 = vmatpush1.bf16.msra.mxu0 0
    %577 = vmatprep.subr.bf16.mxu0 0
    %578 = vmatpush1.bf16.msra.mxu0 0
    %579 = vmatprep.subr.bf16.mxu0 0
    %580 = vmatpush1.bf16.msra.mxu0 0
    %581 = vmatprep.subr.bf16.mxu0 0
    %582 = vmatpush1.bf16.msra.mxu0 0
    %583 = vmatprep.subr.bf16.mxu0 0
    %584 = vmatpush1.bf16.msra.mxu0 0
    %585 = vmatprep.subr.bf16.mxu0 0
    %586 = vmatpush1.bf16.msra.mxu0 0
    %587 = vmatprep.subr.bf16.mxu0 0
    %588 = vmatpush1.bf16.msra.mxu0 0
    %589 = vmatprep.subr.bf16.mxu0 0
    %590 = vmatpush1.bf16.msra.mxu0 0
    %591 = vmatprep.subr.bf16.mxu0 0
    %592 = vmatpush1.bf16.msra.mxu0 0
    %593 = vmatprep.subr.bf16.mxu0 0
    %594 = vmatpush1.bf16.msra.mxu0 0
    %595 = vmatprep.subr.bf16.mxu0 0
    %596 = vmatpush1.bf16.msra.mxu0 0
    %597 = vmatprep.subr.bf16.mxu0 0
    %598 = vmatpush1.bf16.msra.mxu0 0
    %599 = vmatprep.subr.bf16.mxu0 0
    %600 = vmatpush1.bf16.msra.mxu0 0
    %601 = vmatprep.mubr.bf16.mxu0 0
    %602 = vmatmul.mubr.bf16.gmra.mrb[0].mxu0 %v567
    %v603 = vpop.f32.mrb[0].mxu0
    %v604 = vadd.f32 0.0, %v603
    %v605 = vpop.f32.mrb[0].mxu0
    %v606 = vpop.f32.mrb[0].mxu0
    %v607 = vadd.f32 0.0, %v606
    %v608 = vpop.f32.mrb[0].mxu0
    %609 = vdwg.mxu0
    %v610 = vpack.c.bf16 %v607, %v604
    %611 = vrot.lane.b32.xlu0 %v482, 120
    %v612 = vpop.permute.xlu0 %611
    %613 = vrot.lane.b32.xlu0 %v482, 88
    %v614 = vpop.permute.xlu0 %613
    %v616 = vsel %vm204, %v612, 0
    %v619 = vsel %vm204, %v614, 0
    %621 = vmatprep.subr.bf16.mxu0 0
    %622 = vmatpush1.bf16.xpose.msra.mxu0 %v619
    %623 = vmatprep.subr.bf16.mxu0 0
    %624 = vmatpush1.bf16.xpose.msra.mxu0 0
    %625 = vmatprep.subr.bf16.mxu0 0
    %626 = vmatpush1.bf16.xpose.msra.mxu0 0
    %627 = vmatprep.subr.bf16.mxu0 0
    %628 = vmatpush1.bf16.xpose.msra.mxu0 0
    %629 = vmatprep.subr.bf16.mxu0 0
    %630 = vmatpush1.bf16.xpose.msra.mxu0 0
    %631 = vmatprep.subr.bf16.mxu0 0
    %632 = vmatpush1.bf16.xpose.msra.mxu0 0
    %633 = vmatprep.subr.bf16.mxu0 0
    %634 = vmatpush1.bf16.xpose.msra.mxu0 0
    %635 = vmatprep.subr.bf16.mxu0 0
    %636 = vmatpush1.bf16.xpose.msra.mxu0 0
    %637 = vmatprep.subr.bf16.mxu0 0
    %638 = vmatpush1.bf16.xpose.msra.mxu0 0
    %639 = vmatprep.subr.bf16.mxu0 0
    %640 = vmatpush1.bf16.xpose.msra.mxu0 0
    %641 = vmatprep.subr.bf16.mxu0 0
    %642 = vmatpush1.bf16.xpose.msra.mxu0 0
    %643 = vmatprep.subr.bf16.mxu0 0
    %644 = vmatpush1.bf16.xpose.msra.mxu0 0
    %645 = vmatprep.subr.bf16.mxu0 0
    %646 = vmatpush1.bf16.xpose.msra.mxu0 0
    %647 = vmatprep.subr.bf16.mxu0 0
    %648 = vmatpush1.bf16.xpose.msra.mxu0 0
    %649 = vmatprep.subr.bf16.mxu0 0
    %650 = vmatpush1.bf16.xpose.msra.mxu0 0
    %651 = vmatprep.subr.bf16.mxu0 0
    %652 = vmatpush1.bf16.xpose.msra.mxu0 0
    %653 = vmatprep.mubr.bf16.mxu0 0
    %654 = vmatmul.mubr.bf16.gmra.mrb[0].mxu0 %v616
    %v655 = vpop.f32.mrb[0].mxu0
    %v656 = vadd.f32 0.0, %v655
    %v657 = vpop.f32.mrb[0].mxu0
    %v658 = vpop.f32.mrb[0].mxu0
    %v659 = vadd.f32 0.0, %v658
    %v660 = vpop.f32.mrb[0].mxu0
    %661 = vdwg.mxu0
    %v662 = vmul.f32 %v656, 0.35355338
    %v663 = vmul.f32 %v659, 0.35355338
    %v664 = vadd.f32 %v662, %v205
    %v665 = vadd.f32 %v663, %v214
    %v666 = vsel %vm539, %v664, -inf
    %667 = vmax.xlane.f32.xlu0 %v666
    %v668 = vpop.xlane.xlu0 %667
    %v669 = vsel %vm539, %v665, -inf
    %670 = vmax.xlane.f32.xlu0 %v669
    %v671 = vpop.xlane.xlu0 %670
    %v672 = vsub.f32 %v664, %v668
    %v673 = vsub.f32 %v665, %v671
    %v674 = vmul.f32 %v672, 1.442695
    %v675 = vpow.pop %v674
    %v676 = vmul.f32 %v673, 1.442695
    %v677 = vpow.pop %v676
    %v678 = vsel %vm539, %v675, 0.0
    %679 = vadd.xlane.f32.xlu0 %v678
    %v680 = vpop.xlane.xlu0 %679
    %v681 = vsel %vm539, %v677, 0.0
    %682 = vadd.xlane.f32.xlu0 %v681
    %v683 = vpop.xlane.xlu0 %682
    %v684 = vrcp.pop %v680
    %v685 = vrcp.pop %v683
    %v686 = vmul.f32 %v675, %v684
    %v687 = vmul.f32 %v677, %v685
    %v688 = vpack.c.bf16 %v687, %v686
    %689 = vrot.lane.b32.xlu0 %v482, 56
    %v690 = vpop.permute.xlu0 %689
    %v693 = vsel %vm539, %v688, 0
    %695 = vmatprep.subr.bf16.mxu0 0
    %696 = vmatpush1.bf16.msra.mxu0 %v690
    %697 = vmatprep.subr.bf16.mxu0 0
    %698 = vmatpush1.bf16.msra.mxu0 0
    %699 = vmatprep.subr.bf16.mxu0 0
    %700 = vmatpush1.bf16.msra.mxu0 0
    %701 = vmatprep.subr.bf16.mxu0 0
    %702 = vmatpush1.bf16.msra.mxu0 0
    %703 = vmatprep.subr.bf16.mxu0 0
    %704 = vmatpush1.bf16.msra.mxu0 0
    %705 = vmatprep.subr.bf16.mxu0 0
    %706 = vmatpush1.bf16.msra.mxu0 0
    %707 = vmatprep.subr.bf16.mxu0 0
    %708 = vmatpush1.bf16.msra.mxu0 0
    %709 = vmatprep.subr.bf16.mxu0 0
    %710 = vmatpush1.bf16.msra.mxu0 0
    %711 = vmatprep.subr.bf16.mxu0 0
    %712 = vmatpush1.bf16.msra.mxu0 0
    %713 = vmatprep.subr.bf16.mxu0 0
    %714 = vmatpush1.bf16.msra.mxu0 0
    %715 = vmatprep.subr.bf16.mxu0 0
    %716 = vmatpush1.bf16.msra.mxu0 0
    %717 = vmatprep.subr.bf16.mxu0 0
    %718 = vmatpush1.bf16.msra.mxu0 0
    %719 = vmatprep.subr.bf16.mxu0 0
    %720 = vmatpush1.bf16.msra.mxu0 0
    %721 = vmatprep.subr.bf16.mxu0 0
    %722 = vmatpush1.bf16.msra.mxu0 0
    %723 = vmatprep.subr.bf16.mxu0 0
    %724 = vmatpush1.bf16.msra.mxu0 0
    %725 = vmatprep.subr.bf16.mxu0 0
    %726 = vmatpush1.bf16.msra.mxu0 0
    %727 = vmatprep.mubr.bf16.mxu0 0
    %728 = vmatmul.mubr.bf16.gmra.mrb[0].mxu0 %v693
    %v729 = vpop.f32.mrb[0].mxu0
    %v730 = vadd.f32 0.0, %v729
    %v731 = vpop.f32.mrb[0].mxu0
    %v732 = vpop.f32.mrb[0].mxu0
    %v733 = vadd.f32 0.0, %v732
    %v734 = vpop.f32.mrb[0].mxu0
    %735 = vdwg.mxu0
    %v736 = vpack.c.bf16 %v733, %v730
    %v738 = vrot.slane %v483, 4
    %v740 = vsel %vm204, %v736, 0
    %vm742 = vcmask 1043456
    %v744 = vsel %vm742, %v738, 0
    %746 = vmatprep.subr.bf16.mxu0 0
    %747 = vmatpush1.bf16.msra.mxu0 %v744
    %748 = vmatprep.subr.bf16.mxu0 0
    %749 = vmatpush1.bf16.msra.mxu0 0
    %750 = vmatprep.subr.bf16.mxu0 0
    %751 = vmatpush1.bf16.msra.mxu0 0
    %752 = vmatprep.subr.bf16.mxu0 0
    %753 = vmatpush1.bf16.msra.mxu0 0
    %754 = vmatprep.subr.bf16.mxu0 0
    %755 = vmatpush1.bf16.msra.mxu0 0
    %756 = vmatprep.subr.bf16.mxu0 0
    %757 = vmatpush1.bf16.msra.mxu0 0
    %758 = vmatprep.subr.bf16.mxu0 0
    %759 = vmatpush1.bf16.msra.mxu0 0
    %760 = vmatprep.subr.bf16.mxu0 0
    %761 = vmatpush1.bf16.msra.mxu0 0
    %762 = vmatprep.subr.bf16.mxu0 0
    %763 = vmatpush1.bf16.msra.mxu0 0
    %764 = vmatprep.subr.bf16.mxu0 0
    %765 = vmatpush1.bf16.msra.mxu0 0
    %766 = vmatprep.subr.bf16.mxu0 0
    %767 = vmatpush1.bf16.msra.mxu0 0
    %768 = vmatprep.subr.bf16.mxu0 0
    %769 = vmatpush1.bf16.msra.mxu0 0
    %770 = vmatprep.subr.bf16.mxu0 0
    %771 = vmatpush1.bf16.msra.mxu0 0
    %772 = vmatprep.subr.bf16.mxu0 0
    %773 = vmatpush1.bf16.msra.mxu0 0
    %774 = vmatprep.subr.bf16.mxu0 0
    %775 = vmatpush1.bf16.msra.mxu0 0
    %776 = vmatprep.subr.bf16.mxu0 0
    %777 = vmatpush1.bf16.msra.mxu0 0
    %778 = vmatprep.mubr.bf16.mxu0 0
    %779 = vmatmul.mubr.bf16.gmra.mrb[0].mxu0 %v740
    %v780 = vpop.f32.mrb[0].mxu0
    %v781 = vadd.f32 0.0, %v780
    %v782 = vpop.f32.mrb[0].mxu0
    %v783 = vpop.f32.mrb[0].mxu0
    %v784 = vadd.f32 0.0, %v783
    %v785 = vpop.f32.mrb[0].mxu0
    %786 = vdwg.mxu0
    %v788 = vsel %vm204, %v610, 0
    %v791 = vsel %vm742, %v483, 0
    %793 = vmatprep.subr.bf16.mxu0 0
    %794 = vmatpush1.bf16.msra.mxu0 %v791
    %795 = vmatprep.subr.bf16.mxu0 0
    %796 = vmatpush1.bf16.msra.mxu0 0
    %797 = vmatprep.subr.bf16.mxu0 0
    %798 = vmatpush1.bf16.msra.mxu0 0
    %799 = vmatprep.subr.bf16.mxu0 0
    %800 = vmatpush1.bf16.msra.mxu0 0
    %801 = vmatprep.subr.bf16.mxu0 0
    %802 = vmatpush1.bf16.msra.mxu0 0
    %803 = vmatprep.subr.bf16.mxu0 0
    %804 = vmatpush1.bf16.msra.mxu0 0
    %805 = vmatprep.subr.bf16.mxu0 0
    %806 = vmatpush1.bf16.msra.mxu0 0
    %807 = vmatprep.subr.bf16.mxu0 0
    %808 = vmatpush1.bf16.msra.mxu0 0
    %809 = vmatprep.subr.bf16.mxu0 0
    %810 = vmatpush1.bf16.msra.mxu0 0
    %811 = vmatprep.subr.bf16.mxu0 0
    %812 = vmatpush1.bf16.msra.mxu0 0
    %813 = vmatprep.subr.bf16.mxu0 0
    %814 = vmatpush1.bf16.msra.mxu0 0
    %815 = vmatprep.subr.bf16.mxu0 0
    %816 = vmatpush1.bf16.msra.mxu0 0
    %817 = vmatprep.subr.bf16.mxu0 0
    %818 = vmatpush1.bf16.msra.mxu0 0
    %819 = vmatprep.subr.bf16.mxu0 0
    %820 = vmatpush1.bf16.msra.mxu0 0
    %821 = vmatprep.subr.bf16.mxu0 0
    %822 = vmatpush1.bf16.msra.mxu0 0
    %823 = vmatprep.subr.bf16.mxu0 0
    %824 = vmatpush1.bf16.msra.mxu0 0
    %825 = vmatprep.mubr.bf16.mxu0 0
    %826 = vmatmul.mubr.bf16.gmra.mrb[0].mxu0 %v788
    %v827 = vpop.f32.mrb[0].mxu0
    %v828 = vadd.f32 %v781, %v827
    %v829 = vpop.f32.mrb[0].mxu0
    %v830 = vpop.f32.mrb[0].mxu0
    %v831 = vadd.f32 %v784, %v830
    %v832 = vpop.f32.mrb[0].mxu0
    %833 = vdwg.mxu0
    %834 = vrot.lane.b32.xlu0 %v482, 112
    %v835 = vpop.permute.xlu0 %834
    %836 = vrot.lane.b32.xlu0 %v482, 80
    %v837 = vpop.permute.xlu0 %836
    %v839 = vsel %vm204, %v835, 0
    %v842 = vsel %vm204, %v837, 0
    %844 = vmatprep.subr.bf16.mxu0 0
    %845 = vmatpush1.bf16.xpose.msra.mxu0 %v842
    %846 = vmatprep.subr.bf16.mxu0 0
    %847 = vmatpush1.bf16.xpose.msra.mxu0 0
    %848 = vmatprep.subr.bf16.mxu0 0
    %849 = vmatpush1.bf16.xpose.msra.mxu0 0
    %850 = vmatprep.subr.bf16.mxu0 0
    %851 = vmatpush1.bf16.xpose.msra.mxu0 0
    %852 = vmatprep.subr.bf16.mxu0 0
    %853 = vmatpush1.bf16.xpose.msra.mxu0 0
    %854 = vmatprep.subr.bf16.mxu0 0
    %855 = vmatpush1.bf16.xpose.msra.mxu0 0
    %856 = vmatprep.subr.bf16.mxu0 0
    %857 = vmatpush1.bf16.xpose.msra.mxu0 0
    %858 = vmatprep.subr.bf16.mxu0 0
    %859 = vmatpush1.bf16.xpose.msra.mxu0 0
    %860 = vmatprep.subr.bf16.mxu0 0
    %861 = vmatpush1.bf16.xpose.msra.mxu0 0
    %862 = vmatprep.subr.bf16.mxu0 0
    %863 = vmatpush1.bf16.xpose.msra.mxu0 0
    %864 = vmatprep.subr.bf16.mxu0 0
    %865 = vmatpush1.bf16.xpose.msra.mxu0 0
    %866 = vmatprep.subr.bf16.mxu0 0
    %867 = vmatpush1.bf16.xpose.msra.mxu0 0
    %868 = vmatprep.subr.bf16.mxu0 0
    %869 = vmatpush1.bf16.xpose.msra.mxu0 0
    %870 = vmatprep.subr.bf16.mxu0 0
    %871 = vmatpush1.bf16.xpose.msra.mxu0 0
    %872 = vmatprep.subr.bf16.mxu0 0
    %873 = vmatpush1.bf16.xpose.msra.mxu0 0
    %874 = vmatprep.subr.bf16.mxu0 0
    %875 = vmatpush1.bf16.xpose.msra.mxu0 0
    %876 = vmatprep.mubr.bf16.mxu0 0
    %877 = vmatmul.mubr.bf16.gmra.mrb[0].mxu0 %v839
    %v878 = vpop.f32.mrb[0].mxu0
    %v879 = vadd.f32 0.0, %v878
    %v880 = vpop.f32.mrb[0].mxu0
    %v881 = vpop.f32.mrb[0].mxu0
    %v882 = vadd.f32 0.0, %v881
    %v883 = vpop.f32.mrb[0].mxu0
    %884 = vdwg.mxu0
    %v885 = vmul.f32 %v879, 0.35355338
    %v886 = vmul.f32 %v882, 0.35355338
    %v887 = vadd.f32 %v885, %v205
    %v888 = vadd.f32 %v886, %v214
    %v889 = vsel %vm539, %v887, -inf
    %890 = vmax.xlane.f32.xlu0 %v889
    %v891 = vpop.xlane.xlu0 %890
    %v892 = vsel %vm539, %v888, -inf
    %893 = vmax.xlane.f32.xlu0 %v892
    %v894 = vpop.xlane.xlu0 %893
    %v895 = vsub.f32 %v887, %v891
    %v896 = vsub.f32 %v888, %v894
    %v897 = vmul.f32 %v895, 1.442695
    %v898 = vpow.pop %v897
    %v899 = vmul.f32 %v896, 1.442695
    %v900 = vpow.pop %v899
    %v901 = vsel %vm539, %v898, 0.0
    %902 = vadd.xlane.f32.xlu0 %v901
    %v903 = vpop.xlane.xlu0 %902
    %v904 = vsel %vm539, %v900, 0.0
    %905 = vadd.xlane.f32.xlu0 %v904
    %v906 = vpop.xlane.xlu0 %905
    %v907 = vrcp.pop %v903
    %v908 = vrcp.pop %v906
    %v909 = vmul.f32 %v898, %v907
    %v910 = vmul.f32 %v900, %v908
    %v911 = vpack.c.bf16 %v910, %v909
    %912 = vrot.lane.b32.xlu0 %v482, 48
    %v913 = vpop.permute.xlu0 %912
    %v916 = vsel %vm539, %v911, 0
    %918 = vmatprep.subr.bf16.mxu0 0
    %919 = vmatpush1.bf16.msra.mxu0 %v913
    %920 = vmatprep.subr.bf16.mxu0 0
    %921 = vmatpush1.bf16.msra.mxu0 0
    %922 = vmatprep.subr.bf16.mxu0 0
    %923 = vmatpush1.bf16.msra.mxu0 0
    %924 = vmatprep.subr.bf16.mxu0 0
    %925 = vmatpush1.bf16.msra.mxu0 0
    %926 = vmatprep.subr.bf16.mxu0 0
    %927 = vmatpush1.bf16.msra.mxu0 0
    %928 = vmatprep.subr.bf16.mxu0 0
    %929 = vmatpush1.bf16.msra.mxu0 0
    %930 = vmatprep.subr.bf16.mxu0 0
    %931 = vmatpush1.bf16.msra.mxu0 0
    %932 = vmatprep.subr.bf16.mxu0 0
    %933 = vmatpush1.bf16.msra.mxu0 0
    %934 = vmatprep.subr.bf16.mxu0 0
    %935 = vmatpush1.bf16.msra.mxu0 0
    %936 = vmatprep.subr.bf16.mxu0 0
    %937 = vmatpush1.bf16.msra.mxu0 0
    %938 = vmatprep.subr.bf16.mxu0 0
    %939 = vmatpush1.bf16.msra.mxu0 0
    %940 = vmatprep.subr.bf16.mxu0 0
    %941 = vmatpush1.bf16.msra.mxu0 0
    %942 = vmatprep.subr.bf16.mxu0 0
    %943 = vmatpush1.bf16.msra.mxu0 0
    %944 = vmatprep.subr.bf16.mxu0 0
    %945 = vmatpush1.bf16.msra.mxu0 0
    %946 = vmatprep.subr.bf16.mxu0 0
    %947 = vmatpush1.bf16.msra.mxu0 0
    %948 = vmatprep.subr.bf16.mxu0 0
    %949 = vmatpush1.bf16.msra.mxu0 0
    %950 = vmatprep.mubr.bf16.mxu0 0
    %951 = vmatmul.mubr.bf16.gmra.mrb[0].mxu0 %v916
    %v952 = vpop.f32.mrb[0].mxu0
    %v953 = vadd.f32 0.0, %v952
    %v954 = vpop.f32.mrb[0].mxu0
    %v955 = vpop.f32.mrb[0].mxu0
    %v956 = vadd.f32 0.0, %v955
    %v957 = vpop.f32.mrb[0].mxu0
    %958 = vdwg.mxu0
    %v959 = vpack.c.bf16 %v956, %v953
    %v961 = vsel %vm204, %v959, 0
    %v964 = vsel %vm742, %v484, 0
    %966 = vmatprep.subr.bf16.mxu0 0
    %967 = vmatpush1.bf16.msra.mxu0 %v964
    %968 = vmatprep.subr.bf16.mxu0 0
    %969 = vmatpush1.bf16.msra.mxu0 0
    %970 = vmatprep.subr.bf16.mxu0 0
    %971 = vmatpush1.bf16.msra.mxu0 0
    %972 = vmatprep.subr.bf16.mxu0 0
    %973 = vmatpush1.bf16.msra.mxu0 0
    %974 = vmatprep.subr.bf16.mxu0 0
    %975 = vmatpush1.bf16.msra.mxu0 0
    %976 = vmatprep.subr.bf16.mxu0 0
    %977 = vmatpush1.bf16.msra.mxu0 0
    %978 = vmatprep.subr.bf16.mxu0 0
    %979 = vmatpush1.bf16.msra.mxu0 0
    %980 = vmatprep.subr.bf16.mxu0 0
    %981 = vmatpush1.bf16.msra.mxu0 0
    %982 = vmatprep.subr.bf16.mxu0 0
    %983 = vmatpush1.bf16.msra.mxu0 0
    %984 = vmatprep.subr.bf16.mxu0 0
    %985 = vmatpush1.bf16.msra.mxu0 0
    %986 = vmatprep.subr.bf16.mxu0 0
    %987 = vmatpush1.bf16.msra.mxu0 0
    %988 = vmatprep.subr.bf16.mxu0 0
    %989 = vmatpush1.bf16.msra.mxu0 0
    %990 = vmatprep.subr.bf16.mxu0 0
    %991 = vmatpush1.bf16.msra.mxu0 0
    %992 = vmatprep.subr.bf16.mxu0 0
    %993 = vmatpush1.bf16.msra.mxu0 0
    %994 = vmatprep.subr.bf16.mxu0 0
    %995 = vmatpush1.bf16.msra.mxu0 0
    %996 = vmatprep.subr.bf16.mxu0 0
    %997 = vmatpush1.bf16.msra.mxu0 0
    %998 = vmatprep.mubr.bf16.mxu0 0
    %999 = vmatmul.mubr.bf16.gmra.mrb[0].mxu0 %v961
    %v1000 = vpop.f32.mrb[0].mxu0
    %v1001 = vadd.f32 0.0, %v1000
    %v1002 = vpop.f32.mrb[0].mxu0
    %v1003 = vpop.f32.mrb[0].mxu0
    %v1004 = vadd.f32 0.0, %v1003
    %v1005 = vpop.f32.mrb[0].mxu0
    %1006 = vdwg.mxu0
    %v1007 = vadd.f32 %v828, %v1001
    %v1008 = vadd.f32 %v831, %v1004
    %1009 = vrot.lane.b32.xlu0 %v482, 104
    %v1010 = vpop.permute.xlu0 %1009
    %1011 = vrot.lane.b32.xlu0 %v482, 72
    %v1012 = vpop.permute.xlu0 %1011
    %v1014 = vsel %vm204, %v1010, 0
    %v1017 = vsel %vm204, %v1012, 0
    %1019 = vmatprep.subr.bf16.mxu0 0
    %1020 = vmatpush1.bf16.xpose.msra.mxu0 %v1017
    %1021 = vmatprep.subr.bf16.mxu0 0
    %1022 = vmatpush1.bf16.xpose.msra.mxu0 0
    %1023 = vmatprep.subr.bf16.mxu0 0
    %1024 = vmatpush1.bf16.xpose.msra.mxu0 0
    %1025 = vmatprep.subr.bf16.mxu0 0
    %1026 = vmatpush1.bf16.xpose.msra.mxu0 0
    %1027 = vmatprep.subr.bf16.mxu0 0
    %1028 = vmatpush1.bf16.xpose.msra.mxu0 0
    %1029 = vmatprep.subr.bf16.mxu0 0
    %1030 = vmatpush1.bf16.xpose.msra.mxu0 0
    %1031 = vmatprep.subr.bf16.mxu0 0
    %1032 = vmatpush1.bf16.xpose.msra.mxu0 0
    %1033 = vmatprep.subr.bf16.mxu0 0
    %1034 = vmatpush1.bf16.xpose.msra.mxu0 0
    %1035 = vmatprep.subr.bf16.mxu0 0
    %1036 = vmatpush1.bf16.xpose.msra.mxu0 0
    %1037 = vmatprep.subr.bf16.mxu0 0
    %1038 = vmatpush1.bf16.xpose.msra.mxu0 0
    %1039 = vmatprep.subr.bf16.mxu0 0
    %1040 = vmatpush1.bf16.xpose.msra.mxu0 0
    %1041 = vmatprep.subr.bf16.mxu0 0
    %1042 = vmatpush1.bf16.xpose.msra.mxu0 0
    %1043 = vmatprep.subr.bf16.mxu0 0
    %1044 = vmatpush1.bf16.xpose.msra.mxu0 0
    %1045 = vmatprep.subr.bf16.mxu0 0
    %1046 = vmatpush1.bf16.xpose.msra.mxu0 0
    %1047 = vmatprep.subr.bf16.mxu0 0
    %1048 = vmatpush1.bf16.xpose.msra.mxu0 0
    %1049 = vmatprep.subr.bf16.mxu0 0
    %1050 = vmatpush1.bf16.xpose.msra.mxu0 0
    %1051 = vmatprep.mubr.bf16.mxu0 0
    %1052 = vmatmul.mubr.bf16.gmra.mrb[0].mxu0 %v1014
    %v1053 = vpop.f32.mrb[0].mxu0
    %v1054 = vadd.f32 0.0, %v1053
    %v1055 = vpop.f32.mrb[0].mxu0
    %v1056 = vpop.f32.mrb[0].mxu0
    %v1057 = vadd.f32 0.0, %v1056
    %v1058 = vpop.f32.mrb[0].mxu0
    %1059 = vdwg.mxu0
    %v1060 = vmul.f32 %v1054, 0.35355338
    %v1061 = vmul.f32 %v1057, 0.35355338
    %v1062 = vadd.f32 %v1060, %v205
    %v1063 = vadd.f32 %v1061, %v214
    %v1064 = vsel %vm539, %v1062, -inf
    %1065 = vmax.xlane.f32.xlu0 %v1064
    %v1066 = vpop.xlane.xlu0 %1065
    %v1067 = vsel %vm539, %v1063, -inf
    %1068 = vmax.xlane.f32.xlu0 %v1067
    %v1069 = vpop.xlane.xlu0 %1068
    %v1070 = vsub.f32 %v1062, %v1066
    %v1071 = vsub.f32 %v1063, %v1069
    %v1072 = vmul.f32 %v1070, 1.442695
    %v1073 = vpow.pop %v1072
    %v1074 = vmul.f32 %v1071, 1.442695
    %v1075 = vpow.pop %v1074
    %v1076 = vsel %vm539, %v1073, 0.0
    %1077 = vadd.xlane.f32.xlu0 %v1076
    %v1078 = vpop.xlane.xlu0 %1077
    %v1079 = vsel %vm539, %v1075, 0.0
    %1080 = vadd.xlane.f32.xlu0 %v1079
    %v1081 = vpop.xlane.xlu0 %1080
    %v1082 = vrcp.pop %v1078
    %v1083 = vrcp.pop %v1081
    %v1084 = vmul.f32 %v1073, %v1082
    %v1085 = vmul.f32 %v1075, %v1083
    %v1086 = vpack.c.bf16 %v1085, %v1084
    %1087 = vrot.lane.b32.xlu0 %v482, 40
    %v1088 = vpop.permute.xlu0 %1087
    %v1091 = vsel %vm539, %v1086, 0
    %1093 = vmatprep.subr.bf16.mxu0 0
    %1094 = vmatpush1.bf16.msra.mxu0 %v1088
    %1095 = vmatprep.subr.bf16.mxu0 0
    %1096 = vmatpush1.bf16.msra.mxu0 0
    %1097 = vmatprep.subr.bf16.mxu0 0
    %1098 = vmatpush1.bf16.msra.mxu0 0
    %1099 = vmatprep.subr.bf16.mxu0 0
    %1100 = vmatpush1.bf16.msra.mxu0 0
    %1101 = vmatprep.subr.bf16.mxu0 0
    %1102 = vmatpush1.bf16.msra.mxu0 0
    %1103 = vmatprep.subr.bf16.mxu0 0
    %1104 = vmatpush1.bf16.msra.mxu0 0
    %1105 = vmatprep.subr.bf16.mxu0 0
    %1106 = vmatpush1.bf16.msra.mxu0 0
    %1107 = vmatprep.subr.bf16.mxu0 0
    %1108 = vmatpush1.bf16.msra.mxu0 0
    %1109 = vmatprep.subr.bf16.mxu0 0
    %1110 = vmatpush1.bf16.msra.mxu0 0
    %1111 = vmatprep.subr.bf16.mxu0 0
    %1112 = vmatpush1.bf16.msra.mxu0 0
    %1113 = vmatprep.subr.bf16.mxu0 0
    %1114 = vmatpush1.bf16.msra.mxu0 0
    %1115 = vmatprep.subr.bf16.mxu0 0
    %1116 = vmatpush1.bf16.msra.mxu0 0
    %1117 = vmatprep.subr.bf16.mxu0 0
    %1118 = vmatpush1.bf16.msra.mxu0 0
    %1119 = vmatprep.subr.bf16.mxu0 0
    %1120 = vmatpush1.bf16.msra.mxu0 0
    %1121 = vmatprep.subr.bf16.mxu0 0
    %1122 = vmatpush1.bf16.msra.mxu0 0
    %1123 = vmatprep.subr.bf16.mxu0 0
    %1124 = vmatpush1.bf16.msra.mxu0 0
    %1125 = vmatprep.mubr.bf16.mxu0 0
    %1126 = vmatmul.mubr.bf16.gmra.mrb[0].mxu0 %v1091
    %v1127 = vpop.f32.mrb[0].mxu0
    %v1128 = vadd.f32 0.0, %v1127
    %v1129 = vpop.f32.mrb[0].mxu0
    %v1130 = vpop.f32.mrb[0].mxu0
    %v1131 = vadd.f32 0.0, %v1130
    %v1132 = vpop.f32.mrb[0].mxu0
    %1133 = vdwg.mxu0
    %v1134 = vpack.c.bf16 %v1131, %v1128
    %v1136 = vrot.slane %v484, 4
    %v1138 = vsel %vm204, %v1134, 0
    %v1141 = vsel %vm742, %v1136, 0
    %1143 = vmatprep.subr.bf16.mxu0 0
    %1144 = vmatpush1.bf16.msra.mxu0 %v1141
    %1145 = vmatprep.subr.bf16.mxu0 0
    %1146 = vmatpush1.bf16.msra.mxu0 0
    %1147 = vmatprep.subr.bf16.mxu0 0
    %1148 = vmatpush1.bf16.msra.mxu0 0
    %1149 = vmatprep.subr.bf16.mxu0 0
    %1150 = vmatpush1.bf16.msra.mxu0 0
    %1151 = vmatprep.subr.bf16.mxu0 0
    %1152 = vmatpush1.bf16.msra.mxu0 0
    %1153 = vmatprep.subr.bf16.mxu0 0
    %1154 = vmatpush1.bf16.msra.mxu0 0
    %1155 = vmatprep.subr.bf16.mxu0 0
    %1156 = vmatpush1.bf16.msra.mxu0 0
    %1157 = vmatprep.subr.bf16.mxu0 0
    %1158 = vmatpush1.bf16.msra.mxu0 0
    %1159 = vmatprep.subr.bf16.mxu0 0
    %1160 = vmatpush1.bf16.msra.mxu0 0
    %1161 = vmatprep.subr.bf16.mxu0 0
    %1162 = vmatpush1.bf16.msra.mxu0 0
    %1163 = vmatprep.subr.bf16.mxu0 0
    %1164 = vmatpush1.bf16.msra.mxu0 0
    %1165 = vmatprep.subr.bf16.mxu0 0
    %1166 = vmatpush1.bf16.msra.mxu0 0
    %1167 = vmatprep.subr.bf16.mxu0 0
    %1168 = vmatpush1.bf16.msra.mxu0 0
    %1169 = vmatprep.subr.bf16.mxu0 0
    %1170 = vmatpush1.bf16.msra.mxu0 0
    %1171 = vmatprep.subr.bf16.mxu0 0
    %1172 = vmatpush1.bf16.msra.mxu0 0
    %1173 = vmatprep.subr.bf16.mxu0 0
    %1174 = vmatpush1.bf16.msra.mxu0 0
    %1175 = vmatprep.mubr.bf16.mxu0 0
    %1176 = vmatmul.mubr.bf16.gmra.mrb[0].mxu0 %v1138
    %v1177 = vpop.f32.mrb[0].mxu0
    %v1178 = vadd.f32 0.0, %v1177
    %v1179 = vpop.f32.mrb[0].mxu0
    %v1180 = vpop.f32.mrb[0].mxu0
    %v1181 = vadd.f32 0.0, %v1180
    %v1182 = vpop.f32.mrb[0].mxu0
    %1183 = vdwg.mxu0
    %v1184 = vadd.f32 %v1007, %v1178
    %v1185 = vadd.f32 %v1008, %v1181
    %v1187 = vlaneseq
    %v1188 = vshrl.u32 %v1187, 7
    %v1189 = vsub.s32 0, %v1188
    %v1190 = vrot.slane %v481, %v1189
    %v1192 = vadd.f32 %v1184, %v1190
    %v1193 = vadd.f32 %v1185, %v1190
    %v1194 = vadd.f32 %v245, %v1192
    %v1195 = vadd.f32 %v246, %v1193
    %v1196 = vsel %vm263, %v1194, 0.0
    %1197 = vadd.xlane.f32.xlu0 %v1196
    %v1198 = vpop.xlane.xlu0 %1197
    %v1199 = vsel %vm263, %v1195, 0.0
    %1200 = vadd.xlane.f32.xlu0 %v1199
    %v1201 = vpop.xlane.xlu0 %1200
    %v1202 = vmul.f32 %v1198, %v372
    %v1203 = vmul.f32 %v1201, %v372
    %v1204 = vsub.f32 %v1194, %v1202
    %v1205 = vsub.f32 %v1195, %v1203
    %v1206 = vmul.f32 %v1204, %v1204
    %v1207 = vmul.f32 %v1205, %v1205
    %v1208 = vsel %vm263, %v1206, 0.0
    %1209 = vadd.xlane.f32.xlu0 %v1208
    %v1210 = vpop.xlane.xlu0 %1209
    %v1211 = vsel %vm263, %v1207, 0.0
    %1212 = vadd.xlane.f32.xlu0 %v1211
    %v1213 = vpop.xlane.xlu0 %1212
    %v1214 = vmul.f32 %v1210, 0.032258064
    %v1215 = vmul.f32 %v1213, 0.032258064
    %v1216 = vrsqrt.pop %v1214
    %v1217 = vmul.f32 %v1214, %v1216
    %vm1218 = vcmp.eq.f32.partialorder %v1214, inf
    %v1219 = vsel %vm1218, %v1214, %v1217
    %vm1220 = vcmp.eq.f32.partialorder %v1214, 0.0
    %v1221 = vand.u32 %v1214, 2147483648
    %v1222 = vsel %vm1220, %v1221, %v1219
    %v1223 = vrsqrt.pop %v1215
    %v1224 = vmul.f32 %v1215, %v1223
    %vm1225 = vcmp.eq.f32.partialorder %v1215, inf
    %v1226 = vsel %vm1225, %v1215, %v1224
    %vm1227 = vcmp.eq.f32.partialorder %v1215, 0.0
    %v1228 = vand.u32 %v1215, 2147483648
    %v1229 = vsel %vm1227, %v1228, %v1226
    %v1230 = vadd.f32 %v1222, 1e-06
    %v1231 = vadd.f32 %v1229, 1e-06
    %v1232 = vrcp.pop %v1230
    %v1233 = vrcp.pop %v1231
    %v1234 = vlaneseq
    %v1235 = vshrl.u32 %v1234, 7
    %v1236 = vsub.s32 1, %v1235
    %v1237 = vrot.slane %v364, %v1236
    %v1238 = vmul.f32 %v1237, %v1204
    %v1239 = vmul.f32 %v1237, %v1205
    %v1240 = vmul.f32 %v1238, %v1232
    %v1241 = vmul.f32 %v1239, %v1233
    %v1242 = vlaneseq
    %v1243 = vshrl.u32 %v1242, 7
    %v1244 = vsub.s32 1, %v1243
    %v1245 = vrot.slane %v365, %v1244
    %v1246 = vadd.f32 %v1240, %v1245
    %v1247 = vadd.f32 %v1241, %v1245
    %v1248 = vpack.c.bf16 %v1247, %v1246
    %v1249 = vld [vmem:[%s11] sm:$0xff]
    %v1250 = vld [vmem:[%s11 + $0x8] sm:$0xff]
    %v1251 = vld [vmem:[%s11 + $0x10] sm:$0xff]
    %v1252 = vld [vmem:[%s11 + $0x18] sm:$0xff]
    %v1253 = vpack.c.bf16 %v1250, %v1249
    %v1254 = vpack.c.bf16 %v1252, %v1251
    %v1255 = vld [vmem:[#allocation10] sm:$0x1]
    %v1257 = vlaneseq
    %v1258 = vshrl.u32 %v1257, 7
    %v1259 = vsub.s32 0, %v1258
    %v1260 = vrot.slane %v1255, %v1259
    %v1263 = vsel %vm263, %v1248, 0
    %1265 = vmatprep.subr.bf16.mxu0 0
    %1266 = vmatpush1.bf16.msra.mxu0 %v1253
    %1267 = vmatprep.subr.bf16.mxu0 0
    %1268 = vmatpush1.bf16.msra.mxu0 %v1254
    %1269 = vmatprep.subr.bf16.mxu0 0
    %1270 = vmatpush1.bf16.msra.mxu0 0
    %1271 = vmatprep.subr.bf16.mxu0 0
    %1272 = vmatpush1.bf16.msra.mxu0 0
    %1273 = vmatprep.subr.bf16.mxu0 0
    %1274 = vmatpush1.bf16.msra.mxu0 0
    %1275 = vmatprep.subr.bf16.mxu0 0
    %1276 = vmatpush1.bf16.msra.mxu0 0
    %1277 = vmatprep.subr.bf16.mxu0 0
    %1278 = vmatpush1.bf16.msra.mxu0 0
    %1279 = vmatprep.subr.bf16.mxu0 0
    %1280 = vmatpush1.bf16.msra.mxu0 0
    %1281 = vmatprep.subr.bf16.mxu0 0
    %1282 = vmatpush1.bf16.msra.mxu0 0
    %1283 = vmatprep.subr.bf16.mxu0 0
    %1284 = vmatpush1.bf16.msra.mxu0 0
    %1285 = vmatprep.subr.bf16.mxu0 0
    %1286 = vmatpush1.bf16.msra.mxu0 0
    %1287 = vmatprep.subr.bf16.mxu0 0
    %1288 = vmatpush1.bf16.msra.mxu0 0
    %1289 = vmatprep.subr.bf16.mxu0 0
    %1290 = vmatpush1.bf16.msra.mxu0 0
    %1291 = vmatprep.subr.bf16.mxu0 0
    %1292 = vmatpush1.bf16.msra.mxu0 0
    %1293 = vmatprep.subr.bf16.mxu0 0
    %1294 = vmatpush1.bf16.msra.mxu0 0
    %1295 = vmatprep.subr.bf16.mxu0 0
    %1296 = vmatpush1.bf16.msra.mxu0 0
    %1297 = vmatprep.mubr.bf16.mxu0 0
    %1298 = vmatmul.mubr.bf16.gmra.mrb[0].mxu0 %v1263
    %v1299 = vpop.f32.mrb[0].mxu0
    %v1300 = vadd.f32 %v1260, %v1299
    %v1301 = vpop.f32.mrb[0].mxu0
    %v1302 = vpop.f32.mrb[0].mxu0
    %v1303 = vadd.f32 %v1260, %v1302
    %v1304 = vpop.f32.mrb[0].mxu0
    %1305 = vdwg.mxu0
    %v1306 = vld [vmem:[%s15] sm:$0xff]
    %v1307 = vld [vmem:[%s15 + $0x8] sm:$0xff]
    %v1308 = vld [vmem:[%s15 + $0x10] sm:$0xff]
    %v1309 = vld [vmem:[%s15 + $0x18] sm:$0xff]
    %v1310 = vld [vmem:[#allocation13] sm:$0x1]
    %v1311 = vpack.c.bf16 %v1303, %v1300
    %v1312 = vpack.c.bf16 %v305, %v302
    %v1313 = vpack.c.bf16 %v1307, %v1306
    %v1314 = vpack.c.bf16 %v1309, %v1308
    %v1316 = vsel %vm204, %v1311, 0
    %v1319 = vsel %vm204, %v1312, 0
    %1321 = vmatprep.subr.bf16.mxu0 0
    %1322 = vmatpush1.bf16.xpose.msra.mxu0 %v1319
    %1323 = vmatprep.subr.bf16.mxu0 0
    %1324 = vmatpush1.bf16.xpose.msra.mxu0 0
    %1325 = vmatprep.subr.bf16.mxu0 0
    %1326 = vmatpush1.bf16.xpose.msra.mxu0 0
    %1327 = vmatprep.subr.bf16.mxu0 0
    %1328 = vmatpush1.bf16.xpose.msra.mxu0 0
    %1329 = vmatprep.subr.bf16.mxu0 0
    %1330 = vmatpush1.bf16.xpose.msra.mxu0 0
    %1331 = vmatprep.subr.bf16.mxu0 0
    %1332 = vmatpush1.bf16.xpose.msra.mxu0 0
    %1333 = vmatprep.subr.bf16.mxu0 0
    %1334 = vmatpush1.bf16.xpose.msra.mxu0 0
    %1335 = vmatprep.subr.bf16.mxu0 0
    %1336 = vmatpush1.bf16.xpose.msra.mxu0 0
    %1337 = vmatprep.subr.bf16.mxu0 0
    %1338 = vmatpush1.bf16.xpose.msra.mxu0 0
    %1339 = vmatprep.subr.bf16.mxu0 0
    %1340 = vmatpush1.bf16.xpose.msra.mxu0 0
    %1341 = vmatprep.subr.bf16.mxu0 0
    %1342 = vmatpush1.bf16.xpose.msra.mxu0 0
    %1343 = vmatprep.subr.bf16.mxu0 0
    %1344 = vmatpush1.bf16.xpose.msra.mxu0 0
    %1345 = vmatprep.subr.bf16.mxu0 0
    %1346 = vmatpush1.bf16.xpose.msra.mxu0 0
    %1347 = vmatprep.subr.bf16.mxu0 0
    %1348 = vmatpush1.bf16.xpose.msra.mxu0 0
    %1349 = vmatprep.subr.bf16.mxu0 0
    %1350 = vmatpush1.bf16.xpose.msra.mxu0 0
    %1351 = vmatprep.subr.bf16.mxu0 0
    %1352 = vmatpush1.bf16.xpose.msra.mxu0 0
    %1353 = vmatprep.mubr.bf16.mxu0 0
    %1354 = vmatmul.mubr.bf16.gmra.mrb[0].mxu0 %v1316
    %v1355 = vpop.f32.mrb[0].mxu0
    %v1356 = vadd.f32 0.0, %v1355
    %v1357 = vpop.f32.mrb[0].mxu0
    %v1358 = vpop.f32.mrb[0].mxu0
    %v1359 = vadd.f32 0.0, %v1358
    %v1360 = vpop.f32.mrb[0].mxu0
    %1361 = vdwg.mxu0
    %v1362 = vmul.f32 %v1356, 0.35355338
    %v1363 = vmul.f32 %v1359, 0.35355338
    %v1364 = vadd.f32 %v1362, %v224
    %v1365 = vadd.f32 %v1363, %v239
    %v1366 = vsel %vm539, %v1364, -inf
    %1367 = vmax.xlane.f32.xlu0 %v1366
    %v1368 = vpop.xlane.xlu0 %1367
    %v1369 = vsel %vm539, %v1365, -inf
    %1370 = vmax.xlane.f32.xlu0 %v1369
    %v1371 = vpop.xlane.xlu0 %1370
    %v1372 = vsub.f32 %v1364, %v1368
    %v1373 = vsub.f32 %v1365, %v1371
    %v1374 = vmul.f32 %v1372, 1.442695
    %v1375 = vpow.pop %v1374
    %v1376 = vmul.f32 %v1373, 1.442695
    %v1377 = vpow.pop %v1376
    %v1378 = vsel %vm539, %v1375, 0.0
    %1379 = vadd.xlane.f32.xlu0 %v1378
    %v1380 = vpop.xlane.xlu0 %1379
    %v1381 = vsel %vm539, %v1377, 0.0
    %1382 = vadd.xlane.f32.xlu0 %v1381
    %v1383 = vpop.xlane.xlu0 %1382
    %v1384 = vrcp.pop %v1380
    %v1385 = vrcp.pop %v1383
    %v1386 = vmul.f32 %v1375, %v1384
    %v1387 = vmul.f32 %v1377, %v1385
    %v1388 = vadd.f32 %v1386, %v1387
    %v1389 = vpack.c.bf16 %v1387, %v1386
    %1391 = vrot.lane.b32.xlu0 %v1312, 96
    %v1392 = vpop.permute.xlu0 %1391
    %v1395 = vsel %vm539, %v1389, 0
    %1397 = vmatprep.subr.bf16.mxu0 0
    %1398 = vmatpush1.bf16.msra.mxu0 %v1392
    %1399 = vmatprep.subr.bf16.mxu0 0
    %1400 = vmatpush1.bf16.msra.mxu0 0
    %1401 = vmatprep.subr.bf16.mxu0 0
    %1402 = vmatpush1.bf16.msra.mxu0 0
    %1403 = vmatprep.subr.bf16.mxu0 0
    %1404 = vmatpush1.bf16.msra.mxu0 0
    %1405 = vmatprep.subr.bf16.mxu0 0
    %1406 = vmatpush1.bf16.msra.mxu0 0
    %1407 = vmatprep.subr.bf16.mxu0 0
    %1408 = vmatpush1.bf16.msra.mxu0 0
    %1409 = vmatprep.subr.bf16.mxu0 0
    %1410 = vmatpush1.bf16.msra.mxu0 0
    %1411 = vmatprep.subr.bf16.mxu0 0
    %1412 = vmatpush1.bf16.msra.mxu0 0
    %1413 = vmatprep.subr.bf16.mxu0 0
    %1414 = vmatpush1.bf16.msra.mxu0 0
    %1415 = vmatprep.subr.bf16.mxu0 0
    %1416 = vmatpush1.bf16.msra.mxu0 0
    %1417 = vmatprep.subr.bf16.mxu0 0
    %1418 = vmatpush1.bf16.msra.mxu0 0
    %1419 = vmatprep.subr.bf16.mxu0 0
    %1420 = vmatpush1.bf16.msra.mxu0 0
    %1421 = vmatprep.subr.bf16.mxu0 0
    %1422 = vmatpush1.bf16.msra.mxu0 0
    %1423 = vmatprep.subr.bf16.mxu0 0
    %1424 = vmatpush1.bf16.msra.mxu0 0
    %1425 = vmatprep.subr.bf16.mxu0 0
    %1426 = vmatpush1.bf16.msra.mxu0 0
    %1427 = vmatprep.subr.bf16.mxu0 0
    %1428 = vmatpush1.bf16.msra.mxu0 0
    %1429 = vmatprep.mubr.bf16.mxu0 0
    %1430 = vmatmul.mubr.bf16.gmra.mrb[0].mxu0 %v1395
    %v1431 = vpop.f32.mrb[0].mxu0
    %v1432 = vadd.f32 0.0, %v1431
    %v1433 = vpop.f32.mrb[0].mxu0
    %v1434 = vpop.f32.mrb[0].mxu0
    %v1435 = vadd.f32 0.0, %v1434
    %v1436 = vpop.f32.mrb[0].mxu0
    %1437 = vdwg.mxu0
    %v1438 = vpack.c.bf16 %v1435, %v1432
    %1440 = vrot.lane.b32.xlu0 %v1311, 120
    %v1441 = vpop.permute.xlu0 %1440
    %1442 = vrot.lane.b32.xlu0 %v1312, 120
    %v1443 = vpop.permute.xlu0 %1442
    %v1445 = vsel %vm204, %v1441, 0
    %v1448 = vsel %vm204, %v1443, 0
    %1450 = vmatprep.subr.bf16.mxu0 0
    %1451 = vmatpush1.bf16.xpose.msra.mxu0 %v1448
    %1452 = vmatprep.subr.bf16.mxu0 0
    %1453 = vmatpush1.bf16.xpose.msra.mxu0 0
    %1454 = vmatprep.subr.bf16.mxu0 0
    %1455 = vmatpush1.bf16.xpose.msra.mxu0 0
    %1456 = vmatprep.subr.bf16.mxu0 0
    %1457 = vmatpush1.bf16.xpose.msra.mxu0 0
    %1458 = vmatprep.subr.bf16.mxu0 0
    %1459 = vmatpush1.bf16.xpose.msra.mxu0 0
    %1460 = vmatprep.subr.bf16.mxu0 0
    %1461 = vmatpush1.bf16.xpose.msra.mxu0 0
    %1462 = vmatprep.subr.bf16.mxu0 0
    %1463 = vmatpush1.bf16.xpose.msra.mxu0 0
    %1464 = vmatprep.subr.bf16.mxu0 0
    %1465 = vmatpush1.bf16.xpose.msra.mxu0 0
    %1466 = vmatprep.subr.bf16.mxu0 0
    %1467 = vmatpush1.bf16.xpose.msra.mxu0 0
    %1468 = vmatprep.subr.bf16.mxu0 0
    %1469 = vmatpush1.bf16.xpose.msra.mxu0 0
    %1470 = vmatprep.subr.bf16.mxu0 0
    %1471 = vmatpush1.bf16.xpose.msra.mxu0 0
    %1472 = vmatprep.subr.bf16.mxu0 0
    %1473 = vmatpush1.bf16.xpose.msra.mxu0 0
    %1474 = vmatprep.subr.bf16.mxu0 0
    %1475 = vmatpush1.bf16.xpose.msra.mxu0 0
    %1476 = vmatprep.subr.bf16.mxu0 0
    %1477 = vmatpush1.bf16.xpose.msra.mxu0 0
    %1478 = vmatprep.subr.bf16.mxu0 0
    %1479 = vmatpush1.bf16.xpose.msra.mxu0 0
    %1480 = vmatprep.subr.bf16.mxu0 0
    %1481 = vmatpush1.bf16.xpose.msra.mxu0 0
    %1482 = vmatprep.mubr.bf16.mxu0 0
    %1483 = vmatmul.mubr.bf16.gmra.mrb[0].mxu0 %v1445
    %v1484 = vpop.f32.mrb[0].mxu0
    %v1485 = vadd.f32 0.0, %v1484
    %v1486 = vpop.f32.mrb[0].mxu0
    %v1487 = vpop.f32.mrb[0].mxu0
    %v1488 = vadd.f32 0.0, %v1487
    %v1489 = vpop.f32.mrb[0].mxu0
    %1490 = vdwg.mxu0
    %v1491 = vmul.f32 %v1485, 0.35355338
    %v1492 = vmul.f32 %v1488, 0.35355338
    %v1493 = vadd.f32 %v1491, %v224
    %v1494 = vadd.f32 %v1492, %v239
    %v1495 = vsel %vm539, %v1493, -inf
    %1496 = vmax.xlane.f32.xlu0 %v1495
    %v1497 = vpop.xlane.xlu0 %1496
    %v1498 = vsel %vm539, %v1494, -inf
    %1499 = vmax.xlane.f32.xlu0 %v1498
    %v1500 = vpop.xlane.xlu0 %1499
    %v1501 = vsub.f32 %v1493, %v1497
    %v1502 = vsub.f32 %v1494, %v1500
    %v1503 = vmul.f32 %v1501, 1.442695
    %v1504 = vpow.pop %v1503
    %v1505 = vmul.f32 %v1502, 1.442695
    %v1506 = vpow.pop %v1505
    %v1507 = vsel %vm539, %v1504, 0.0
    %1508 = vadd.xlane.f32.xlu0 %v1507
    %v1509 = vpop.xlane.xlu0 %1508
    %v1510 = vsel %vm539, %v1506, 0.0
    %1511 = vadd.xlane.f32.xlu0 %v1510
    %v1512 = vpop.xlane.xlu0 %1511
    %v1513 = vrcp.pop %v1509
    %v1514 = vrcp.pop %v1512
    %v1515 = vmul.f32 %v1504, %v1513
    %v1516 = vmul.f32 %v1506, %v1514
    %v1517 = vadd.f32 %v1515, %v1516
    %v1518 = vpack.c.bf16 %v1516, %v1515
    %1519 = vrot.lane.b32.xlu0 %v1312, 88
    %v1520 = vpop.permute.xlu0 %1519
    %v1523 = vsel %vm539, %v1518, 0
    %1525 = vmatprep.subr.bf16.mxu0 0
    %1526 = vmatpush1.bf16.msra.mxu0 %v1520
    %1527 = vmatprep.subr.bf16.mxu0 0
    %1528 = vmatpush1.bf16.msra.mxu0 0
    %1529 = vmatprep.subr.bf16.mxu0 0
    %1530 = vmatpush1.bf16.msra.mxu0 0
    %1531 = vmatprep.subr.bf16.mxu0 0
    %1532 = vmatpush1.bf16.msra.mxu0 0
    %1533 = vmatprep.subr.bf16.mxu0 0
    %1534 = vmatpush1.bf16.msra.mxu0 0
    %1535 = vmatprep.subr.bf16.mxu0 0
    %1536 = vmatpush1.bf16.msra.mxu0 0
    %1537 = vmatprep.subr.bf16.mxu0 0
    %1538 = vmatpush1.bf16.msra.mxu0 0
    %1539 = vmatprep.subr.bf16.mxu0 0
    %1540 = vmatpush1.bf16.msra.mxu0 0
    %1541 = vmatprep.subr.bf16.mxu0 0
    %1542 = vmatpush1.bf16.msra.mxu0 0
    %1543 = vmatprep.subr.bf16.mxu0 0
    %1544 = vmatpush1.bf16.msra.mxu0 0
    %1545 = vmatprep.subr.bf16.mxu0 0
    %1546 = vmatpush1.bf16.msra.mxu0 0
    %1547 = vmatprep.subr.bf16.mxu0 0
    %1548 = vmatpush1.bf16.msra.mxu0 0
    %1549 = vmatprep.subr.bf16.mxu0 0
    %1550 = vmatpush1.bf16.msra.mxu0 0
    %1551 = vmatprep.subr.bf16.mxu0 0
    %1552 = vmatpush1.bf16.msra.mxu0 0
    %1553 = vmatprep.subr.bf16.mxu0 0
    %1554 = vmatpush1.bf16.msra.mxu0 0
    %1555 = vmatprep.subr.bf16.mxu0 0
    %1556 = vmatpush1.bf16.msra.mxu0 0
    %1557 = vmatprep.mubr.bf16.mxu0 0
    %1558 = vmatmul.mubr.bf16.gmra.mrb[0].mxu0 %v1523
    %v1559 = vpop.f32.mrb[0].mxu0
    %v1560 = vadd.f32 0.0, %v1559
    %v1561 = vpop.f32.mrb[0].mxu0
    %v1562 = vpop.f32.mrb[0].mxu0
    %v1563 = vadd.f32 0.0, %v1562
    %v1564 = vpop.f32.mrb[0].mxu0
    %1565 = vdwg.mxu0
    %v1566 = vpack.c.bf16 %v1563, %v1560
    %v1568 = vrot.slane %v1313, 4
    %v1570 = vsel %vm204, %v1566, 0
    %v1573 = vsel %vm742, %v1568, 0
    %1575 = vmatprep.subr.bf16.mxu0 0
    %1576 = vmatpush1.bf16.msra.mxu0 %v1573
    %1577 = vmatprep.subr.bf16.mxu0 0
    %1578 = vmatpush1.bf16.msra.mxu0 0
    %1579 = vmatprep.subr.bf16.mxu0 0
    %1580 = vmatpush1.bf16.msra.mxu0 0
    %1581 = vmatprep.subr.bf16.mxu0 0
    %1582 = vmatpush1.bf16.msra.mxu0 0
    %1583 = vmatprep.subr.bf16.mxu0 0
    %1584 = vmatpush1.bf16.msra.mxu0 0
    %1585 = vmatprep.subr.bf16.mxu0 0
    %1586 = vmatpush1.bf16.msra.mxu0 0
    %1587 = vmatprep.subr.bf16.mxu0 0
    %1588 = vmatpush1.bf16.msra.mxu0 0
    %1589 = vmatprep.subr.bf16.mxu0 0
    %1590 = vmatpush1.bf16.msra.mxu0 0
    %1591 = vmatprep.subr.bf16.mxu0 0
    %1592 = vmatpush1.bf16.msra.mxu0 0
    %1593 = vmatprep.subr.bf16.mxu0 0
    %1594 = vmatpush1.bf16.msra.mxu0 0
    %1595 = vmatprep.subr.bf16.mxu0 0
    %1596 = vmatpush1.bf16.msra.mxu0 0
    %1597 = vmatprep.subr.bf16.mxu0 0
    %1598 = vmatpush1.bf16.msra.mxu0 0
    %1599 = vmatprep.subr.bf16.mxu0 0
    %1600 = vmatpush1.bf16.msra.mxu0 0
    %1601 = vmatprep.subr.bf16.mxu0 0
    %1602 = vmatpush1.bf16.msra.mxu0 0
    %1603 = vmatprep.subr.bf16.mxu0 0
    %1604 = vmatpush1.bf16.msra.mxu0 0
    %1605 = vmatprep.subr.bf16.mxu0 0
    %1606 = vmatpush1.bf16.msra.mxu0 0
    %1607 = vmatprep.mubr.bf16.mxu0 0
    %1608 = vmatmul.mubr.bf16.gmra.mrb[0].mxu0 %v1570
    %v1609 = vpop.f32.mrb[0].mxu0
    %v1610 = vadd.f32 0.0, %v1609
    %v1611 = vpop.f32.mrb[0].mxu0
    %v1612 = vpop.f32.mrb[0].mxu0
    %v1613 = vadd.f32 0.0, %v1612
    %v1614 = vpop.f32.mrb[0].mxu0
    %1615 = vdwg.mxu0
    %v1617 = vsel %vm204, %v1438, 0
    %v1620 = vsel %vm742, %v1313, 0
    %1622 = vmatprep.subr.bf16.mxu0 0
    %1623 = vmatpush1.bf16.msra.mxu0 %v1620
    %1624 = vmatprep.subr.bf16.mxu0 0
    %1625 = vmatpush1.bf16.msra.mxu0 0
    %1626 = vmatprep.subr.bf16.mxu0 0
    %1627 = vmatpush1.bf16.msra.mxu0 0
    %1628 = vmatprep.subr.bf16.mxu0 0
    %1629 = vmatpush1.bf16.msra.mxu0 0
    %1630 = vmatprep.subr.bf16.mxu0 0
    %1631 = vmatpush1.bf16.msra.mxu0 0
    %1632 = vmatprep.subr.bf16.mxu0 0
    %1633 = vmatpush1.bf16.msra.mxu0 0
    %1634 = vmatprep.subr.bf16.mxu0 0
    %1635 = vmatpush1.bf16.msra.mxu0 0
    %1636 = vmatprep.subr.bf16.mxu0 0
    %1637 = vmatpush1.bf16.msra.mxu0 0
    %1638 = vmatprep.subr.bf16.mxu0 0
    %1639 = vmatpush1.bf16.msra.mxu0 0
    %1640 = vmatprep.subr.bf16.mxu0 0
    %1641 = vmatpush1.bf16.msra.mxu0 0
    %1642 = vmatprep.subr.bf16.mxu0 0
    %1643 = vmatpush1.bf16.msra.mxu0 0
    %1644 = vmatprep.subr.bf16.mxu0 0
    %1645 = vmatpush1.bf16.msra.mxu0 0
    %1646 = vmatprep.subr.bf16.mxu0 0
    %1647 = vmatpush1.bf16.msra.mxu0 0
    %1648 = vmatprep.subr.bf16.mxu0 0
    %1649 = vmatpush1.bf16.msra.mxu0 0
    %1650 = vmatprep.subr.bf16.mxu0 0
    %1651 = vmatpush1.bf16.msra.mxu0 0
    %1652 = vmatprep.subr.bf16.mxu0 0
    %1653 = vmatpush1.bf16.msra.mxu0 0
    %1654 = vmatprep.mubr.bf16.mxu0 0
    %1655 = vmatmul.mubr.bf16.gmra.mrb[0].mxu0 %v1617
    %v1656 = vpop.f32.mrb[0].mxu0
    %v1657 = vadd.f32 %v1610, %v1656
    %v1658 = vpop.f32.mrb[0].mxu0
    %v1659 = vpop.f32.mrb[0].mxu0
    %v1660 = vadd.f32 %v1613, %v1659
    %v1661 = vpop.f32.mrb[0].mxu0
    %1662 = vdwg.mxu0
    %1663 = vrot.lane.b32.xlu0 %v1311, 112
    %v1664 = vpop.permute.xlu0 %1663
    %1665 = vrot.lane.b32.xlu0 %v1312, 112
    %v1666 = vpop.permute.xlu0 %1665
    %v1668 = vsel %vm204, %v1664, 0
    %v1671 = vsel %vm204, %v1666, 0
    %1673 = vmatprep.subr.bf16.mxu0 0
    %1674 = vmatpush1.bf16.xpose.msra.mxu0 %v1671
    %1675 = vmatprep.subr.bf16.mxu0 0
    %1676 = vmatpush1.bf16.xpose.msra.mxu0 0
    %1677 = vmatprep.subr.bf16.mxu0 0
    %1678 = vmatpush1.bf16.xpose.msra.mxu0 0
    %1679 = vmatprep.subr.bf16.mxu0 0
    %1680 = vmatpush1.bf16.xpose.msra.mxu0 0
    %1681 = vmatprep.subr.bf16.mxu0 0
    %1682 = vmatpush1.bf16.xpose.msra.mxu0 0
    %1683 = vmatprep.subr.bf16.mxu0 0
    %1684 = vmatpush1.bf16.xpose.msra.mxu0 0
    %1685 = vmatprep.subr.bf16.mxu0 0
    %1686 = vmatpush1.bf16.xpose.msra.mxu0 0
    %1687 = vmatprep.subr.bf16.mxu0 0
    %1688 = vmatpush1.bf16.xpose.msra.mxu0 0
    %1689 = vmatprep.subr.bf16.mxu0 0
    %1690 = vmatpush1.bf16.xpose.msra.mxu0 0
    %1691 = vmatprep.subr.bf16.mxu0 0
    %1692 = vmatpush1.bf16.xpose.msra.mxu0 0
    %1693 = vmatprep.subr.bf16.mxu0 0
    %1694 = vmatpush1.bf16.xpose.msra.mxu0 0
    %1695 = vmatprep.subr.bf16.mxu0 0
    %1696 = vmatpush1.bf16.xpose.msra.mxu0 0
    %1697 = vmatprep.subr.bf16.mxu0 0
    %1698 = vmatpush1.bf16.xpose.msra.mxu0 0
    %1699 = vmatprep.subr.bf16.mxu0 0
    %1700 = vmatpush1.bf16.xpose.msra.mxu0 0
    %1701 = vmatprep.subr.bf16.mxu0 0
    %1702 = vmatpush1.bf16.xpose.msra.mxu0 0
    %1703 = vmatprep.subr.bf16.mxu0 0
    %1704 = vmatpush1.bf16.xpose.msra.mxu0 0
    %1705 = vmatprep.mubr.bf16.mxu0 0
    %1706 = vmatmul.mubr.bf16.gmra.mrb[0].mxu0 %v1668
    %v1707 = vpop.f32.mrb[0].mxu0
    %v1708 = vadd.f32 0.0, %v1707
    %v1709 = vpop.f32.mrb[0].mxu0
    %v1710 = vpop.f32.mrb[0].mxu0
    %v1711 = vadd.f32 0.0, %v1710
    %v1712 = vpop.f32.mrb[0].mxu0
    %1713 = vdwg.mxu0
    %v1714 = vmul.f32 %v1708, 0.35355338
    %v1715 = vmul.f32 %v1711, 0.35355338
    %v1716 = vadd.f32 %v1714, %v224
    %v1717 = vadd.f32 %v1715, %v239
    %v1718 = vsel %vm539, %v1716, -inf
    %1719 = vmax.xlane.f32.xlu0 %v1718
    %v1720 = vpop.xlane.xlu0 %1719
    %v1721 = vsel %vm539, %v1717, -inf
    %1722 = vmax.xlane.f32.xlu0 %v1721
    %v1723 = vpop.xlane.xlu0 %1722
    %v1724 = vsub.f32 %v1716, %v1720
    %v1725 = vsub.f32 %v1717, %v1723
    %v1726 = vmul.f32 %v1724, 1.442695
    %v1727 = vpow.pop %v1726
    %v1728 = vmul.f32 %v1725, 1.442695
    %v1729 = vpow.pop %v1728
    %v1730 = vsel %vm539, %v1727, 0.0
    %1731 = vadd.xlane.f32.xlu0 %v1730
    %v1732 = vpop.xlane.xlu0 %1731
    %v1733 = vsel %vm539, %v1729, 0.0
    %1734 = vadd.xlane.f32.xlu0 %v1733
    %v1735 = vpop.xlane.xlu0 %1734
    %v1736 = vrcp.pop %v1732
    %v1737 = vrcp.pop %v1735
    %v1738 = vmul.f32 %v1727, %v1736
    %v1739 = vmul.f32 %v1729, %v1737
    %v1740 = vadd.f32 %v1738, %v1739
    %v1741 = vpack.c.bf16 %v1739, %v1738
    %1742 = vrot.lane.b32.xlu0 %v1312, 80
    %v1743 = vpop.permute.xlu0 %1742
    %v1746 = vsel %vm539, %v1741, 0
    %1748 = vmatprep.subr.bf16.mxu0 0
    %1749 = vmatpush1.bf16.msra.mxu0 %v1743
    %1750 = vmatprep.subr.bf16.mxu0 0
    %1751 = vmatpush1.bf16.msra.mxu0 0
    %1752 = vmatprep.subr.bf16.mxu0 0
    %1753 = vmatpush1.bf16.msra.mxu0 0
    %1754 = vmatprep.subr.bf16.mxu0 0
    %1755 = vmatpush1.bf16.msra.mxu0 0
    %1756 = vmatprep.subr.bf16.mxu0 0
    %1757 = vmatpush1.bf16.msra.mxu0 0
    %1758 = vmatprep.subr.bf16.mxu0 0
    %1759 = vmatpush1.bf16.msra.mxu0 0
    %1760 = vmatprep.subr.bf16.mxu0 0
    %1761 = vmatpush1.bf16.msra.mxu0 0
    %1762 = vmatprep.subr.bf16.mxu0 0
    %1763 = vmatpush1.bf16.msra.mxu0 0
    %1764 = vmatprep.subr.bf16.mxu0 0
    %1765 = vmatpush1.bf16.msra.mxu0 0
    %1766 = vmatprep.subr.bf16.mxu0 0
    %1767 = vmatpush1.bf16.msra.mxu0 0
    %1768 = vmatprep.subr.bf16.mxu0 0
    %1769 = vmatpush1.bf16.msra.mxu0 0
    %1770 = vmatprep.subr.bf16.mxu0 0
    %1771 = vmatpush1.bf16.msra.mxu0 0
    %1772 = vmatprep.subr.bf16.mxu0 0
    %1773 = vmatpush1.bf16.msra.mxu0 0
    %1774 = vmatprep.subr.bf16.mxu0 0
    %1775 = vmatpush1.bf16.msra.mxu0 0
    %1776 = vmatprep.subr.bf16.mxu0 0
    %1777 = vmatpush1.bf16.msra.mxu0 0
    %1778 = vmatprep.subr.bf16.mxu0 0
    %1779 = vmatpush1.bf16.msra.mxu0 0
    %1780 = vmatprep.mubr.bf16.mxu0 0
    %1781 = vmatmul.mubr.bf16.gmra.mrb[0].mxu0 %v1746
    %v1782 = vpop.f32.mrb[0].mxu0
    %v1783 = vadd.f32 0.0, %v1782
    %v1784 = vpop.f32.mrb[0].mxu0
    %v1785 = vpop.f32.mrb[0].mxu0
    %v1786 = vadd.f32 0.0, %v1785
    %v1787 = vpop.f32.mrb[0].mxu0
    %1788 = vdwg.mxu0
    %v1789 = vpack.c.bf16 %v1786, %v1783
    %v1791 = vsel %vm204, %v1789, 0
    %v1794 = vsel %vm742, %v1314, 0
    %1796 = vmatprep.subr.bf16.mxu0 0
    %1797 = vmatpush1.bf16.msra.mxu0 %v1794
    %1798 = vmatprep.subr.bf16.mxu0 0
    %1799 = vmatpush1.bf16.msra.mxu0 0
    %1800 = vmatprep.subr.bf16.mxu0 0
    %1801 = vmatpush1.bf16.msra.mxu0 0
    %1802 = vmatprep.subr.bf16.mxu0 0
    %1803 = vmatpush1.bf16.msra.mxu0 0
    %1804 = vmatprep.subr.bf16.mxu0 0
    %1805 = vmatpush1.bf16.msra.mxu0 0
    %1806 = vmatprep.subr.bf16.mxu0 0
    %1807 = vmatpush1.bf16.msra.mxu0 0
    %1808 = vmatprep.subr.bf16.mxu0 0
    %1809 = vmatpush1.bf16.msra.mxu0 0
    %1810 = vmatprep.subr.bf16.mxu0 0
    %1811 = vmatpush1.bf16.msra.mxu0 0
    %1812 = vmatprep.subr.bf16.mxu0 0
    %1813 = vmatpush1.bf16.msra.mxu0 0
    %1814 = vmatprep.subr.bf16.mxu0 0
    %1815 = vmatpush1.bf16.msra.mxu0 0
    %1816 = vmatprep.subr.bf16.mxu0 0
    %1817 = vmatpush1.bf16.msra.mxu0 0
    %1818 = vmatprep.subr.bf16.mxu0 0
    %1819 = vmatpush1.bf16.msra.mxu0 0
    %1820 = vmatprep.subr.bf16.mxu0 0
    %1821 = vmatpush1.bf16.msra.mxu0 0
    %1822 = vmatprep.subr.bf16.mxu0 0
    %1823 = vmatpush1.bf16.msra.mxu0 0
    %1824 = vmatprep.subr.bf16.mxu0 0
    %1825 = vmatpush1.bf16.msra.mxu0 0
    %1826 = vmatprep.subr.bf16.mxu0 0
    %1827 = vmatpush1.bf16.msra.mxu0 0
    %1828 = vmatprep.mubr.bf16.mxu0 0
    %1829 = vmatmul.mubr.bf16.gmra.mrb[0].mxu0 %v1791
    %v1830 = vpop.f32.mrb[0].mxu0
    %v1831 = vadd.f32 0.0, %v1830
    %v1832 = vpop.f32.mrb[0].mxu0
    %v1833 = vpop.f32.mrb[0].mxu0
    %v1834 = vadd.f32 0.0, %v1833
    %v1835 = vpop.f32.mrb[0].mxu0
    %1836 = vdwg.mxu0
    %v1837 = vadd.f32 %v1657, %v1831
    %v1838 = vadd.f32 %v1660, %v1834
    %1839 = vrot.lane.b32.xlu0 %v1311, 104
    %v1840 = vpop.permute.xlu0 %1839
    %1841 = vrot.lane.b32.xlu0 %v1312, 104
    %v1842 = vpop.permute.xlu0 %1841
    %v1844 = vsel %vm204, %v1840, 0
    %v1847 = vsel %vm204, %v1842, 0
    %1849 = vmatprep.subr.bf16.mxu0 0
    %1850 = vmatpush1.bf16.xpose.msra.mxu0 %v1847
    %1851 = vmatprep.subr.bf16.mxu0 0
    %1852 = vmatpush1.bf16.xpose.msra.mxu0 0
    %1853 = vmatprep.subr.bf16.mxu0 0
    %1854 = vmatpush1.bf16.xpose.msra.mxu0 0
    %1855 = vmatprep.subr.bf16.mxu0 0
    %1856 = vmatpush1.bf16.xpose.msra.mxu0 0
    %1857 = vmatprep.subr.bf16.mxu0 0
    %1858 = vmatpush1.bf16.xpose.msra.mxu0 0
    %1859 = vmatprep.subr.bf16.mxu0 0
    %1860 = vmatpush1.bf16.xpose.msra.mxu0 0
    %1861 = vmatprep.subr.bf16.mxu0 0
    %1862 = vmatpush1.bf16.xpose.msra.mxu0 0
    %1863 = vmatprep.subr.bf16.mxu0 0
    %1864 = vmatpush1.bf16.xpose.msra.mxu0 0
    %1865 = vmatprep.subr.bf16.mxu0 0
    %1866 = vmatpush1.bf16.xpose.msra.mxu0 0
    %1867 = vmatprep.subr.bf16.mxu0 0
    %1868 = vmatpush1.bf16.xpose.msra.mxu0 0
    %1869 = vmatprep.subr.bf16.mxu0 0
    %1870 = vmatpush1.bf16.xpose.msra.mxu0 0
    %1871 = vmatprep.subr.bf16.mxu0 0
    %1872 = vmatpush1.bf16.xpose.msra.mxu0 0
    %1873 = vmatprep.subr.bf16.mxu0 0
    %1874 = vmatpush1.bf16.xpose.msra.mxu0 0
    %1875 = vmatprep.subr.bf16.mxu0 0
    %1876 = vmatpush1.bf16.xpose.msra.mxu0 0
    %1877 = vmatprep.subr.bf16.mxu0 0
    %1878 = vmatpush1.bf16.xpose.msra.mxu0 0
    %1879 = vmatprep.subr.bf16.mxu0 0
    %1880 = vmatpush1.bf16.xpose.msra.mxu0 0
    %1881 = vmatprep.mubr.bf16.mxu0 0
    %1882 = vmatmul.mubr.bf16.gmra.mrb[0].mxu0 %v1844
    %v1883 = vpop.f32.mrb[0].mxu0
    %v1884 = vadd.f32 0.0, %v1883
    %v1885 = vpop.f32.mrb[0].mxu0
    %v1886 = vpop.f32.mrb[0].mxu0
    %v1887 = vadd.f32 0.0, %v1886
    %v1888 = vpop.f32.mrb[0].mxu0
    %1889 = vdwg.mxu0
    %v1890 = vmul.f32 %v1884, 0.35355338
    %v1891 = vmul.f32 %v1887, 0.35355338
    %v1892 = vadd.f32 %v1890, %v224
    %v1893 = vadd.f32 %v1891, %v239
    %v1894 = vsel %vm539, %v1892, -inf
    %1895 = vmax.xlane.f32.xlu0 %v1894
    %v1896 = vpop.xlane.xlu0 %1895
    %v1897 = vsel %vm539, %v1893, -inf
    %1898 = vmax.xlane.f32.xlu0 %v1897
    %v1899 = vpop.xlane.xlu0 %1898
    %v1900 = vsub.f32 %v1892, %v1896
    %v1901 = vsub.f32 %v1893, %v1899
    %v1902 = vmul.f32 %v1900, 1.442695
    %v1903 = vpow.pop %v1902
    %v1904 = vmul.f32 %v1901, 1.442695
    %v1905 = vpow.pop %v1904
    %v1906 = vsel %vm539, %v1903, 0.0
    %1907 = vadd.xlane.f32.xlu0 %v1906
    %v1908 = vpop.xlane.xlu0 %1907
    %v1909 = vsel %vm539, %v1905, 0.0
    %1910 = vadd.xlane.f32.xlu0 %v1909
    %v1911 = vpop.xlane.xlu0 %1910
    %v1912 = vrcp.pop %v1908
    %v1913 = vrcp.pop %v1911
    %v1914 = vmul.f32 %v1903, %v1912
    %v1915 = vmul.f32 %v1905, %v1913
    %v1916 = vadd.f32 %v1914, %v1915
    %v1917 = vpack.c.bf16 %v1915, %v1914
    %1918 = vrot.lane.b32.xlu0 %v1312, 72
    %v1919 = vpop.permute.xlu0 %1918
    %v1922 = vsel %vm539, %v1917, 0
    %1924 = vmatprep.subr.bf16.mxu0 0
    %1925 = vmatpush1.bf16.msra.mxu0 %v1919
    %1926 = vmatprep.subr.bf16.mxu0 0
    %1927 = vmatpush1.bf16.msra.mxu0 0
    %1928 = vmatprep.subr.bf16.mxu0 0
    %1929 = vmatpush1.bf16.msra.mxu0 0
    %1930 = vmatprep.subr.bf16.mxu0 0
    %1931 = vmatpush1.bf16.msra.mxu0 0
    %1932 = vmatprep.subr.bf16.mxu0 0
    %1933 = vmatpush1.bf16.msra.mxu0 0
    %1934 = vmatprep.subr.bf16.mxu0 0
    %1935 = vmatpush1.bf16.msra.mxu0 0
    %1936 = vmatprep.subr.bf16.mxu0 0
    %1937 = vmatpush1.bf16.msra.mxu0 0
    %1938 = vmatprep.subr.bf16.mxu0 0
    %1939 = vmatpush1.bf16.msra.mxu0 0
    %1940 = vmatprep.subr.bf16.mxu0 0
    %1941 = vmatpush1.bf16.msra.mxu0 0
    %1942 = vmatprep.subr.bf16.mxu0 0
    %1943 = vmatpush1.bf16.msra.mxu0 0
    %1944 = vmatprep.subr.bf16.mxu0 0
    %1945 = vmatpush1.bf16.msra.mxu0 0
    %1946 = vmatprep.subr.bf16.mxu0 0
    %1947 = vmatpush1.bf16.msra.mxu0 0
    %1948 = vmatprep.subr.bf16.mxu0 0
    %1949 = vmatpush1.bf16.msra.mxu0 0
    %1950 = vmatprep.subr.bf16.mxu0 0
    %1951 = vmatpush1.bf16.msra.mxu0 0
    %1952 = vmatprep.subr.bf16.mxu0 0
    %1953 = vmatpush1.bf16.msra.mxu0 0
    %1954 = vmatprep.subr.bf16.mxu0 0
    %1955 = vmatpush1.bf16.msra.mxu0 0
    %1956 = vmatprep.mubr.bf16.mxu0 0
    %1957 = vmatmul.mubr.bf16.gmra.mrb[0].mxu0 %v1922
    %v1958 = vpop.f32.mrb[0].mxu0
    %v1959 = vadd.f32 0.0, %v1958
    %v1960 = vpop.f32.mrb[0].mxu0
    %v1961 = vpop.f32.mrb[0].mxu0
    %v1962 = vadd.f32 0.0, %v1961
    %v1963 = vpop.f32.mrb[0].mxu0
    %1964 = vdwg.mxu0
    %v1965 = vpack.c.bf16 %v1962, %v1959
    %v1967 = vrot.slane %v1314, 4
    %v1969 = vsel %vm204, %v1965, 0
    %v1972 = vsel %vm742, %v1967, 0
    %1974 = vmatprep.subr.bf16.mxu0 0
    %1975 = vmatpush1.bf16.msra.mxu0 %v1972
    %1976 = vmatprep.subr.bf16.mxu0 0
    %1977 = vmatpush1.bf16.msra.mxu0 0
    %1978 = vmatprep.subr.bf16.mxu0 0
    %1979 = vmatpush1.bf16.msra.mxu0 0
    %1980 = vmatprep.subr.bf16.mxu0 0
    %1981 = vmatpush1.bf16.msra.mxu0 0
    %1982 = vmatprep.subr.bf16.mxu0 0
    %1983 = vmatpush1.bf16.msra.mxu0 0
    %1984 = vmatprep.subr.bf16.mxu0 0
    %1985 = vmatpush1.bf16.msra.mxu0 0
    %1986 = vmatprep.subr.bf16.mxu0 0
    %1987 = vmatpush1.bf16.msra.mxu0 0
    %1988 = vmatprep.subr.bf16.mxu0 0
    %1989 = vmatpush1.bf16.msra.mxu0 0
    %1990 = vmatprep.subr.bf16.mxu0 0
    %1991 = vmatpush1.bf16.msra.mxu0 0
    %1992 = vmatprep.subr.bf16.mxu0 0
    %1993 = vmatpush1.bf16.msra.mxu0 0
    %1994 = vmatprep.subr.bf16.mxu0 0
    %1995 = vmatpush1.bf16.msra.mxu0 0
    %1996 = vmatprep.subr.bf16.mxu0 0
    %1997 = vmatpush1.bf16.msra.mxu0 0
    %1998 = vmatprep.subr.bf16.mxu0 0
    %1999 = vmatpush1.bf16.msra.mxu0 0
    %2000 = vmatprep.subr.bf16.mxu0 0
    %2001 = vmatpush1.bf16.msra.mxu0 0
    %2002 = vmatprep.subr.bf16.mxu0 0
    %2003 = vmatpush1.bf16.msra.mxu0 0
    %2004 = vmatprep.subr.bf16.mxu0 0
    %2005 = vmatpush1.bf16.msra.mxu0 0
    %2006 = vmatprep.mubr.bf16.mxu0 0
    %2007 = vmatmul.mubr.bf16.gmra.mrb[0].mxu0 %v1969
    %v2008 = vpop.f32.mrb[0].mxu0
    %v2009 = vadd.f32 0.0, %v2008
    %v2010 = vpop.f32.mrb[0].mxu0
    %v2011 = vpop.f32.mrb[0].mxu0
    %v2012 = vadd.f32 0.0, %v2011
    %v2013 = vpop.f32.mrb[0].mxu0
    %2014 = vdwg.mxu0
    %v2015 = vadd.f32 %v1837, %v2009
    %v2016 = vadd.f32 %v1838, %v2012
    %2018 = vrot.lane.b32.xlu0 %v1517, 16
    %v2019 = vpop.permute.xlu0 %2018
    %2022 = vrot.lane.b32.xlu0 %v1740, 32
    %v2023 = vpop.permute.xlu0 %2022
    %2026 = vrot.lane.b32.xlu0 %v1916, 48
    %v2027 = vpop.permute.xlu0 %2026
    %v2029 = vsel %vm539, %v1388, %v2019
    %v2030 = vsel %vm263, %v2029, %v2023
    %vm2031 = vcmask 392192
    %v2032 = vsel %vm2031, %v2030, %v2027
    %v2034 = vlaneseq
    %v2035 = vshrl.u32 %v2034, 7
    %v2036 = vsub.s32 0, %v2035
    %v2037 = vrot.slane %v1310, %v2036
    %v2039 = vadd.f32 %v2015, %v2037
    %v2040 = vadd.f32 %v2016, %v2037
    %v2041 = vadd.f32 %v1194, %v2039
    %v2042 = vadd.f32 %v1195, %v2040
    %vm2043 = vcmask 523264
    %2044 = vst.msk [vmem:[#allocation18] sm:$0xff] %vm2043, %v2032
    %v2045 = vsel %vm263, %v2041, 0.0
    %2046 = vadd.xlane.f32.xlu0 %v2045
    %v2047 = vpop.xlane.xlu0 %2046
    %v2048 = vsel %vm263, %v2042, 0.0
    %2049 = vadd.xlane.f32.xlu0 %v2048
    %v2050 = vpop.xlane.xlu0 %2049
    %v2051 = vmul.f32 %v2047, %v372
    %v2052 = vmul.f32 %v2050, %v372
    %v2053 = vsub.f32 %v2041, %v2051
    %v2054 = vsub.f32 %v2042, %v2052
    %v2055 = vmul.f32 %v2053, %v2053
    %v2056 = vmul.f32 %v2054, %v2054
    %v2057 = vsel %vm263, %v2055, 0.0
    %2058 = vadd.xlane.f32.xlu0 %v2057
    %v2059 = vpop.xlane.xlu0 %2058
    %v2060 = vsel %vm263, %v2056, 0.0
    %2061 = vadd.xlane.f32.xlu0 %v2060
    %v2062 = vpop.xlane.xlu0 %2061
    %v2063 = vmul.f32 %v2059, 0.032258064
    %v2064 = vmul.f32 %v2062, 0.032258064
    %v2065 = vrsqrt.pop %v2063
    %v2066 = vmul.f32 %v2063, %v2065
    %vm2067 = vcmp.eq.f32.partialorder %v2063, inf
    %v2068 = vsel %vm2067, %v2063, %v2066
    %vm2069 = vcmp.eq.f32.partialorder %v2063, 0.0
    %v2070 = vand.u32 %v2063, 2147483648
    %v2071 = vsel %vm2069, %v2070, %v2068
    %v2072 = vrsqrt.pop %v2064
    %v2073 = vmul.f32 %v2064, %v2072
    %vm2074 = vcmp.eq.f32.partialorder %v2064, inf
    %v2075 = vsel %vm2074, %v2064, %v2073
    %vm2076 = vcmp.eq.f32.partialorder %v2064, 0.0
    %v2077 = vand.u32 %v2064, 2147483648
    %v2078 = vsel %vm2076, %v2077, %v2075
    %v2079 = vadd.f32 %v2071, 1e-06
    %v2080 = vadd.f32 %v2078, 1e-06
    %v2081 = vrcp.pop %v2079
    %v2082 = vrcp.pop %v2080
    %v2083 = vlaneseq
    %v2084 = vshrl.u32 %v2083, 7
    %v2085 = vsub.s32 2, %v2084
    %v2086 = vrot.slane %v364, %v2085
    %v2087 = vmul.f32 %v2086, %v2053
    %v2088 = vmul.f32 %v2086, %v2054
    %v2089 = vmul.f32 %v2087, %v2081
    %v2090 = vmul.f32 %v2088, %v2082
    %v2091 = vlaneseq
    %v2092 = vshrl.u32 %v2091, 7
    %v2093 = vsub.s32 2, %v2092
    %v2094 = vrot.slane %v365, %v2093
    %v2095 = vadd.f32 %v2089, %v2094
    %v2096 = vadd.f32 %v2090, %v2094
    %v2097 = vpack.c.bf16 %v2096, %v2095
    %v2098 = vld [vmem:[#allocation14] sm:$0xff]
    %v2099 = vld [vmem:[#allocation14 + $0x8] sm:$0xff]
    %v2100 = vld [vmem:[#allocation14 + $0x10] sm:$0xff]
    %v2101 = vld [vmem:[#allocation14 + $0x18] sm:$0xff]
    %v2102 = vpack.c.bf16 %v2099, %v2098
    %v2103 = vpack.c.bf16 %v2101, %v2100
    %v2104 = vld [vmem:[#allocation16] sm:$0x1]
    %v2106 = vlaneseq
    %v2107 = vshrl.u32 %v2106, 7
    %v2108 = vsub.s32 0, %v2107
    %v2109 = vrot.slane %v2104, %v2108
    %v2112 = vsel %vm263, %v2097, 0
    %2114 = vmatprep.subr.bf16.mxu0 0
    %2115 = vmatpush1.bf16.msra.mxu0 %v2102
    %2116 = vmatprep.subr.bf16.mxu0 0
    %2117 = vmatpush1.bf16.msra.mxu0 %v2103
    %2118 = vmatprep.subr.bf16.mxu0 0
    %2119 = vmatpush1.bf16.msra.mxu0 0
    %2120 = vmatprep.subr.bf16.mxu0 0
    %2121 = vmatpush1.bf16.msra.mxu0 0
    %2122 = vmatprep.subr.bf16.mxu0 0
    %2123 = vmatpush1.bf16.msra.mxu0 0
    %2124 = vmatprep.subr.bf16.mxu0 0
    %2125 = vmatpush1.bf16.msra.mxu0 0
    %2126 = vmatprep.subr.bf16.mxu0 0
    %2127 = vmatpush1.bf16.msra.mxu0 0
    %2128 = vmatprep.subr.bf16.mxu0 0
    %2129 = vmatpush1.bf16.msra.mxu0 0
    %2130 = vmatprep.subr.bf16.mxu0 0
    %2131 = vmatpush1.bf16.msra.mxu0 0
    %2132 = vmatprep.subr.bf16.mxu0 0
    %2133 = vmatpush1.bf16.msra.mxu0 0
    %2134 = vmatprep.subr.bf16.mxu0 0
    %2135 = vmatpush1.bf16.msra.mxu0 0
    %2136 = vmatprep.subr.bf16.mxu0 0
    %2137 = vmatpush1.bf16.msra.mxu0 0
    %2138 = vmatprep.subr.bf16.mxu0 0
    %2139 = vmatpush1.bf16.msra.mxu0 0
    %2140 = vmatprep.subr.bf16.mxu0 0
    %2141 = vmatpush1.bf16.msra.mxu0 0
    %2142 = vmatprep.subr.bf16.mxu0 0
    %2143 = vmatpush1.bf16.msra.mxu0 0
    %2144 = vmatprep.subr.bf16.mxu0 0
    %2145 = vmatpush1.bf16.msra.mxu0 0
    %2146 = vmatprep.mubr.bf16.mxu0 0
    %2147 = vmatmul.mubr.bf16.gmra.mrb[0].mxu0 %v2112
    %v2148 = vpop.f32.mrb[0].mxu0
    %v2149 = vadd.f32 %v2109, %v2148
    %v2150 = vpop.f32.mrb[0].mxu0
    %v2151 = vpop.f32.mrb[0].mxu0
    %v2152 = vadd.f32 %v2109, %v2151
    %v2153 = vpop.f32.mrb[0].mxu0
    %2154 = vdwg.mxu0
    %v2155 = vmax.f32 %v2149, 0.0
    %v2156 = vmax.f32 %v2152, 0.0
    %v2157 = vpack.c.bf16 %v2156, %v2155
    %v2158 = vld [vmem:[%s19] sm:$0xff]
    %v2159 = vld [vmem:[%s19 + $0x8] sm:$0xff]
    %v2160 = vld [vmem:[%s19 + $0x10] sm:$0xff]
    %v2161 = vld [vmem:[%s19 + $0x18] sm:$0xff]
    %v2162 = vld [vmem:[%s19 + $0x20] sm:$0xff]
    %v2163 = vld [vmem:[%s19 + $0x28] sm:$0xff]
    %v2164 = vld [vmem:[%s19 + $0x30] sm:$0xff]
    %v2165 = vld [vmem:[%s19 + $0x38] sm:$0xff]
    %v2166 = vld [vmem:[%s19 + $0x40] sm:$0xff]
    %v2167 = vld [vmem:[%s19 + $0x48] sm:$0xff]
    %v2168 = vld [vmem:[%s19 + $0x50] sm:$0xff]
    %v2169 = vld [vmem:[%s19 + $0x58] sm:$0xff]
    %v2170 = vld [vmem:[%s19 + $0x60] sm:$0xff]
    %v2171 = vld [vmem:[%s19 + $0x68] sm:$0xff]
    %v2172 = vld [vmem:[%s19 + $0x70] sm:$0xff]
    %v2173 = vld [vmem:[%s19 + $0x78] sm:$0xff]
    %v2174 = vpack.c.bf16 %v2159, %v2158
    %v2175 = vpack.c.bf16 %v2161, %v2160
    %v2176 = vpack.c.bf16 %v2163, %v2162
    %v2177 = vpack.c.bf16 %v2165, %v2164
    %v2178 = vpack.c.bf16 %v2167, %v2166
    %v2179 = vpack.c.bf16 %v2169, %v2168
    %v2180 = vpack.c.bf16 %v2171, %v2170
    %v2181 = vpack.c.bf16 %v2173, %v2172
    %2182 = vmatprep.subr.bf16.mxu0 0
    %2183 = vmatpush1.bf16.msra.mxu0 %v2174
    %2184 = vmatprep.subr.bf16.mxu0 0
    %2185 = vmatpush1.bf16.msra.mxu0 %v2175
    %2186 = vmatprep.subr.bf16.mxu0 0
    %2187 = vmatpush1.bf16.msra.mxu0 %v2176
    %2188 = vmatprep.subr.bf16.mxu0 0
    %2189 = vmatpush1.bf16.msra.mxu0 %v2177
    %2190 = vmatprep.subr.bf16.mxu0 0
    %2191 = vmatpush1.bf16.msra.mxu0 %v2178
    %2192 = vmatprep.subr.bf16.mxu0 0
    %2193 = vmatpush1.bf16.msra.mxu0 %v2179
    %2194 = vmatprep.subr.bf16.mxu0 0
    %2195 = vmatpush1.bf16.msra.mxu0 %v2180
    %2196 = vmatprep.subr.bf16.mxu0 0
    %2197 = vmatpush1.bf16.msra.mxu0 %v2181
    %2198 = vmatprep.subr.bf16.mxu0 0
    %2199 = vmatpush1.bf16.msra.mxu0 0
    %2200 = vmatprep.subr.bf16.mxu0 0
    %2201 = vmatpush1.bf16.msra.mxu0 0
    %2202 = vmatprep.subr.bf16.mxu0 0
    %2203 = vmatpush1.bf16.msra.mxu0 0
    %2204 = vmatprep.subr.bf16.mxu0 0
    %2205 = vmatpush1.bf16.msra.mxu0 0
    %2206 = vmatprep.subr.bf16.mxu0 0
    %2207 = vmatpush1.bf16.msra.mxu0 0
    %2208 = vmatprep.subr.bf16.mxu0 0
    %2209 = vmatpush1.bf16.msra.mxu0 0
    %2210 = vmatprep.subr.bf16.mxu0 0
    %2211 = vmatpush1.bf16.msra.mxu0 0
    %2212 = vmatprep.subr.bf16.mxu0 0
    %2213 = vmatpush1.bf16.msra.mxu0 0
    %2214 = vmatprep.mubr.bf16.mxu0 0
    %2215 = vmatmul.mubr.bf16.gmra.mrb[0].mxu0 %v2157
    %v2216 = vpop.f32.mrb[0].mxu0
    %v2217 = vadd.f32 0.0, %v2216
    %v2218 = vpop.f32.mrb[0].mxu0
    %v2219 = vpop.f32.mrb[0].mxu0
    %v2220 = vadd.f32 0.0, %v2219
    %v2221 = vpop.f32.mrb[0].mxu0
    %2222 = vdwg.mxu0
    %v2223 = vadd.f32 %v2041, %v2217
    %v2224 = vadd.f32 %v2042, %v2220
    %v2225 = vld [vmem:[%s20] sm:$0x1]
    %v2227 = vlaneseq
    %v2228 = vshrl.u32 %v2227, 7
    %v2229 = vsub.s32 0, %v2228
    %v2230 = vrot.slane %v2225, %v2229
    %v2232 = vadd.f32 %v2223, %v2230
    %v2233 = vadd.f32 %v2224, %v2230
    %s2234 = scalar_lea.vmem %s5, 4
    %v2235 = vld [vmem:[%s2234] sm:$0x7]
    %s2236 = scalar_lea.vmem %s6, 4
    %v2237 = vld [vmem:[%s2236] sm:$0x7]
    %v2238 = vsel %vm263, %v2232, 0.0
    %2239 = vadd.xlane.f32.xlu0 %v2238
    %v2240 = vpop.xlane.xlu0 %2239
    %v2241 = vsel %vm263, %v2233, 0.0
    %2242 = vadd.xlane.f32.xlu0 %v2241
    %v2243 = vpop.xlane.xlu0 %2242
    %v2244 = vmul.f32 %v2240, %v372
    %v2245 = vmul.f32 %v2243, %v372
    %v2246 = vsub.f32 %v2232, %v2244
    %v2247 = vsub.f32 %v2233, %v2245
    %v2248 = vmul.f32 %v2246, %v2246
    %v2249 = vmul.f32 %v2247, %v2247
    %v2250 = vsel %vm263, %v2248, 0.0
    %2251 = vadd.xlane.f32.xlu0 %v2250
    %v2252 = vpop.xlane.xlu0 %2251
    %v2253 = vsel %vm263, %v2249, 0.0
    %2254 = vadd.xlane.f32.xlu0 %v2253
    %v2255 = vpop.xlane.xlu0 %2254
    %v2256 = vmul.f32 %v2252, 0.032258064
    %v2257 = vmul.f32 %v2255, 0.032258064
    %v2258 = vrsqrt.pop %v2256
    %v2259 = vmul.f32 %v2256, %v2258
    %vm2260 = vcmp.eq.f32.partialorder %v2256, inf
    %v2261 = vsel %vm2260, %v2256, %v2259
    %vm2262 = vcmp.eq.f32.partialorder %v2256, 0.0
    %v2263 = vand.u32 %v2256, 2147483648
    %v2264 = vsel %vm2262, %v2263, %v2261
    %v2265 = vrsqrt.pop %v2257
    %v2266 = vmul.f32 %v2257, %v2265
    %vm2267 = vcmp.eq.f32.partialorder %v2257, inf
    %v2268 = vsel %vm2267, %v2257, %v2266
    %vm2269 = vcmp.eq.f32.partialorder %v2257, 0.0
    %v2270 = vand.u32 %v2257, 2147483648
    %v2271 = vsel %vm2269, %v2270, %v2268
    %v2272 = vadd.f32 %v2264, 1e-06
    %v2273 = vadd.f32 %v2271, 1e-06
    %v2274 = vrcp.pop %v2272
    %v2275 = vrcp.pop %v2273
    %v2276 = vlaneseq
    %v2277 = vshrl.u32 %v2276, 7
    %v2278 = vsub.s32 0, %v2277
    %v2279 = vrot.slane %v2235, %v2278
    %v2280 = vmul.f32 %v2279, %v2246
    %v2281 = vmul.f32 %v2279, %v2247
    %v2282 = vmul.f32 %v2280, %v2274
    %v2283 = vmul.f32 %v2281, %v2275
    %v2284 = vlaneseq
    %v2285 = vshrl.u32 %v2284, 7
    %v2286 = vsub.s32 0, %v2285
    %v2287 = vrot.slane %v2237, %v2286
    %v2288 = vadd.f32 %v2282, %v2287
    %v2289 = vadd.f32 %v2283, %v2287
    %v2290 = vpack.c.bf16 %v2289, %v2288
    %s2291 = scalar_lea.vmem %s7, 32
    %v2292 = vld [vmem:[%s2291] sm:$0xff]
    %v2293 = vld [vmem:[%s2291 + $0x8] sm:$0xff]
    %v2294 = vld [vmem:[%s2291 + $0x10] sm:$0xff]
    %v2295 = vld [vmem:[%s2291 + $0x18] sm:$0xff]
    %v2296 = vpack.c.bf16 %v2293, %v2292
    %v2297 = vpack.c.bf16 %v2295, %v2294
    %s2298 = scalar_lea.vmem [#allocation7], 1
    %v2299 = vld [vmem:[%s2298] sm:$0x1]
    %v2301 = vlaneseq
    %v2302 = vshrl.u32 %v2301, 7
    %v2303 = vsub.s32 0, %v2302
    %v2304 = vrot.slane %v2299, %v2303
    %v2307 = vsel %vm263, %v2290, 0
    %2309 = vmatprep.subr.bf16.mxu0 0
    %2310 = vmatpush1.bf16.msra.mxu0 %v2296
    %2311 = vmatprep.subr.bf16.mxu0 0
    %2312 = vmatpush1.bf16.msra.mxu0 %v2297
    %2313 = vmatprep.subr.bf16.mxu0 0
    %2314 = vmatpush1.bf16.msra.mxu0 0
    %2315 = vmatprep.subr.bf16.mxu0 0
    %2316 = vmatpush1.bf16.msra.mxu0 0
    %2317 = vmatprep.subr.bf16.mxu0 0
    %2318 = vmatpush1.bf16.msra.mxu0 0
    %2319 = vmatprep.subr.bf16.mxu0 0
    %2320 = vmatpush1.bf16.msra.mxu0 0
    %2321 = vmatprep.subr.bf16.mxu0 0
    %2322 = vmatpush1.bf16.msra.mxu0 0
    %2323 = vmatprep.subr.bf16.mxu0 0
    %2324 = vmatpush1.bf16.msra.mxu0 0
    %2325 = vmatprep.subr.bf16.mxu0 0
    %2326 = vmatpush1.bf16.msra.mxu0 0
    %2327 = vmatprep.subr.bf16.mxu0 0
    %2328 = vmatpush1.bf16.msra.mxu0 0
    %2329 = vmatprep.subr.bf16.mxu0 0
    %2330 = vmatpush1.bf16.msra.mxu0 0
    %2331 = vmatprep.subr.bf16.mxu0 0
    %2332 = vmatpush1.bf16.msra.mxu0 0
    %2333 = vmatprep.subr.bf16.mxu0 0
    %2334 = vmatpush1.bf16.msra.mxu0 0
    %2335 = vmatprep.subr.bf16.mxu0 0
    %2336 = vmatpush1.bf16.msra.mxu0 0
    %2337 = vmatprep.subr.bf16.mxu0 0
    %2338 = vmatpush1.bf16.msra.mxu0 0
    %2339 = vmatprep.subr.bf16.mxu0 0
    %2340 = vmatpush1.bf16.msra.mxu0 0
    %2341 = vmatprep.mubr.bf16.mxu0 0
    %2342 = vmatmul.mubr.bf16.gmra.mrb[0].mxu0 %v2307
    %v2343 = vpop.f32.mrb[0].mxu0
    %v2344 = vadd.f32 %v2304, %v2343
    %v2345 = vpop.f32.mrb[0].mxu0
    %v2346 = vpop.f32.mrb[0].mxu0
    %v2347 = vadd.f32 %v2304, %v2346
    %v2348 = vpop.f32.mrb[0].mxu0
    %2349 = vdwg.mxu0
    %s2350 = scalar_lea.vmem %s9, 32
    %v2351 = vld [vmem:[%s2350] sm:$0xff]
    %v2352 = vld [vmem:[%s2350 + $0x8] sm:$0xff]
    %v2353 = vld [vmem:[%s2350 + $0x10] sm:$0xff]
    %v2354 = vld [vmem:[%s2350 + $0x18] sm:$0xff]
    %s2355 = scalar_lea.vmem [#allocation8], 1
    %v2356 = vld [vmem:[%s2355] sm:$0x1]
    %v2357 = vpack.c.bf16 %v2347, %v2344
    %v2358 = vpack.c.bf16 %v2352, %v2351
    %v2359 = vpack.c.bf16 %v2354, %v2353
    %2361 = vrot.lane.b32.xlu0 %v2357, 96
    %v2362 = vpop.permute.xlu0 %2361
    %v2364 = vsel %vm204, %v2357, 0
    %v2367 = vsel %vm204, %v2362, 0
    %2369 = vmatprep.subr.bf16.mxu0 0
    %2370 = vmatpush1.bf16.xpose.msra.mxu0 %v2367
    %2371 = vmatprep.subr.bf16.mxu0 0
    %2372 = vmatpush1.bf16.xpose.msra.mxu0 0
    %2373 = vmatprep.subr.bf16.mxu0 0
    %2374 = vmatpush1.bf16.xpose.msra.mxu0 0
    %2375 = vmatprep.subr.bf16.mxu0 0
    %2376 = vmatpush1.bf16.xpose.msra.mxu0 0
    %2377 = vmatprep.subr.bf16.mxu0 0
    %2378 = vmatpush1.bf16.xpose.msra.mxu0 0
    %2379 = vmatprep.subr.bf16.mxu0 0
    %2380 = vmatpush1.bf16.xpose.msra.mxu0 0
    %2381 = vmatprep.subr.bf16.mxu0 0
    %2382 = vmatpush1.bf16.xpose.msra.mxu0 0
    %2383 = vmatprep.subr.bf16.mxu0 0
    %2384 = vmatpush1.bf16.xpose.msra.mxu0 0
    %2385 = vmatprep.subr.bf16.mxu0 0
    %2386 = vmatpush1.bf16.xpose.msra.mxu0 0
    %2387 = vmatprep.subr.bf16.mxu0 0
    %2388 = vmatpush1.bf16.xpose.msra.mxu0 0
    %2389 = vmatprep.subr.bf16.mxu0 0
    %2390 = vmatpush1.bf16.xpose.msra.mxu0 0
    %2391 = vmatprep.subr.bf16.mxu0 0
    %2392 = vmatpush1.bf16.xpose.msra.mxu0 0
    %2393 = vmatprep.subr.bf16.mxu0 0
    %2394 = vmatpush1.bf16.xpose.msra.mxu0 0
    %2395 = vmatprep.subr.bf16.mxu0 0
    %2396 = vmatpush1.bf16.xpose.msra.mxu0 0
    %2397 = vmatprep.subr.bf16.mxu0 0
    %2398 = vmatpush1.bf16.xpose.msra.mxu0 0
    %2399 = vmatprep.subr.bf16.mxu0 0
    %2400 = vmatpush1.bf16.xpose.msra.mxu0 0
    %2401 = vmatprep.mubr.bf16.mxu0 0
    %2402 = vmatmul.mubr.bf16.gmra.mrb[0].mxu0 %v2364
    %v2403 = vpop.f32.mrb[0].mxu0
    %v2404 = vadd.f32 0.0, %v2403
    %v2405 = vpop.f32.mrb[0].mxu0
    %v2406 = vpop.f32.mrb[0].mxu0
    %v2407 = vadd.f32 0.0, %v2406
    %v2408 = vpop.f32.mrb[0].mxu0
    %2409 = vdwg.mxu0
    %v2410 = vmul.f32 %v2404, 0.35355338
    %v2411 = vmul.f32 %v2407, 0.35355338
    %v2412 = vadd.f32 %v2410, %v205
    %v2413 = vadd.f32 %v2411, %v214
    %v2414 = vsel %vm539, %v2412, -inf
    %2415 = vmax.xlane.f32.xlu0 %v2414
    %v2416 = vpop.xlane.xlu0 %2415
    %v2417 = vsel %vm539, %v2413, -inf
    %2418 = vmax.xlane.f32.xlu0 %v2417
    %v2419 = vpop.xlane.xlu0 %2418
    %v2420 = vsub.f32 %v2412, %v2416
    %v2421 = vsub.f32 %v2413, %v2419
    %v2422 = vmul.f32 %v2420, 1.442695
    %v2423 = vpow.pop %v2422
    %v2424 = vmul.f32 %v2421, 1.442695
    %v2425 = vpow.pop %v2424
    %v2426 = vsel %vm539, %v2423, 0.0
    %2427 = vadd.xlane.f32.xlu0 %v2426
    %v2428 = vpop.xlane.xlu0 %2427
    %v2429 = vsel %vm539, %v2425, 0.0
    %2430 = vadd.xlane.f32.xlu0 %v2429
    %v2431 = vpop.xlane.xlu0 %2430
    %v2432 = vrcp.pop %v2428
    %v2433 = vrcp.pop %v2431
    %v2434 = vmul.f32 %v2423, %v2432
    %v2435 = vmul.f32 %v2425, %v2433
    %v2436 = vpack.c.bf16 %v2435, %v2434
    %2437 = vrot.lane.b32.xlu0 %v2357, 64
    %v2438 = vpop.permute.xlu0 %2437
    %v2441 = vsel %vm539, %v2436, 0
    %2443 = vmatprep.subr.bf16.mxu0 0
    %2444 = vmatpush1.bf16.msra.mxu0 %v2438
    %2445 = vmatprep.subr.bf16.mxu0 0
    %2446 = vmatpush1.bf16.msra.mxu0 0
    %2447 = vmatprep.subr.bf16.mxu0 0
    %2448 = vmatpush1.bf16.msra.mxu0 0
    %2449 = vmatprep.subr.bf16.mxu0 0
    %2450 = vmatpush1.bf16.msra.mxu0 0
    %2451 = vmatprep.subr.bf16.mxu0 0
    %2452 = vmatpush1.bf16.msra.mxu0 0
    %2453 = vmatprep.subr.bf16.mxu0 0
    %2454 = vmatpush1.bf16.msra.mxu0 0
    %2455 = vmatprep.subr.bf16.mxu0 0
    %2456 = vmatpush1.bf16.msra.mxu0 0
    %2457 = vmatprep.subr.bf16.mxu0 0
    %2458 = vmatpush1.bf16.msra.mxu0 0
    %2459 = vmatprep.subr.bf16.mxu0 0
    %2460 = vmatpush1.bf16.msra.mxu0 0
    %2461 = vmatprep.subr.bf16.mxu0 0
    %2462 = vmatpush1.bf16.msra.mxu0 0
    %2463 = vmatprep.subr.bf16.mxu0 0
    %2464 = vmatpush1.bf16.msra.mxu0 0
    %2465 = vmatprep.subr.bf16.mxu0 0
    %2466 = vmatpush1.bf16.msra.mxu0 0
    %2467 = vmatprep.subr.bf16.mxu0 0
    %2468 = vmatpush1.bf16.msra.mxu0 0
    %2469 = vmatprep.subr.bf16.mxu0 0
    %2470 = vmatpush1.bf16.msra.mxu0 0
    %2471 = vmatprep.subr.bf16.mxu0 0
    %2472 = vmatpush1.bf16.msra.mxu0 0
    %2473 = vmatprep.subr.bf16.mxu0 0
    %2474 = vmatpush1.bf16.msra.mxu0 0
    %2475 = vmatprep.mubr.bf16.mxu0 0
    %2476 = vmatmul.mubr.bf16.gmra.mrb[0].mxu0 %v2441
    %v2477 = vpop.f32.mrb[0].mxu0
    %v2478 = vadd.f32 0.0, %v2477
    %v2479 = vpop.f32.mrb[0].mxu0
    %v2480 = vpop.f32.mrb[0].mxu0
    %v2481 = vadd.f32 0.0, %v2480
    %v2482 = vpop.f32.mrb[0].mxu0
    %2483 = vdwg.mxu0
    %v2484 = vpack.c.bf16 %v2481, %v2478
    %2485 = vrot.lane.b32.xlu0 %v2357, 120
    %v2486 = vpop.permute.xlu0 %2485
    %2487 = vrot.lane.b32.xlu0 %v2357, 88
    %v2488 = vpop.permute.xlu0 %2487
    %v2490 = vsel %vm204, %v2486, 0
    %v2493 = vsel %vm204, %v2488, 0
    %2495 = vmatprep.subr.bf16.mxu0 0
    %2496 = vmatpush1.bf16.xpose.msra.mxu0 %v2493
    %2497 = vmatprep.subr.bf16.mxu0 0
    %2498 = vmatpush1.bf16.xpose.msra.mxu0 0
    %2499 = vmatprep.subr.bf16.mxu0 0
    %2500 = vmatpush1.bf16.xpose.msra.mxu0 0
    %2501 = vmatprep.subr.bf16.mxu0 0
    %2502 = vmatpush1.bf16.xpose.msra.mxu0 0
    %2503 = vmatprep.subr.bf16.mxu0 0
    %2504 = vmatpush1.bf16.xpose.msra.mxu0 0
    %2505 = vmatprep.subr.bf16.mxu0 0
    %2506 = vmatpush1.bf16.xpose.msra.mxu0 0
    %2507 = vmatprep.subr.bf16.mxu0 0
    %2508 = vmatpush1.bf16.xpose.msra.mxu0 0
    %2509 = vmatprep.subr.bf16.mxu0 0
    %2510 = vmatpush1.bf16.xpose.msra.mxu0 0
    %2511 = vmatprep.subr.bf16.mxu0 0
    %2512 = vmatpush1.bf16.xpose.msra.mxu0 0
    %2513 = vmatprep.subr.bf16.mxu0 0
    %2514 = vmatpush1.bf16.xpose.msra.mxu0 0
    %2515 = vmatprep.subr.bf16.mxu0 0
    %2516 = vmatpush1.bf16.xpose.msra.mxu0 0
    %2517 = vmatprep.subr.bf16.mxu0 0
    %2518 = vmatpush1.bf16.xpose.msra.mxu0 0
    %2519 = vmatprep.subr.bf16.mxu0 0
    %2520 = vmatpush1.bf16.xpose.msra.mxu0 0
    %2521 = vmatprep.subr.bf16.mxu0 0
    %2522 = vmatpush1.bf16.xpose.msra.mxu0 0
    %2523 = vmatprep.subr.bf16.mxu0 0
    %2524 = vmatpush1.bf16.xpose.msra.mxu0 0
    %2525 = vmatprep.subr.bf16.mxu0 0
    %2526 = vmatpush1.bf16.xpose.msra.mxu0 0
    %2527 = vmatprep.mubr.bf16.mxu0 0
    %2528 = vmatmul.mubr.bf16.gmra.mrb[0].mxu0 %v2490
    %v2529 = vpop.f32.mrb[0].mxu0
    %v2530 = vadd.f32 0.0, %v2529
    %v2531 = vpop.f32.mrb[0].mxu0
    %v2532 = vpop.f32.mrb[0].mxu0
    %v2533 = vadd.f32 0.0, %v2532
    %v2534 = vpop.f32.mrb[0].mxu0
    %2535 = vdwg.mxu0
    %v2536 = vmul.f32 %v2530, 0.35355338
    %v2537 = vmul.f32 %v2533, 0.35355338
    %v2538 = vadd.f32 %v2536, %v205
    %v2539 = vadd.f32 %v2537, %v214
    %v2540 = vsel %vm539, %v2538, -inf
    %2541 = vmax.xlane.f32.xlu0 %v2540
    %v2542 = vpop.xlane.xlu0 %2541
    %v2543 = vsel %vm539, %v2539, -inf
    %2544 = vmax.xlane.f32.xlu0 %v2543
    %v2545 = vpop.xlane.xlu0 %2544
    %v2546 = vsub.f32 %v2538, %v2542
    %v2547 = vsub.f32 %v2539, %v2545
    %v2548 = vmul.f32 %v2546, 1.442695
    %v2549 = vpow.pop %v2548
    %v2550 = vmul.f32 %v2547, 1.442695
    %v2551 = vpow.pop %v2550
    %v2552 = vsel %vm539, %v2549, 0.0
    %2553 = vadd.xlane.f32.xlu0 %v2552
    %v2554 = vpop.xlane.xlu0 %2553
    %v2555 = vsel %vm539, %v2551, 0.0
    %2556 = vadd.xlane.f32.xlu0 %v2555
    %v2557 = vpop.xlane.xlu0 %2556
    %v2558 = vrcp.pop %v2554
    %v2559 = vrcp.pop %v2557
    %v2560 = vmul.f32 %v2549, %v2558
    %v2561 = vmul.f32 %v2551, %v2559
    %v2562 = vpack.c.bf16 %v2561, %v2560
    %2563 = vrot.lane.b32.xlu0 %v2357, 56
    %v2564 = vpop.permute.xlu0 %2563
    %v2567 = vsel %vm539, %v2562, 0
    %2569 = vmatprep.subr.bf16.mxu0 0
    %2570 = vmatpush1.bf16.msra.mxu0 %v2564
    %2571 = vmatprep.subr.bf16.mxu0 0
    %2572 = vmatpush1.bf16.msra.mxu0 0
    %2573 = vmatprep.subr.bf16.mxu0 0
    %2574 = vmatpush1.bf16.msra.mxu0 0
    %2575 = vmatprep.subr.bf16.mxu0 0
    %2576 = vmatpush1.bf16.msra.mxu0 0
    %2577 = vmatprep.subr.bf16.mxu0 0
    %2578 = vmatpush1.bf16.msra.mxu0 0
    %2579 = vmatprep.subr.bf16.mxu0 0
    %2580 = vmatpush1.bf16.msra.mxu0 0
    %2581 = vmatprep.subr.bf16.mxu0 0
    %2582 = vmatpush1.bf16.msra.mxu0 0
    %2583 = vmatprep.subr.bf16.mxu0 0
    %2584 = vmatpush1.bf16.msra.mxu0 0
    %2585 = vmatprep.subr.bf16.mxu0 0
    %2586 = vmatpush1.bf16.msra.mxu0 0
    %2587 = vmatprep.subr.bf16.mxu0 0
    %2588 = vmatpush1.bf16.msra.mxu0 0
    %2589 = vmatprep.subr.bf16.mxu0 0
    %2590 = vmatpush1.bf16.msra.mxu0 0
    %2591 = vmatprep.subr.bf16.mxu0 0
    %2592 = vmatpush1.bf16.msra.mxu0 0
    %2593 = vmatprep.subr.bf16.mxu0 0
    %2594 = vmatpush1.bf16.msra.mxu0 0
    %2595 = vmatprep.subr.bf16.mxu0 0
    %2596 = vmatpush1.bf16.msra.mxu0 0
    %2597 = vmatprep.subr.bf16.mxu0 0
    %2598 = vmatpush1.bf16.msra.mxu0 0
    %2599 = vmatprep.subr.bf16.mxu0 0
    %2600 = vmatpush1.bf16.msra.mxu0 0
    %2601 = vmatprep.mubr.bf16.mxu0 0
    %2602 = vmatmul.mubr.bf16.gmra.mrb[0].mxu0 %v2567
    %v2603 = vpop.f32.mrb[0].mxu0
    %v2604 = vadd.f32 0.0, %v2603
    %v2605 = vpop.f32.mrb[0].mxu0
    %v2606 = vpop.f32.mrb[0].mxu0
    %v2607 = vadd.f32 0.0, %v2606
    %v2608 = vpop.f32.mrb[0].mxu0
    %2609 = vdwg.mxu0
    %v2610 = vpack.c.bf16 %v2607, %v2604
    %v2612 = vrot.slane %v2358, 4
    %v2614 = vsel %vm204, %v2610, 0
    %v2617 = vsel %vm742, %v2612, 0
    %2619 = vmatprep.subr.bf16.mxu0 0
    %2620 = vmatpush1.bf16.msra.mxu0 %v2617
    %2621 = vmatprep.subr.bf16.mxu0 0
    %2622 = vmatpush1.bf16.msra.mxu0 0
    %2623 = vmatprep.subr.bf16.mxu0 0
    %2624 = vmatpush1.bf16.msra.mxu0 0
    %2625 = vmatprep.subr.bf16.mxu0 0
    %2626 = vmatpush1.bf16.msra.mxu0 0
    %2627 = vmatprep.subr.bf16.mxu0 0
    %2628 = vmatpush1.bf16.msra.mxu0 0
    %2629 = vmatprep.subr.bf16.mxu0 0
    %2630 = vmatpush1.bf16.msra.mxu0 0
    %2631 = vmatprep.subr.bf16.mxu0 0
    %2632 = vmatpush1.bf16.msra.mxu0 0
    %2633 = vmatprep.subr.bf16.mxu0 0
    %2634 = vmatpush1.bf16.msra.mxu0 0
    %2635 = vmatprep.subr.bf16.mxu0 0
    %2636 = vmatpush1.bf16.msra.mxu0 0
    %2637 = vmatprep.subr.bf16.mxu0 0
    %2638 = vmatpush1.bf16.msra.mxu0 0
    %2639 = vmatprep.subr.bf16.mxu0 0
    %2640 = vmatpush1.bf16.msra.mxu0 0
    %2641 = vmatprep.subr.bf16.mxu0 0
    %2642 = vmatpush1.bf16.msra.mxu0 0
    %2643 = vmatprep.subr.bf16.mxu0 0
    %2644 = vmatpush1.bf16.msra.mxu0 0
    %2645 = vmatprep.subr.bf16.mxu0 0
    %2646 = vmatpush1.bf16.msra.mxu0 0
    %2647 = vmatprep.subr.bf16.mxu0 0
    %2648 = vmatpush1.bf16.msra.mxu0 0
    %2649 = vmatprep.subr.bf16.mxu0 0
    %2650 = vmatpush1.bf16.msra.mxu0 0
    %2651 = vmatprep.mubr.bf16.mxu0 0
    %2652 = vmatmul.mubr.bf16.gmra.mrb[0].mxu0 %v2614
    %v2653 = vpop.f32.mrb[0].mxu0
    %v2654 = vadd.f32 0.0, %v2653
    %v2655 = vpop.f32.mrb[0].mxu0
    %v2656 = vpop.f32.mrb[0].mxu0
    %v2657 = vadd.f32 0.0, %v2656
    %v2658 = vpop.f32.mrb[0].mxu0
    %2659 = vdwg.mxu0
    %v2661 = vsel %vm204, %v2484, 0
    %v2664 = vsel %vm742, %v2358, 0
    %2666 = vmatprep.subr.bf16.mxu0 0
    %2667 = vmatpush1.bf16.msra.mxu0 %v2664
    %2668 = vmatprep.subr.bf16.mxu0 0
    %2669 = vmatpush1.bf16.msra.mxu0 0
    %2670 = vmatprep.subr.bf16.mxu0 0
    %2671 = vmatpush1.bf16.msra.mxu0 0
    %2672 = vmatprep.subr.bf16.mxu0 0
    %2673 = vmatpush1.bf16.msra.mxu0 0
    %2674 = vmatprep.subr.bf16.mxu0 0
    %2675 = vmatpush1.bf16.msra.mxu0 0
    %2676 = vmatprep.subr.bf16.mxu0 0
    %2677 = vmatpush1.bf16.msra.mxu0 0
    %2678 = vmatprep.subr.bf16.mxu0 0
    %2679 = vmatpush1.bf16.msra.mxu0 0
    %2680 = vmatprep.subr.bf16.mxu0 0
    %2681 = vmatpush1.bf16.msra.mxu0 0
    %2682 = vmatprep.subr.bf16.mxu0 0
    %2683 = vmatpush1.bf16.msra.mxu0 0
    %2684 = vmatprep.subr.bf16.mxu0 0
    %2685 = vmatpush1.bf16.msra.mxu0 0
    %2686 = vmatprep.subr.bf16.mxu0 0
    %2687 = vmatpush1.bf16.msra.mxu0 0
    %2688 = vmatprep.subr.bf16.mxu0 0
    %2689 = vmatpush1.bf16.msra.mxu0 0
    %2690 = vmatprep.subr.bf16.mxu0 0
    %2691 = vmatpush1.bf16.msra.mxu0 0
    %2692 = vmatprep.subr.bf16.mxu0 0
    %2693 = vmatpush1.bf16.msra.mxu0 0
    %2694 = vmatprep.subr.bf16.mxu0 0
    %2695 = vmatpush1.bf16.msra.mxu0 0
    %2696 = vmatprep.subr.bf16.mxu0 0
    %2697 = vmatpush1.bf16.msra.mxu0 0
    %2698 = vmatprep.mubr.bf16.mxu0 0
    %2699 = vmatmul.mubr.bf16.gmra.mrb[0].mxu0 %v2661
    %v2700 = vpop.f32.mrb[0].mxu0
    %v2701 = vadd.f32 %v2654, %v2700
    %v2702 = vpop.f32.mrb[0].mxu0
    %v2703 = vpop.f32.mrb[0].mxu0
    %v2704 = vadd.f32 %v2657, %v2703
    %v2705 = vpop.f32.mrb[0].mxu0
    %2706 = vdwg.mxu0
    %2707 = vrot.lane.b32.xlu0 %v2357, 112
    %v2708 = vpop.permute.xlu0 %2707
    %2709 = vrot.lane.b32.xlu0 %v2357, 80
    %v2710 = vpop.permute.xlu0 %2709
    %v2712 = vsel %vm204, %v2708, 0
    %v2715 = vsel %vm204, %v2710, 0
    %2717 = vmatprep.subr.bf16.mxu0 0
    %2718 = vmatpush1.bf16.xpose.msra.mxu0 %v2715
    %2719 = vmatprep.subr.bf16.mxu0 0
    %2720 = vmatpush1.bf16.xpose.msra.mxu0 0
    %2721 = vmatprep.subr.bf16.mxu0 0
    %2722 = vmatpush1.bf16.xpose.msra.mxu0 0
    %2723 = vmatprep.subr.bf16.mxu0 0
    %2724 = vmatpush1.bf16.xpose.msra.mxu0 0
    %2725 = vmatprep.subr.bf16.mxu0 0
    %2726 = vmatpush1.bf16.xpose.msra.mxu0 0
    %2727 = vmatprep.subr.bf16.mxu0 0
    %2728 = vmatpush1.bf16.xpose.msra.mxu0 0
    %2729 = vmatprep.subr.bf16.mxu0 0
    %2730 = vmatpush1.bf16.xpose.msra.mxu0 0
    %2731 = vmatprep.subr.bf16.mxu0 0
    %2732 = vmatpush1.bf16.xpose.msra.mxu0 0
    %2733 = vmatprep.subr.bf16.mxu0 0
    %2734 = vmatpush1.bf16.xpose.msra.mxu0 0
    %2735 = vmatprep.subr.bf16.mxu0 0
    %2736 = vmatpush1.bf16.xpose.msra.mxu0 0
    %2737 = vmatprep.subr.bf16.mxu0 0
    %2738 = vmatpush1.bf16.xpose.msra.mxu0 0
    %2739 = vmatprep.subr.bf16.mxu0 0
    %2740 = vmatpush1.bf16.xpose.msra.mxu0 0
    %2741 = vmatprep.subr.bf16.mxu0 0
    %2742 = vmatpush1.bf16.xpose.msra.mxu0 0
    %2743 = vmatprep.subr.bf16.mxu0 0
    %2744 = vmatpush1.bf16.xpose.msra.mxu0 0
    %2745 = vmatprep.subr.bf16.mxu0 0
    %2746 = vmatpush1.bf16.xpose.msra.mxu0 0
    %2747 = vmatprep.subr.bf16.mxu0 0
    %2748 = vmatpush1.bf16.xpose.msra.mxu0 0
    %2749 = vmatprep.mubr.bf16.mxu0 0
    %2750 = vmatmul.mubr.bf16.gmra.mrb[0].mxu0 %v2712
    %v2751 = vpop.f32.mrb[0].mxu0
    %v2752 = vadd.f32 0.0, %v2751
    %v2753 = vpop.f32.mrb[0].mxu0
    %v2754 = vpop.f32.mrb[0].mxu0
    %v2755 = vadd.f32 0.0, %v2754
    %v2756 = vpop.f32.mrb[0].mxu0
    %2757 = vdwg.mxu0
    %v2758 = vmul.f32 %v2752, 0.35355338
    %v2759 = vmul.f32 %v2755, 0.35355338
    %v2760 = vadd.f32 %v2758, %v205
    %v2761 = vadd.f32 %v2759, %v214
    %v2762 = vsel %vm539, %v2760, -inf
    %2763 = vmax.xlane.f32.xlu0 %v2762
    %v2764 = vpop.xlane.xlu0 %2763
    %v2765 = vsel %vm539, %v2761, -inf
    %2766 = vmax.xlane.f32.xlu0 %v2765
    %v2767 = vpop.xlane.xlu0 %2766
    %v2768 = vsub.f32 %v2760, %v2764
    %v2769 = vsub.f32 %v2761, %v2767
    %v2770 = vmul.f32 %v2768, 1.442695
    %v2771 = vpow.pop %v2770
    %v2772 = vmul.f32 %v2769, 1.442695
    %v2773 = vpow.pop %v2772
    %v2774 = vsel %vm539, %v2771, 0.0
    %2775 = vadd.xlane.f32.xlu0 %v2774
    %v2776 = vpop.xlane.xlu0 %2775
    %v2777 = vsel %vm539, %v2773, 0.0
    %2778 = vadd.xlane.f32.xlu0 %v2777
    %v2779 = vpop.xlane.xlu0 %2778
    %v2780 = vrcp.pop %v2776
    %v2781 = vrcp.pop %v2779
    %v2782 = vmul.f32 %v2771, %v2780
    %v2783 = vmul.f32 %v2773, %v2781
    %v2784 = vpack.c.bf16 %v2783, %v2782
    %2785 = vrot.lane.b32.xlu0 %v2357, 48
    %v2786 = vpop.permute.xlu0 %2785
    %v2789 = vsel %vm539, %v2784, 0
    %2791 = vmatprep.subr.bf16.mxu0 0
    %2792 = vmatpush1.bf16.msra.mxu0 %v2786
    %2793 = vmatprep.subr.bf16.mxu0 0
    %2794 = vmatpush1.bf16.msra.mxu0 0
    %2795 = vmatprep.subr.bf16.mxu0 0
    %2796 = vmatpush1.bf16.msra.mxu0 0
    %2797 = vmatprep.subr.bf16.mxu0 0
    %2798 = vmatpush1.bf16.msra.mxu0 0
    %2799 = vmatprep.subr.bf16.mxu0 0
    %2800 = vmatpush1.bf16.msra.mxu0 0
    %2801 = vmatprep.subr.bf16.mxu0 0
    %2802 = vmatpush1.bf16.msra.mxu0 0
    %2803 = vmatprep.subr.bf16.mxu0 0
    %2804 = vmatpush1.bf16.msra.mxu0 0
    %2805 = vmatprep.subr.bf16.mxu0 0
    %2806 = vmatpush1.bf16.msra.mxu0 0
    %2807 = vmatprep.subr.bf16.mxu0 0
    %2808 = vmatpush1.bf16.msra.mxu0 0
    %2809 = vmatprep.subr.bf16.mxu0 0
    %2810 = vmatpush1.bf16.msra.mxu0 0
    %2811 = vmatprep.subr.bf16.mxu0 0
    %2812 = vmatpush1.bf16.msra.mxu0 0
    %2813 = vmatprep.subr.bf16.mxu0 0
    %2814 = vmatpush1.bf16.msra.mxu0 0
    %2815 = vmatprep.subr.bf16.mxu0 0
    %2816 = vmatpush1.bf16.msra.mxu0 0
    %2817 = vmatprep.subr.bf16.mxu0 0
    %2818 = vmatpush1.bf16.msra.mxu0 0
    %2819 = vmatprep.subr.bf16.mxu0 0
    %2820 = vmatpush1.bf16.msra.mxu0 0
    %2821 = vmatprep.subr.bf16.mxu0 0
    %2822 = vmatpush1.bf16.msra.mxu0 0
    %2823 = vmatprep.mubr.bf16.mxu0 0
    %2824 = vmatmul.mubr.bf16.gmra.mrb[0].mxu0 %v2789
    %v2825 = vpop.f32.mrb[0].mxu0
    %v2826 = vadd.f32 0.0, %v2825
    %v2827 = vpop.f32.mrb[0].mxu0
    %v2828 = vpop.f32.mrb[0].mxu0
    %v2829 = vadd.f32 0.0, %v2828
    %v2830 = vpop.f32.mrb[0].mxu0
    %2831 = vdwg.mxu0
    %v2832 = vpack.c.bf16 %v2829, %v2826
    %v2834 = vsel %vm204, %v2832, 0
    %v2837 = vsel %vm742, %v2359, 0
    %2839 = vmatprep.subr.bf16.mxu0 0
    %2840 = vmatpush1.bf16.msra.mxu0 %v2837
    %2841 = vmatprep.subr.bf16.mxu0 0
    %2842 = vmatpush1.bf16.msra.mxu0 0
    %2843 = vmatprep.subr.bf16.mxu0 0
    %2844 = vmatpush1.bf16.msra.mxu0 0
    %2845 = vmatprep.subr.bf16.mxu0 0
    %2846 = vmatpush1.bf16.msra.mxu0 0
    %2847 = vmatprep.subr.bf16.mxu0 0
    %2848 = vmatpush1.bf16.msra.mxu0 0
    %2849 = vmatprep.subr.bf16.mxu0 0
    %2850 = vmatpush1.bf16.msra.mxu0 0
    %2851 = vmatprep.subr.bf16.mxu0 0
    %2852 = vmatpush1.bf16.msra.mxu0 0
    %2853 = vmatprep.subr.bf16.mxu0 0
    %2854 = vmatpush1.bf16.msra.mxu0 0
    %2855 = vmatprep.subr.bf16.mxu0 0
    %2856 = vmatpush1.bf16.msra.mxu0 0
    %2857 = vmatprep.subr.bf16.mxu0 0
    %2858 = vmatpush1.bf16.msra.mxu0 0
    %2859 = vmatprep.subr.bf16.mxu0 0
    %2860 = vmatpush1.bf16.msra.mxu0 0
    %2861 = vmatprep.subr.bf16.mxu0 0
    %2862 = vmatpush1.bf16.msra.mxu0 0
    %2863 = vmatprep.subr.bf16.mxu0 0
    %2864 = vmatpush1.bf16.msra.mxu0 0
    %2865 = vmatprep.subr.bf16.mxu0 0
    %2866 = vmatpush1.bf16.msra.mxu0 0
    %2867 = vmatprep.subr.bf16.mxu0 0
    %2868 = vmatpush1.bf16.msra.mxu0 0
    %2869 = vmatprep.subr.bf16.mxu0 0
    %2870 = vmatpush1.bf16.msra.mxu0 0
    %2871 = vmatprep.mubr.bf16.mxu0 0
    %2872 = vmatmul.mubr.bf16.gmra.mrb[0].mxu0 %v2834
    %v2873 = vpop.f32.mrb[0].mxu0
    %v2874 = vadd.f32 0.0, %v2873
    %v2875 = vpop.f32.mrb[0].mxu0
    %v2876 = vpop.f32.mrb[0].mxu0
    %v2877 = vadd.f32 0.0, %v2876
    %v2878 = vpop.f32.mrb[0].mxu0
    %2879 = vdwg.mxu0
    %v2880 = vadd.f32 %v2701, %v2874
    %v2881 = vadd.f32 %v2704, %v2877
    %2882 = vrot.lane.b32.xlu0 %v2357, 104
    %v2883 = vpop.permute.xlu0 %2882
    %2884 = vrot.lane.b32.xlu0 %v2357, 72
    %v2885 = vpop.permute.xlu0 %2884
    %v2887 = vsel %vm204, %v2883, 0
    %v2890 = vsel %vm204, %v2885, 0
    %2892 = vmatprep.subr.bf16.mxu0 0
    %2893 = vmatpush1.bf16.xpose.msra.mxu0 %v2890
    %2894 = vmatprep.subr.bf16.mxu0 0
    %2895 = vmatpush1.bf16.xpose.msra.mxu0 0
    %2896 = vmatprep.subr.bf16.mxu0 0
    %2897 = vmatpush1.bf16.xpose.msra.mxu0 0
    %2898 = vmatprep.subr.bf16.mxu0 0
    %2899 = vmatpush1.bf16.xpose.msra.mxu0 0
    %2900 = vmatprep.subr.bf16.mxu0 0
    %2901 = vmatpush1.bf16.xpose.msra.mxu0 0
    %2902 = vmatprep.subr.bf16.mxu0 0
    %2903 = vmatpush1.bf16.xpose.msra.mxu0 0
    %2904 = vmatprep.subr.bf16.mxu0 0
    %2905 = vmatpush1.bf16.xpose.msra.mxu0 0
    %2906 = vmatprep.subr.bf16.mxu0 0
    %2907 = vmatpush1.bf16.xpose.msra.mxu0 0
    %2908 = vmatprep.subr.bf16.mxu0 0
    %2909 = vmatpush1.bf16.xpose.msra.mxu0 0
    %2910 = vmatprep.subr.bf16.mxu0 0
    %2911 = vmatpush1.bf16.xpose.msra.mxu0 0
    %2912 = vmatprep.subr.bf16.mxu0 0
    %2913 = vmatpush1.bf16.xpose.msra.mxu0 0
    %2914 = vmatprep.subr.bf16.mxu0 0
    %2915 = vmatpush1.bf16.xpose.msra.mxu0 0
    %2916 = vmatprep.subr.bf16.mxu0 0
    %2917 = vmatpush1.bf16.xpose.msra.mxu0 0
    %2918 = vmatprep.subr.bf16.mxu0 0
    %2919 = vmatpush1.bf16.xpose.msra.mxu0 0
    %2920 = vmatprep.subr.bf16.mxu0 0
    %2921 = vmatpush1.bf16.xpose.msra.mxu0 0
    %2922 = vmatprep.subr.bf16.mxu0 0
    %2923 = vmatpush1.bf16.xpose.msra.mxu0 0
    %2924 = vmatprep.mubr.bf16.mxu0 0
    %2925 = vmatmul.mubr.bf16.gmra.mrb[0].mxu0 %v2887
    %v2926 = vpop.f32.mrb[0].mxu0
    %v2927 = vadd.f32 0.0, %v2926
    %v2928 = vpop.f32.mrb[0].mxu0
    %v2929 = vpop.f32.mrb[0].mxu0
    %v2930 = vadd.f32 0.0, %v2929
    %v2931 = vpop.f32.mrb[0].mxu0
    %2932 = vdwg.mxu0
    %v2933 = vmul.f32 %v2927, 0.35355338
    %v2934 = vmul.f32 %v2930, 0.35355338
    %v2935 = vadd.f32 %v2933, %v205
    %v2936 = vadd.f32 %v2934, %v214
    %v2937 = vsel %vm539, %v2935, -inf
    %2938 = vmax.xlane.f32.xlu0 %v2937
    %v2939 = vpop.xlane.xlu0 %2938
    %v2940 = vsel %vm539, %v2936, -inf
    %2941 = vmax.xlane.f32.xlu0 %v2940
    %v2942 = vpop.xlane.xlu0 %2941
    %v2943 = vsub.f32 %v2935, %v2939
    %v2944 = vsub.f32 %v2936, %v2942
    %v2945 = vmul.f32 %v2943, 1.442695
    %v2946 = vpow.pop %v2945
    %v2947 = vmul.f32 %v2944, 1.442695
    %v2948 = vpow.pop %v2947
    %v2949 = vsel %vm539, %v2946, 0.0
    %2950 = vadd.xlane.f32.xlu0 %v2949
    %v2951 = vpop.xlane.xlu0 %2950
    %v2952 = vsel %vm539, %v2948, 0.0
    %2953 = vadd.xlane.f32.xlu0 %v2952
    %v2954 = vpop.xlane.xlu0 %2953
    %v2955 = vrcp.pop %v2951
    %v2956 = vrcp.pop %v2954
    %v2957 = vmul.f32 %v2946, %v2955
    %v2958 = vmul.f32 %v2948, %v2956
    %v2959 = vpack.c.bf16 %v2958, %v2957
    %2960 = vrot.lane.b32.xlu0 %v2357, 40
    %v2961 = vpop.permute.xlu0 %2960
    %v2964 = vsel %vm539, %v2959, 0
    %2966 = vmatprep.subr.bf16.mxu0 0
    %2967 = vmatpush1.bf16.msra.mxu0 %v2961
    %2968 = vmatprep.subr.bf16.mxu0 0
    %2969 = vmatpush1.bf16.msra.mxu0 0
    %2970 = vmatprep.subr.bf16.mxu0 0
    %2971 = vmatpush1.bf16.msra.mxu0 0
    %2972 = vmatprep.subr.bf16.mxu0 0
    %2973 = vmatpush1.bf16.msra.mxu0 0
    %2974 = vmatprep.subr.bf16.mxu0 0
    %2975 = vmatpush1.bf16.msra.mxu0 0
    %2976 = vmatprep.subr.bf16.mxu0 0
    %2977 = vmatpush1.bf16.msra.mxu0 0
    %2978 = vmatprep.subr.bf16.mxu0 0
    %2979 = vmatpush1.bf16.msra.mxu0 0
    %2980 = vmatprep.subr.bf16.mxu0 0
    %2981 = vmatpush1.bf16.msra.mxu0 0
    %2982 = vmatprep.subr.bf16.mxu0 0
    %2983 = vmatpush1.bf16.msra.mxu0 0
    %2984 = vmatprep.subr.bf16.mxu0 0
    %2985 = vmatpush1.bf16.msra.mxu0 0
    %2986 = vmatprep.subr.bf16.mxu0 0
    %2987 = vmatpush1.bf16.msra.mxu0 0
    %2988 = vmatprep.subr.bf16.mxu0 0
    %2989 = vmatpush1.bf16.msra.mxu0 0
    %2990 = vmatprep.subr.bf16.mxu0 0
    %2991 = vmatpush1.bf16.msra.mxu0 0
    %2992 = vmatprep.subr.bf16.mxu0 0
    %2993 = vmatpush1.bf16.msra.mxu0 0
    %2994 = vmatprep.subr.bf16.mxu0 0
    %2995 = vmatpush1.bf16.msra.mxu0 0
    %2996 = vmatprep.subr.bf16.mxu0 0
    %2997 = vmatpush1.bf16.msra.mxu0 0
    %2998 = vmatprep.mubr.bf16.mxu0 0
    %2999 = vmatmul.mubr.bf16.gmra.mrb[0].mxu0 %v2964
    %v3000 = vpop.f32.mrb[0].mxu0
    %v3001 = vadd.f32 0.0, %v3000
    %v3002 = vpop.f32.mrb[0].mxu0
    %v3003 = vpop.f32.mrb[0].mxu0
    %v3004 = vadd.f32 0.0, %v3003
    %v3005 = vpop.f32.mrb[0].mxu0
    %3006 = vdwg.mxu0
    %v3007 = vpack.c.bf16 %v3004, %v3001
    %v3009 = vrot.slane %v2359, 4
    %v3011 = vsel %vm204, %v3007, 0
    %v3014 = vsel %vm742, %v3009, 0
    %3016 = vmatprep.subr.bf16.mxu0 0
    %3017 = vmatpush1.bf16.msra.mxu0 %v3014
    %3018 = vmatprep.subr.bf16.mxu0 0
    %3019 = vmatpush1.bf16.msra.mxu0 0
    %3020 = vmatprep.subr.bf16.mxu0 0
    %3021 = vmatpush1.bf16.msra.mxu0 0
    %3022 = vmatprep.subr.bf16.mxu0 0
    %3023 = vmatpush1.bf16.msra.mxu0 0
    %3024 = vmatprep.subr.bf16.mxu0 0
    %3025 = vmatpush1.bf16.msra.mxu0 0
    %3026 = vmatprep.subr.bf16.mxu0 0
    %3027 = vmatpush1.bf16.msra.mxu0 0
    %3028 = vmatprep.subr.bf16.mxu0 0
    %3029 = vmatpush1.bf16.msra.mxu0 0
    %3030 = vmatprep.subr.bf16.mxu0 0
    %3031 = vmatpush1.bf16.msra.mxu0 0
    %3032 = vmatprep.subr.bf16.mxu0 0
    %3033 = vmatpush1.bf16.msra.mxu0 0
    %3034 = vmatprep.subr.bf16.mxu0 0
    %3035 = vmatpush1.bf16.msra.mxu0 0
    %3036 = vmatprep.subr.bf16.mxu0 0
    %3037 = vmatpush1.bf16.msra.mxu0 0
    %3038 = vmatprep.subr.bf16.mxu0 0
    %3039 = vmatpush1.bf16.msra.mxu0 0
    %3040 = vmatprep.subr.bf16.mxu0 0
    %3041 = vmatpush1.bf16.msra.mxu0 0
    %3042 = vmatprep.subr.bf16.mxu0 0
    %3043 = vmatpush1.bf16.msra.mxu0 0
    %3044 = vmatprep.subr.bf16.mxu0 0
    %3045 = vmatpush1.bf16.msra.mxu0 0
    %3046 = vmatprep.subr.bf16.mxu0 0
    %3047 = vmatpush1.bf16.msra.mxu0 0
    %3048 = vmatprep.mubr.bf16.mxu0 0
    %3049 = vmatmul.mubr.bf16.gmra.mrb[0].mxu0 %v3011
    %v3050 = vpop.f32.mrb[0].mxu0
    %v3051 = vadd.f32 0.0, %v3050
    %v3052 = vpop.f32.mrb[0].mxu0
    %v3053 = vpop.f32.mrb[0].mxu0
    %v3054 = vadd.f32 0.0, %v3053
    %v3055 = vpop.f32.mrb[0].mxu0
    %3056 = vdwg.mxu0
    %v3057 = vadd.f32 %v2880, %v3051
    %v3058 = vadd.f32 %v2881, %v3054
    %v3060 = vlaneseq
    %v3061 = vshrl.u32 %v3060, 7
    %v3062 = vsub.s32 0, %v3061
    %v3063 = vrot.slane %v2356, %v3062
    %v3065 = vadd.f32 %v3057, %v3063
    %v3066 = vadd.f32 %v3058, %v3063
    %v3067 = vadd.f32 %v2232, %v3065
    %v3068 = vadd.f32 %v2233, %v3066
    %v3069 = vsel %vm263, %v3067, 0.0
    %3070 = vadd.xlane.f32.xlu0 %v3069
    %v3071 = vpop.xlane.xlu0 %3070
    %v3072 = vsel %vm263, %v3068, 0.0
    %3073 = vadd.xlane.f32.xlu0 %v3072
    %v3074 = vpop.xlane.xlu0 %3073
    %v3075 = vmul.f32 %v3071, %v372
    %v3076 = vmul.f32 %v3074, %v372
    %v3077 = vsub.f32 %v3067, %v3075
    %v3078 = vsub.f32 %v3068, %v3076
    %v3079 = vmul.f32 %v3077, %v3077
    %v3080 = vmul.f32 %v3078, %v3078
    %v3081 = vsel %vm263, %v3079, 0.0
    %3082 = vadd.xlane.f32.xlu0 %v3081
    %v3083 = vpop.xlane.xlu0 %3082
    %v3084 = vsel %vm263, %v3080, 0.0
    %3085 = vadd.xlane.f32.xlu0 %v3084
    %v3086 = vpop.xlane.xlu0 %3085
    %v3087 = vmul.f32 %v3083, 0.032258064
    %v3088 = vmul.f32 %v3086, 0.032258064
    %v3089 = vrsqrt.pop %v3087
    %v3090 = vmul.f32 %v3087, %v3089
    %vm3091 = vcmp.eq.f32.partialorder %v3087, inf
    %v3092 = vsel %vm3091, %v3087, %v3090
    %vm3093 = vcmp.eq.f32.partialorder %v3087, 0.0
    %v3094 = vand.u32 %v3087, 2147483648
    %v3095 = vsel %vm3093, %v3094, %v3092
    %v3096 = vrsqrt.pop %v3088
    %v3097 = vmul.f32 %v3088, %v3096
    %vm3098 = vcmp.eq.f32.partialorder %v3088, inf
    %v3099 = vsel %vm3098, %v3088, %v3097
    %vm3100 = vcmp.eq.f32.partialorder %v3088, 0.0
    %v3101 = vand.u32 %v3088, 2147483648
    %v3102 = vsel %vm3100, %v3101, %v3099
    %v3103 = vadd.f32 %v3095, 1e-06
    %v3104 = vadd.f32 %v3102, 1e-06
    %v3105 = vrcp.pop %v3103
    %v3106 = vrcp.pop %v3104
    %v3107 = vlaneseq
    %v3108 = vshrl.u32 %v3107, 7
    %v3109 = vsub.s32 1, %v3108
    %v3110 = vrot.slane %v2235, %v3109
    %v3111 = vmul.f32 %v3110, %v3077
    %v3112 = vmul.f32 %v3110, %v3078
    %v3113 = vmul.f32 %v3111, %v3105
    %v3114 = vmul.f32 %v3112, %v3106
    %v3115 = vlaneseq
    %v3116 = vshrl.u32 %v3115, 7
    %v3117 = vsub.s32 1, %v3116
    %v3118 = vrot.slane %v2237, %v3117
    %v3119 = vadd.f32 %v3113, %v3118
    %v3120 = vadd.f32 %v3114, %v3118
    %v3121 = vpack.c.bf16 %v3120, %v3119
    %s3122 = scalar_lea.vmem %s11, 32
    %v3123 = vld [vmem:[%s3122] sm:$0xff]
    %v3124 = vld [vmem:[%s3122 + $0x8] sm:$0xff]
    %v3125 = vld [vmem:[%s3122 + $0x10] sm:$0xff]
    %v3126 = vld [vmem:[%s3122 + $0x18] sm:$0xff]
    %v3127 = vpack.c.bf16 %v3124, %v3123
    %v3128 = vpack.c.bf16 %v3126, %v3125
    %s3129 = scalar_lea.vmem [#allocation10], 1
    %v3130 = vld [vmem:[%s3129] sm:$0x1]
    %v3132 = vlaneseq
    %v3133 = vshrl.u32 %v3132, 7
    %v3134 = vsub.s32 0, %v3133
    %v3135 = vrot.slane %v3130, %v3134
    %v3138 = vsel %vm263, %v3121, 0
    %3140 = vmatprep.subr.bf16.mxu0 0
    %3141 = vmatpush1.bf16.msra.mxu0 %v3127
    %3142 = vmatprep.subr.bf16.mxu0 0
    %3143 = vmatpush1.bf16.msra.mxu0 %v3128
    %3144 = vmatprep.subr.bf16.mxu0 0
    %3145 = vmatpush1.bf16.msra.mxu0 0
    %3146 = vmatprep.subr.bf16.mxu0 0
    %3147 = vmatpush1.bf16.msra.mxu0 0
    %3148 = vmatprep.subr.bf16.mxu0 0
    %3149 = vmatpush1.bf16.msra.mxu0 0
    %3150 = vmatprep.subr.bf16.mxu0 0
    %3151 = vmatpush1.bf16.msra.mxu0 0
    %3152 = vmatprep.subr.bf16.mxu0 0
    %3153 = vmatpush1.bf16.msra.mxu0 0
    %3154 = vmatprep.subr.bf16.mxu0 0
    %3155 = vmatpush1.bf16.msra.mxu0 0
    %3156 = vmatprep.subr.bf16.mxu0 0
    %3157 = vmatpush1.bf16.msra.mxu0 0
    %3158 = vmatprep.subr.bf16.mxu0 0
    %3159 = vmatpush1.bf16.msra.mxu0 0
    %3160 = vmatprep.subr.bf16.mxu0 0
    %3161 = vmatpush1.bf16.msra.mxu0 0
    %3162 = vmatprep.subr.bf16.mxu0 0
    %3163 = vmatpush1.bf16.msra.mxu0 0
    %3164 = vmatprep.subr.bf16.mxu0 0
    %3165 = vmatpush1.bf16.msra.mxu0 0
    %3166 = vmatprep.subr.bf16.mxu0 0
    %3167 = vmatpush1.bf16.msra.mxu0 0
    %3168 = vmatprep.subr.bf16.mxu0 0
    %3169 = vmatpush1.bf16.msra.mxu0 0
    %3170 = vmatprep.subr.bf16.mxu0 0
    %3171 = vmatpush1.bf16.msra.mxu0 0
    %3172 = vmatprep.mubr.bf16.mxu0 0
    %3173 = vmatmul.mubr.bf16.gmra.mrb[0].mxu0 %v3138
    %v3174 = vpop.f32.mrb[0].mxu0
    %v3175 = vadd.f32 %v3135, %v3174
    %v3176 = vpop.f32.mrb[0].mxu0
    %v3177 = vpop.f32.mrb[0].mxu0
    %v3178 = vadd.f32 %v3135, %v3177
    %v3179 = vpop.f32.mrb[0].mxu0
    %3180 = vdwg.mxu0
    %s3181 = scalar_lea.vmem %s15, 32
    %v3182 = vld [vmem:[%s3181] sm:$0xff]
    %v3183 = vld [vmem:[%s3181 + $0x8] sm:$0xff]
    %v3184 = vld [vmem:[%s3181 + $0x10] sm:$0xff]
    %v3185 = vld [vmem:[%s3181 + $0x18] sm:$0xff]
    %s3186 = scalar_lea.vmem [#allocation13], 1
    %v3187 = vld [vmem:[%s3186] sm:$0x1]
    %v3188 = vpack.c.bf16 %v3178, %v3175
    %v3189 = vpack.c.bf16 %v361, %v358
    %v3190 = vpack.c.bf16 %v3183, %v3182
    %v3191 = vpack.c.bf16 %v3185, %v3184
    %v3193 = vsel %vm204, %v3188, 0
    %v3196 = vsel %vm204, %v3189, 0
    %3198 = vmatprep.subr.bf16.mxu0 0
    %3199 = vmatpush1.bf16.xpose.msra.mxu0 %v3196
    %3200 = vmatprep.subr.bf16.mxu0 0
    %3201 = vmatpush1.bf16.xpose.msra.mxu0 0
    %3202 = vmatprep.subr.bf16.mxu0 0
    %3203 = vmatpush1.bf16.xpose.msra.mxu0 0
    %3204 = vmatprep.subr.bf16.mxu0 0
    %3205 = vmatpush1.bf16.xpose.msra.mxu0 0
    %3206 = vmatprep.subr.bf16.mxu0 0
    %3207 = vmatpush1.bf16.xpose.msra.mxu0 0
    %3208 = vmatprep.subr.bf16.mxu0 0
    %3209 = vmatpush1.bf16.xpose.msra.mxu0 0
    %3210 = vmatprep.subr.bf16.mxu0 0
    %3211 = vmatpush1.bf16.xpose.msra.mxu0 0
    %3212 = vmatprep.subr.bf16.mxu0 0
    %3213 = vmatpush1.bf16.xpose.msra.mxu0 0
    %3214 = vmatprep.subr.bf16.mxu0 0
    %3215 = vmatpush1.bf16.xpose.msra.mxu0 0
    %3216 = vmatprep.subr.bf16.mxu0 0
    %3217 = vmatpush1.bf16.xpose.msra.mxu0 0
    %3218 = vmatprep.subr.bf16.mxu0 0
    %3219 = vmatpush1.bf16.xpose.msra.mxu0 0
    %3220 = vmatprep.subr.bf16.mxu0 0
    %3221 = vmatpush1.bf16.xpose.msra.mxu0 0
    %3222 = vmatprep.subr.bf16.mxu0 0
    %3223 = vmatpush1.bf16.xpose.msra.mxu0 0
    %3224 = vmatprep.subr.bf16.mxu0 0
    %3225 = vmatpush1.bf16.xpose.msra.mxu0 0
    %3226 = vmatprep.subr.bf16.mxu0 0
    %3227 = vmatpush1.bf16.xpose.msra.mxu0 0
    %3228 = vmatprep.subr.bf16.mxu0 0
    %3229 = vmatpush1.bf16.xpose.msra.mxu0 0
    %3230 = vmatprep.mubr.bf16.mxu0 0
    %3231 = vmatmul.mubr.bf16.gmra.mrb[0].mxu0 %v3193
    %v3232 = vpop.f32.mrb[0].mxu0
    %v3233 = vadd.f32 0.0, %v3232
    %v3234 = vpop.f32.mrb[0].mxu0
    %v3235 = vpop.f32.mrb[0].mxu0
    %v3236 = vadd.f32 0.0, %v3235
    %v3237 = vpop.f32.mrb[0].mxu0
    %3238 = vdwg.mxu0
    %v3239 = vmul.f32 %v3233, 0.35355338
    %v3240 = vmul.f32 %v3236, 0.35355338
    %v3241 = vadd.f32 %v3239, %v224
    %v3242 = vadd.f32 %v3240, %v239
    %v3243 = vsel %vm539, %v3241, -inf
    %3244 = vmax.xlane.f32.xlu0 %v3243
    %v3245 = vpop.xlane.xlu0 %3244
    %v3246 = vsel %vm539, %v3242, -inf
    %3247 = vmax.xlane.f32.xlu0 %v3246
    %v3248 = vpop.xlane.xlu0 %3247
    %v3249 = vsub.f32 %v3241, %v3245
    %v3250 = vsub.f32 %v3242, %v3248
    %v3251 = vmul.f32 %v3249, 1.442695
    %v3252 = vpow.pop %v3251
    %v3253 = vmul.f32 %v3250, 1.442695
    %v3254 = vpow.pop %v3253
    %v3255 = vsel %vm539, %v3252, 0.0
    %3256 = vadd.xlane.f32.xlu0 %v3255
    %v3257 = vpop.xlane.xlu0 %3256
    %v3258 = vsel %vm539, %v3254, 0.0
    %3259 = vadd.xlane.f32.xlu0 %v3258
    %v3260 = vpop.xlane.xlu0 %3259
    %v3261 = vrcp.pop %v3257
    %v3262 = vrcp.pop %v3260
    %v3263 = vmul.f32 %v3252, %v3261
    %v3264 = vmul.f32 %v3254, %v3262
    %v3265 = vadd.f32 %v3263, %v3264
    %v3266 = vpack.c.bf16 %v3264, %v3263
    %3268 = vrot.lane.b32.xlu0 %v3189, 96
    %v3269 = vpop.permute.xlu0 %3268
    %v3272 = vsel %vm539, %v3266, 0
    %3274 = vmatprep.subr.bf16.mxu0 0
    %3275 = vmatpush1.bf16.msra.mxu0 %v3269
    %3276 = vmatprep.subr.bf16.mxu0 0
    %3277 = vmatpush1.bf16.msra.mxu0 0
    %3278 = vmatprep.subr.bf16.mxu0 0
    %3279 = vmatpush1.bf16.msra.mxu0 0
    %3280 = vmatprep.subr.bf16.mxu0 0
    %3281 = vmatpush1.bf16.msra.mxu0 0
    %3282 = vmatprep.subr.bf16.mxu0 0
    %3283 = vmatpush1.bf16.msra.mxu0 0
    %3284 = vmatprep.subr.bf16.mxu0 0
    %3285 = vmatpush1.bf16.msra.mxu0 0
    %3286 = vmatprep.subr.bf16.mxu0 0
    %3287 = vmatpush1.bf16.msra.mxu0 0
    %3288 = vmatprep.subr.bf16.mxu0 0
    %3289 = vmatpush1.bf16.msra.mxu0 0
    %3290 = vmatprep.subr.bf16.mxu0 0
    %3291 = vmatpush1.bf16.msra.mxu0 0
    %3292 = vmatprep.subr.bf16.mxu0 0
    %3293 = vmatpush1.bf16.msra.mxu0 0
    %3294 = vmatprep.subr.bf16.mxu0 0
    %3295 = vmatpush1.bf16.msra.mxu0 0
    %3296 = vmatprep.subr.bf16.mxu0 0
    %3297 = vmatpush1.bf16.msra.mxu0 0
    %3298 = vmatprep.subr.bf16.mxu0 0
    %3299 = vmatpush1.bf16.msra.mxu0 0
    %3300 = vmatprep.subr.bf16.mxu0 0
    %3301 = vmatpush1.bf16.msra.mxu0 0
    %3302 = vmatprep.subr.bf16.mxu0 0
    %3303 = vmatpush1.bf16.msra.mxu0 0
    %3304 = vmatprep.subr.bf16.mxu0 0
    %3305 = vmatpush1.bf16.msra.mxu0 0
    %3306 = vmatprep.mubr.bf16.mxu0 0
    %3307 = vmatmul.mubr.bf16.gmra.mrb[0].mxu0 %v3272
    %v3308 = vpop.f32.mrb[0].mxu0
    %v3309 = vadd.f32 0.0, %v3308
    %v3310 = vpop.f32.mrb[0].mxu0
    %v3311 = vpop.f32.mrb[0].mxu0
    %v3312 = vadd.f32 0.0, %v3311
    %v3313 = vpop.f32.mrb[0].mxu0
    %3314 = vdwg.mxu0
    %v3315 = vpack.c.bf16 %v3312, %v3309
    %3317 = vrot.lane.b32.xlu0 %v3188, 120
    %v3318 = vpop.permute.xlu0 %3317
    %3319 = vrot.lane.b32.xlu0 %v3189, 120
    %v3320 = vpop.permute.xlu0 %3319
    %v3322 = vsel %vm204, %v3318, 0
    %v3325 = vsel %vm204, %v3320, 0
    %3327 = vmatprep.subr.bf16.mxu0 0
    %3328 = vmatpush1.bf16.xpose.msra.mxu0 %v3325
    %3329 = vmatprep.subr.bf16.mxu0 0
    %3330 = vmatpush1.bf16.xpose.msra.mxu0 0
    %3331 = vmatprep.subr.bf16.mxu0 0
    %3332 = vmatpush1.bf16.xpose.msra.mxu0 0
    %3333 = vmatprep.subr.bf16.mxu0 0
    %3334 = vmatpush1.bf16.xpose.msra.mxu0 0
    %3335 = vmatprep.subr.bf16.mxu0 0
    %3336 = vmatpush1.bf16.xpose.msra.mxu0 0
    %3337 = vmatprep.subr.bf16.mxu0 0
    %3338 = vmatpush1.bf16.xpose.msra.mxu0 0
    %3339 = vmatprep.subr.bf16.mxu0 0
    %3340 = vmatpush1.bf16.xpose.msra.mxu0 0
    %3341 = vmatprep.subr.bf16.mxu0 0
    %3342 = vmatpush1.bf16.xpose.msra.mxu0 0
    %3343 = vmatprep.subr.bf16.mxu0 0
    %3344 = vmatpush1.bf16.xpose.msra.mxu0 0
    %3345 = vmatprep.subr.bf16.mxu0 0
    %3346 = vmatpush1.bf16.xpose.msra.mxu0 0
    %3347 = vmatprep.subr.bf16.mxu0 0
    %3348 = vmatpush1.bf16.xpose.msra.mxu0 0
    %3349 = vmatprep.subr.bf16.mxu0 0
    %3350 = vmatpush1.bf16.xpose.msra.mxu0 0
    %3351 = vmatprep.subr.bf16.mxu0 0
    %3352 = vmatpush1.bf16.xpose.msra.mxu0 0
    %3353 = vmatprep.subr.bf16.mxu0 0
    %3354 = vmatpush1.bf16.xpose.msra.mxu0 0
    %3355 = vmatprep.subr.bf16.mxu0 0
    %3356 = vmatpush1.bf16.xpose.msra.mxu0 0
    %3357 = vmatprep.subr.bf16.mxu0 0
    %3358 = vmatpush1.bf16.xpose.msra.mxu0 0
    %3359 = vmatprep.mubr.bf16.mxu0 0
    %3360 = vmatmul.mubr.bf16.gmra.mrb[0].mxu0 %v3322
    %v3361 = vpop.f32.mrb[0].mxu0
    %v3362 = vadd.f32 0.0, %v3361
    %v3363 = vpop.f32.mrb[0].mxu0
    %v3364 = vpop.f32.mrb[0].mxu0
    %v3365 = vadd.f32 0.0, %v3364
    %v3366 = vpop.f32.mrb[0].mxu0
    %3367 = vdwg.mxu0
    %v3368 = vmul.f32 %v3362, 0.35355338
    %v3369 = vmul.f32 %v3365, 0.35355338
    %v3370 = vadd.f32 %v3368, %v224
    %v3371 = vadd.f32 %v3369, %v239
    %v3372 = vsel %vm539, %v3370, -inf
    %3373 = vmax.xlane.f32.xlu0 %v3372
    %v3374 = vpop.xlane.xlu0 %3373
    %v3375 = vsel %vm539, %v3371, -inf
    %3376 = vmax.xlane.f32.xlu0 %v3375
    %v3377 = vpop.xlane.xlu0 %3376
    %v3378 = vsub.f32 %v3370, %v3374
    %v3379 = vsub.f32 %v3371, %v3377
    %v3380 = vmul.f32 %v3378, 1.442695
    %v3381 = vpow.pop %v3380
    %v3382 = vmul.f32 %v3379, 1.442695
    %v3383 = vpow.pop %v3382
    %v3384 = vsel %vm539, %v3381, 0.0
    %3385 = vadd.xlane.f32.xlu0 %v3384
    %v3386 = vpop.xlane.xlu0 %3385
    %v3387 = vsel %vm539, %v3383, 0.0
    %3388 = vadd.xlane.f32.xlu0 %v3387
    %v3389 = vpop.xlane.xlu0 %3388
    %v3390 = vrcp.pop %v3386
    %v3391 = vrcp.pop %v3389
    %v3392 = vmul.f32 %v3381, %v3390
    %v3393 = vmul.f32 %v3383, %v3391
    %v3394 = vadd.f32 %v3392, %v3393
    %v3395 = vpack.c.bf16 %v3393, %v3392
    %3396 = vrot.lane.b32.xlu0 %v3189, 88
    %v3397 = vpop.permute.xlu0 %3396
    %v3400 = vsel %vm539, %v3395, 0
    %3402 = vmatprep.subr.bf16.mxu0 0
    %3403 = vmatpush1.bf16.msra.mxu0 %v3397
    %3404 = vmatprep.subr.bf16.mxu0 0
    %3405 = vmatpush1.bf16.msra.mxu0 0
    %3406 = vmatprep.subr.bf16.mxu0 0
    %3407 = vmatpush1.bf16.msra.mxu0 0
    %3408 = vmatprep.subr.bf16.mxu0 0
    %3409 = vmatpush1.bf16.msra.mxu0 0
    %3410 = vmatprep.subr.bf16.mxu0 0
    %3411 = vmatpush1.bf16.msra.mxu0 0
    %3412 = vmatprep.subr.bf16.mxu0 0
    %3413 = vmatpush1.bf16.msra.mxu0 0
    %3414 = vmatprep.subr.bf16.mxu0 0
    %3415 = vmatpush1.bf16.msra.mxu0 0
    %3416 = vmatprep.subr.bf16.mxu0 0
    %3417 = vmatpush1.bf16.msra.mxu0 0
    %3418 = vmatprep.subr.bf16.mxu0 0
    %3419 = vmatpush1.bf16.msra.mxu0 0
    %3420 = vmatprep.subr.bf16.mxu0 0
    %3421 = vmatpush1.bf16.msra.mxu0 0
    %3422 = vmatprep.subr.bf16.mxu0 0
    %3423 = vmatpush1.bf16.msra.mxu0 0
    %3424 = vmatprep.subr.bf16.mxu0 0
    %3425 = vmatpush1.bf16.msra.mxu0 0
    %3426 = vmatprep.subr.bf16.mxu0 0
    %3427 = vmatpush1.bf16.msra.mxu0 0
    %3428 = vmatprep.subr.bf16.mxu0 0
    %3429 = vmatpush1.bf16.msra.mxu0 0
    %3430 = vmatprep.subr.bf16.mxu0 0
    %3431 = vmatpush1.bf16.msra.mxu0 0
    %3432 = vmatprep.subr.bf16.mxu0 0
    %3433 = vmatpush1.bf16.msra.mxu0 0
    %3434 = vmatprep.mubr.bf16.mxu0 0
    %3435 = vmatmul.mubr.bf16.gmra.mrb[0].mxu0 %v3400
    %v3436 = vpop.f32.mrb[0].mxu0
    %v3437 = vadd.f32 0.0, %v3436
    %v3438 = vpop.f32.mrb[0].mxu0
    %v3439 = vpop.f32.mrb[0].mxu0
    %v3440 = vadd.f32 0.0, %v3439
    %v3441 = vpop.f32.mrb[0].mxu0
    %3442 = vdwg.mxu0
    %v3443 = vpack.c.bf16 %v3440, %v3437
    %v3445 = vrot.slane %v3190, 4
    %v3447 = vsel %vm204, %v3443, 0
    %v3450 = vsel %vm742, %v3445, 0
    %3452 = vmatprep.subr.bf16.mxu0 0
    %3453 = vmatpush1.bf16.msra.mxu0 %v3450
    %3454 = vmatprep.subr.bf16.mxu0 0
    %3455 = vmatpush1.bf16.msra.mxu0 0
    %3456 = vmatprep.subr.bf16.mxu0 0
    %3457 = vmatpush1.bf16.msra.mxu0 0
    %3458 = vmatprep.subr.bf16.mxu0 0
    %3459 = vmatpush1.bf16.msra.mxu0 0
    %3460 = vmatprep.subr.bf16.mxu0 0
    %3461 = vmatpush1.bf16.msra.mxu0 0
    %3462 = vmatprep.subr.bf16.mxu0 0
    %3463 = vmatpush1.bf16.msra.mxu0 0
    %3464 = vmatprep.subr.bf16.mxu0 0
    %3465 = vmatpush1.bf16.msra.mxu0 0
    %3466 = vmatprep.subr.bf16.mxu0 0
    %3467 = vmatpush1.bf16.msra.mxu0 0
    %3468 = vmatprep.subr.bf16.mxu0 0
    %3469 = vmatpush1.bf16.msra.mxu0 0
    %3470 = vmatprep.subr.bf16.mxu0 0
    %3471 = vmatpush1.bf16.msra.mxu0 0
    %3472 = vmatprep.subr.bf16.mxu0 0
    %3473 = vmatpush1.bf16.msra.mxu0 0
    %3474 = vmatprep.subr.bf16.mxu0 0
    %3475 = vmatpush1.bf16.msra.mxu0 0
    %3476 = vmatprep.subr.bf16.mxu0 0
    %3477 = vmatpush1.bf16.msra.mxu0 0
    %3478 = vmatprep.subr.bf16.mxu0 0
    %3479 = vmatpush1.bf16.msra.mxu0 0
    %3480 = vmatprep.subr.bf16.mxu0 0
    %3481 = vmatpush1.bf16.msra.mxu0 0
    %3482 = vmatprep.subr.bf16.mxu0 0
    %3483 = vmatpush1.bf16.msra.mxu0 0
    %3484 = vmatprep.mubr.bf16.mxu0 0
    %3485 = vmatmul.mubr.bf16.gmra.mrb[0].mxu0 %v3447
    %v3486 = vpop.f32.mrb[0].mxu0
    %v3487 = vadd.f32 0.0, %v3486
    %v3488 = vpop.f32.mrb[0].mxu0
    %v3489 = vpop.f32.mrb[0].mxu0
    %v3490 = vadd.f32 0.0, %v3489
    %v3491 = vpop.f32.mrb[0].mxu0
    %3492 = vdwg.mxu0
    %v3494 = vsel %vm204, %v3315, 0
    %v3497 = vsel %vm742, %v3190, 0
    %3499 = vmatprep.subr.bf16.mxu0 0
    %3500 = vmatpush1.bf16.msra.mxu0 %v3497
    %3501 = vmatprep.subr.bf16.mxu0 0
    %3502 = vmatpush1.bf16.msra.mxu0 0
    %3503 = vmatprep.subr.bf16.mxu0 0
    %3504 = vmatpush1.bf16.msra.mxu0 0
    %3505 = vmatprep.subr.bf16.mxu0 0
    %3506 = vmatpush1.bf16.msra.mxu0 0
    %3507 = vmatprep.subr.bf16.mxu0 0
    %3508 = vmatpush1.bf16.msra.mxu0 0
    %3509 = vmatprep.subr.bf16.mxu0 0
    %3510 = vmatpush1.bf16.msra.mxu0 0
    %3511 = vmatprep.subr.bf16.mxu0 0
    %3512 = vmatpush1.bf16.msra.mxu0 0
    %3513 = vmatprep.subr.bf16.mxu0 0
    %3514 = vmatpush1.bf16.msra.mxu0 0
    %3515 = vmatprep.subr.bf16.mxu0 0
    %3516 = vmatpush1.bf16.msra.mxu0 0
    %3517 = vmatprep.subr.bf16.mxu0 0
    %3518 = vmatpush1.bf16.msra.mxu0 0
    %3519 = vmatprep.subr.bf16.mxu0 0
    %3520 = vmatpush1.bf16.msra.mxu0 0
    %3521 = vmatprep.subr.bf16.mxu0 0
    %3522 = vmatpush1.bf16.msra.mxu0 0
    %3523 = vmatprep.subr.bf16.mxu0 0
    %3524 = vmatpush1.bf16.msra.mxu0 0
    %3525 = vmatprep.subr.bf16.mxu0 0
    %3526 = vmatpush1.bf16.msra.mxu0 0
    %3527 = vmatprep.subr.bf16.mxu0 0
    %3528 = vmatpush1.bf16.msra.mxu0 0
    %3529 = vmatprep.subr.bf16.mxu0 0
    %3530 = vmatpush1.bf16.msra.mxu0 0
    %3531 = vmatprep.mubr.bf16.mxu0 0
    %3532 = vmatmul.mubr.bf16.gmra.mrb[0].mxu0 %v3494
    %v3533 = vpop.f32.mrb[0].mxu0
    %v3534 = vadd.f32 %v3487, %v3533
    %v3535 = vpop.f32.mrb[0].mxu0
    %v3536 = vpop.f32.mrb[0].mxu0
    %v3537 = vadd.f32 %v3490, %v3536
    %v3538 = vpop.f32.mrb[0].mxu0
    %3539 = vdwg.mxu0
    %3540 = vrot.lane.b32.xlu0 %v3188, 112
    %v3541 = vpop.permute.xlu0 %3540
    %3542 = vrot.lane.b32.xlu0 %v3189, 112
    %v3543 = vpop.permute.xlu0 %3542
    %v3545 = vsel %vm204, %v3541, 0
    %v3548 = vsel %vm204, %v3543, 0
    %3550 = vmatprep.subr.bf16.mxu0 0
    %3551 = vmatpush1.bf16.xpose.msra.mxu0 %v3548
    %3552 = vmatprep.subr.bf16.mxu0 0
    %3553 = vmatpush1.bf16.xpose.msra.mxu0 0
    %3554 = vmatprep.subr.bf16.mxu0 0
    %3555 = vmatpush1.bf16.xpose.msra.mxu0 0
    %3556 = vmatprep.subr.bf16.mxu0 0
    %3557 = vmatpush1.bf16.xpose.msra.mxu0 0
    %3558 = vmatprep.subr.bf16.mxu0 0
    %3559 = vmatpush1.bf16.xpose.msra.mxu0 0
    %3560 = vmatprep.subr.bf16.mxu0 0
    %3561 = vmatpush1.bf16.xpose.msra.mxu0 0
    %3562 = vmatprep.subr.bf16.mxu0 0
    %3563 = vmatpush1.bf16.xpose.msra.mxu0 0
    %3564 = vmatprep.subr.bf16.mxu0 0
    %3565 = vmatpush1.bf16.xpose.msra.mxu0 0
    %3566 = vmatprep.subr.bf16.mxu0 0
    %3567 = vmatpush1.bf16.xpose.msra.mxu0 0
    %3568 = vmatprep.subr.bf16.mxu0 0
    %3569 = vmatpush1.bf16.xpose.msra.mxu0 0
    %3570 = vmatprep.subr.bf16.mxu0 0
    %3571 = vmatpush1.bf16.xpose.msra.mxu0 0
    %3572 = vmatprep.subr.bf16.mxu0 0
    %3573 = vmatpush1.bf16.xpose.msra.mxu0 0
    %3574 = vmatprep.subr.bf16.mxu0 0
    %3575 = vmatpush1.bf16.xpose.msra.mxu0 0
    %3576 = vmatprep.subr.bf16.mxu0 0
    %3577 = vmatpush1.bf16.xpose.msra.mxu0 0
    %3578 = vmatprep.subr.bf16.mxu0 0
    %3579 = vmatpush1.bf16.xpose.msra.mxu0 0
    %3580 = vmatprep.subr.bf16.mxu0 0
    %3581 = vmatpush1.bf16.xpose.msra.mxu0 0
    %3582 = vmatprep.mubr.bf16.mxu0 0
    %3583 = vmatmul.mubr.bf16.gmra.mrb[0].mxu0 %v3545
    %v3584 = vpop.f32.mrb[0].mxu0
    %v3585 = vadd.f32 0.0, %v3584
    %v3586 = vpop.f32.mrb[0].mxu0
    %v3587 = vpop.f32.mrb[0].mxu0
    %v3588 = vadd.f32 0.0, %v3587
    %v3589 = vpop.f32.mrb[0].mxu0
    %3590 = vdwg.mxu0
    %v3591 = vmul.f32 %v3585, 0.35355338
    %v3592 = vmul.f32 %v3588, 0.35355338
    %v3593 = vadd.f32 %v3591, %v224
    %v3594 = vadd.f32 %v3592, %v239
    %v3595 = vsel %vm539, %v3593, -inf
    %3596 = vmax.xlane.f32.xlu0 %v3595
    %v3597 = vpop.xlane.xlu0 %3596
    %v3598 = vsel %vm539, %v3594, -inf
    %3599 = vmax.xlane.f32.xlu0 %v3598
    %v3600 = vpop.xlane.xlu0 %3599
    %v3601 = vsub.f32 %v3593, %v3597
    %v3602 = vsub.f32 %v3594, %v3600
    %v3603 = vmul.f32 %v3601, 1.442695
    %v3604 = vpow.pop %v3603
    %v3605 = vmul.f32 %v3602, 1.442695
    %v3606 = vpow.pop %v3605
    %v3607 = vsel %vm539, %v3604, 0.0
    %3608 = vadd.xlane.f32.xlu0 %v3607
    %v3609 = vpop.xlane.xlu0 %3608
    %v3610 = vsel %vm539, %v3606, 0.0
    %3611 = vadd.xlane.f32.xlu0 %v3610
    %v3612 = vpop.xlane.xlu0 %3611
    %v3613 = vrcp.pop %v3609
    %v3614 = vrcp.pop %v3612
    %v3615 = vmul.f32 %v3604, %v3613
    %v3616 = vmul.f32 %v3606, %v3614
    %v3617 = vadd.f32 %v3615, %v3616
    %v3618 = vpack.c.bf16 %v3616, %v3615
    %3619 = vrot.lane.b32.xlu0 %v3189, 80
    %v3620 = vpop.permute.xlu0 %3619
    %v3623 = vsel %vm539, %v3618, 0
    %3625 = vmatprep.subr.bf16.mxu0 0
    %3626 = vmatpush1.bf16.msra.mxu0 %v3620
    %3627 = vmatprep.subr.bf16.mxu0 0
    %3628 = vmatpush1.bf16.msra.mxu0 0
    %3629 = vmatprep.subr.bf16.mxu0 0
    %3630 = vmatpush1.bf16.msra.mxu0 0
    %3631 = vmatprep.subr.bf16.mxu0 0
    %3632 = vmatpush1.bf16.msra.mxu0 0
    %3633 = vmatprep.subr.bf16.mxu0 0
    %3634 = vmatpush1.bf16.msra.mxu0 0
    %3635 = vmatprep.subr.bf16.mxu0 0
    %3636 = vmatpush1.bf16.msra.mxu0 0
    %3637 = vmatprep.subr.bf16.mxu0 0
    %3638 = vmatpush1.bf16.msra.mxu0 0
    %3639 = vmatprep.subr.bf16.mxu0 0
    %3640 = vmatpush1.bf16.msra.mxu0 0
    %3641 = vmatprep.subr.bf16.mxu0 0
    %3642 = vmatpush1.bf16.msra.mxu0 0
    %3643 = vmatprep.subr.bf16.mxu0 0
    %3644 = vmatpush1.bf16.msra.mxu0 0
    %3645 = vmatprep.subr.bf16.mxu0 0
    %3646 = vmatpush1.bf16.msra.mxu0 0
    %3647 = vmatprep.subr.bf16.mxu0 0
    %3648 = vmatpush1.bf16.msra.mxu0 0
    %3649 = vmatprep.subr.bf16.mxu0 0
    %3650 = vmatpush1.bf16.msra.mxu0 0
    %3651 = vmatprep.subr.bf16.mxu0 0
    %3652 = vmatpush1.bf16.msra.mxu0 0
    %3653 = vmatprep.subr.bf16.mxu0 0
    %3654 = vmatpush1.bf16.msra.mxu0 0
    %3655 = vmatprep.subr.bf16.mxu0 0
    %3656 = vmatpush1.bf16.msra.mxu0 0
    %3657 = vmatprep.mubr.bf16.mxu0 0
    %3658 = vmatmul.mubr.bf16.gmra.mrb[0].mxu0 %v3623
    %v3659 = vpop.f32.mrb[0].mxu0
    %v3660 = vadd.f32 0.0, %v3659
    %v3661 = vpop.f32.mrb[0].mxu0
    %v3662 = vpop.f32.mrb[0].mxu0
    %v3663 = vadd.f32 0.0, %v3662
    %v3664 = vpop.f32.mrb[0].mxu0
    %3665 = vdwg.mxu0
    %v3666 = vpack.c.bf16 %v3663, %v3660
    %v3668 = vsel %vm204, %v3666, 0
    %v3671 = vsel %vm742, %v3191, 0
    %3673 = vmatprep.subr.bf16.mxu0 0
    %3674 = vmatpush1.bf16.msra.mxu0 %v3671
    %3675 = vmatprep.subr.bf16.mxu0 0
    %3676 = vmatpush1.bf16.msra.mxu0 0
    %3677 = vmatprep.subr.bf16.mxu0 0
    %3678 = vmatpush1.bf16.msra.mxu0 0
    %3679 = vmatprep.subr.bf16.mxu0 0
    %3680 = vmatpush1.bf16.msra.mxu0 0
    %3681 = vmatprep.subr.bf16.mxu0 0
    %3682 = vmatpush1.bf16.msra.mxu0 0
    %3683 = vmatprep.subr.bf16.mxu0 0
    %3684 = vmatpush1.bf16.msra.mxu0 0
    %3685 = vmatprep.subr.bf16.mxu0 0
    %3686 = vmatpush1.bf16.msra.mxu0 0
    %3687 = vmatprep.subr.bf16.mxu0 0
    %3688 = vmatpush1.bf16.msra.mxu0 0
    %3689 = vmatprep.subr.bf16.mxu0 0
    %3690 = vmatpush1.bf16.msra.mxu0 0
    %3691 = vmatprep.subr.bf16.mxu0 0
    %3692 = vmatpush1.bf16.msra.mxu0 0
    %3693 = vmatprep.subr.bf16.mxu0 0
    %3694 = vmatpush1.bf16.msra.mxu0 0
    %3695 = vmatprep.subr.bf16.mxu0 0
    %3696 = vmatpush1.bf16.msra.mxu0 0
    %3697 = vmatprep.subr.bf16.mxu0 0
    %3698 = vmatpush1.bf16.msra.mxu0 0
    %3699 = vmatprep.subr.bf16.mxu0 0
    %3700 = vmatpush1.bf16.msra.mxu0 0
    %3701 = vmatprep.subr.bf16.mxu0 0
    %3702 = vmatpush1.bf16.msra.mxu0 0
    %3703 = vmatprep.subr.bf16.mxu0 0
    %3704 = vmatpush1.bf16.msra.mxu0 0
    %3705 = vmatprep.mubr.bf16.mxu0 0
    %3706 = vmatmul.mubr.bf16.gmra.mrb[0].mxu0 %v3668
    %v3707 = vpop.f32.mrb[0].mxu0
    %v3708 = vadd.f32 0.0, %v3707
    %v3709 = vpop.f32.mrb[0].mxu0
    %v3710 = vpop.f32.mrb[0].mxu0
    %v3711 = vadd.f32 0.0, %v3710
    %v3712 = vpop.f32.mrb[0].mxu0
    %3713 = vdwg.mxu0
    %v3714 = vadd.f32 %v3534, %v3708
    %v3715 = vadd.f32 %v3537, %v3711
    %3716 = vrot.lane.b32.xlu0 %v3188, 104
    %v3717 = vpop.permute.xlu0 %3716
    %3718 = vrot.lane.b32.xlu0 %v3189, 104
    %v3719 = vpop.permute.xlu0 %3718
    %v3721 = vsel %vm204, %v3717, 0
    %v3724 = vsel %vm204, %v3719, 0
    %3726 = vmatprep.subr.bf16.mxu0 0
    %3727 = vmatpush1.bf16.xpose.msra.mxu0 %v3724
    %3728 = vmatprep.subr.bf16.mxu0 0
    %3729 = vmatpush1.bf16.xpose.msra.mxu0 0
    %3730 = vmatprep.subr.bf16.mxu0 0
    %3731 = vmatpush1.bf16.xpose.msra.mxu0 0
    %3732 = vmatprep.subr.bf16.mxu0 0
    %3733 = vmatpush1.bf16.xpose.msra.mxu0 0
    %3734 = vmatprep.subr.bf16.mxu0 0
    %3735 = vmatpush1.bf16.xpose.msra.mxu0 0
    %3736 = vmatprep.subr.bf16.mxu0 0
    %3737 = vmatpush1.bf16.xpose.msra.mxu0 0
    %3738 = vmatprep.subr.bf16.mxu0 0
    %3739 = vmatpush1.bf16.xpose.msra.mxu0 0
    %3740 = vmatprep.subr.bf16.mxu0 0
    %3741 = vmatpush1.bf16.xpose.msra.mxu0 0
    %3742 = vmatprep.subr.bf16.mxu0 0
    %3743 = vmatpush1.bf16.xpose.msra.mxu0 0
    %3744 = vmatprep.subr.bf16.mxu0 0
    %3745 = vmatpush1.bf16.xpose.msra.mxu0 0
    %3746 = vmatprep.subr.bf16.mxu0 0
    %3747 = vmatpush1.bf16.xpose.msra.mxu0 0
    %3748 = vmatprep.subr.bf16.mxu0 0
    %3749 = vmatpush1.bf16.xpose.msra.mxu0 0
    %3750 = vmatprep.subr.bf16.mxu0 0
    %3751 = vmatpush1.bf16.xpose.msra.mxu0 0
    %3752 = vmatprep.subr.bf16.mxu0 0
    %3753 = vmatpush1.bf16.xpose.msra.mxu0 0
    %3754 = vmatprep.subr.bf16.mxu0 0
    %3755 = vmatpush1.bf16.xpose.msra.mxu0 0
    %3756 = vmatprep.subr.bf16.mxu0 0
    %3757 = vmatpush1.bf16.xpose.msra.mxu0 0
    %3758 = vmatprep.mubr.bf16.mxu0 0
    %3759 = vmatmul.mubr.bf16.gmra.mrb[0].mxu0 %v3721
    %v3760 = vpop.f32.mrb[0].mxu0
    %v3761 = vadd.f32 0.0, %v3760
    %v3762 = vpop.f32.mrb[0].mxu0
    %v3763 = vpop.f32.mrb[0].mxu0
    %v3764 = vadd.f32 0.0, %v3763
    %v3765 = vpop.f32.mrb[0].mxu0
    %3766 = vdwg.mxu0
    %v3767 = vmul.f32 %v3761, 0.35355338
    %v3768 = vmul.f32 %v3764, 0.35355338
    %v3769 = vadd.f32 %v3767, %v224
    %v3770 = vadd.f32 %v3768, %v239
    %v3771 = vsel %vm539, %v3769, -inf
    %3772 = vmax.xlane.f32.xlu0 %v3771
    %v3773 = vpop.xlane.xlu0 %3772
    %v3774 = vsel %vm539, %v3770, -inf
    %3775 = vmax.xlane.f32.xlu0 %v3774
    %v3776 = vpop.xlane.xlu0 %3775
    %v3777 = vsub.f32 %v3769, %v3773
    %v3778 = vsub.f32 %v3770, %v3776
    %v3779 = vmul.f32 %v3777, 1.442695
    %v3780 = vpow.pop %v3779
    %v3781 = vmul.f32 %v3778, 1.442695
    %v3782 = vpow.pop %v3781
    %v3783 = vsel %vm539, %v3780, 0.0
    %3784 = vadd.xlane.f32.xlu0 %v3783
    %v3785 = vpop.xlane.xlu0 %3784
    %v3786 = vsel %vm539, %v3782, 0.0
    %3787 = vadd.xlane.f32.xlu0 %v3786
    %v3788 = vpop.xlane.xlu0 %3787
    %v3789 = vrcp.pop %v3785
    %v3790 = vrcp.pop %v3788
    %v3791 = vmul.f32 %v3780, %v3789
    %v3792 = vmul.f32 %v3782, %v3790
    %v3793 = vadd.f32 %v3791, %v3792
    %v3794 = vpack.c.bf16 %v3792, %v3791
    %3795 = vrot.lane.b32.xlu0 %v3189, 72
    %v3796 = vpop.permute.xlu0 %3795
    %v3799 = vsel %vm539, %v3794, 0
    %3801 = vmatprep.subr.bf16.mxu0 0
    %3802 = vmatpush1.bf16.msra.mxu0 %v3796
    %3803 = vmatprep.subr.bf16.mxu0 0
    %3804 = vmatpush1.bf16.msra.mxu0 0
    %3805 = vmatprep.subr.bf16.mxu0 0
    %3806 = vmatpush1.bf16.msra.mxu0 0
    %3807 = vmatprep.subr.bf16.mxu0 0
    %3808 = vmatpush1.bf16.msra.mxu0 0
    %3809 = vmatprep.subr.bf16.mxu0 0
    %3810 = vmatpush1.bf16.msra.mxu0 0
    %3811 = vmatprep.subr.bf16.mxu0 0
    %3812 = vmatpush1.bf16.msra.mxu0 0
    %3813 = vmatprep.subr.bf16.mxu0 0
    %3814 = vmatpush1.bf16.msra.mxu0 0
    %3815 = vmatprep.subr.bf16.mxu0 0
    %3816 = vmatpush1.bf16.msra.mxu0 0
    %3817 = vmatprep.subr.bf16.mxu0 0
    %3818 = vmatpush1.bf16.msra.mxu0 0
    %3819 = vmatprep.subr.bf16.mxu0 0
    %3820 = vmatpush1.bf16.msra.mxu0 0
    %3821 = vmatprep.subr.bf16.mxu0 0
    %3822 = vmatpush1.bf16.msra.mxu0 0
    %3823 = vmatprep.subr.bf16.mxu0 0
    %3824 = vmatpush1.bf16.msra.mxu0 0
    %3825 = vmatprep.subr.bf16.mxu0 0
    %3826 = vmatpush1.bf16.msra.mxu0 0
    %3827 = vmatprep.subr.bf16.mxu0 0
    %3828 = vmatpush1.bf16.msra.mxu0 0
    %3829 = vmatprep.subr.bf16.mxu0 0
    %3830 = vmatpush1.bf16.msra.mxu0 0
    %3831 = vmatprep.subr.bf16.mxu0 0
    %3832 = vmatpush1.bf16.msra.mxu0 0
    %3833 = vmatprep.mubr.bf16.mxu0 0
    %3834 = vmatmul.mubr.bf16.gmra.mrb[0].mxu0 %v3799
    %v3835 = vpop.f32.mrb[0].mxu0
    %v3836 = vadd.f32 0.0, %v3835
    %v3837 = vpop.f32.mrb[0].mxu0
    %v3838 = vpop.f32.mrb[0].mxu0
    %v3839 = vadd.f32 0.0, %v3838
    %v3840 = vpop.f32.mrb[0].mxu0
    %3841 = vdwg.mxu0
    %v3842 = vpack.c.bf16 %v3839, %v3836
    %v3844 = vrot.slane %v3191, 4
    %v3846 = vsel %vm204, %v3842, 0
    %v3849 = vsel %vm742, %v3844, 0
    %3851 = vmatprep.subr.bf16.mxu0 0
    %3852 = vmatpush1.bf16.msra.mxu0 %v3849
    %3853 = vmatprep.subr.bf16.mxu0 0
    %3854 = vmatpush1.bf16.msra.mxu0 0
    %3855 = vmatprep.subr.bf16.mxu0 0
    %3856 = vmatpush1.bf16.msra.mxu0 0
    %3857 = vmatprep.subr.bf16.mxu0 0
    %3858 = vmatpush1.bf16.msra.mxu0 0
    %3859 = vmatprep.subr.bf16.mxu0 0
    %3860 = vmatpush1.bf16.msra.mxu0 0
    %3861 = vmatprep.subr.bf16.mxu0 0
    %3862 = vmatpush1.bf16.msra.mxu0 0
    %3863 = vmatprep.subr.bf16.mxu0 0
    %3864 = vmatpush1.bf16.msra.mxu0 0
    %3865 = vmatprep.subr.bf16.mxu0 0
    %3866 = vmatpush1.bf16.msra.mxu0 0
    %3867 = vmatprep.subr.bf16.mxu0 0
    %3868 = vmatpush1.bf16.msra.mxu0 0
    %3869 = vmatprep.subr.bf16.mxu0 0
    %3870 = vmatpush1.bf16.msra.mxu0 0
    %3871 = vmatprep.subr.bf16.mxu0 0
    %3872 = vmatpush1.bf16.msra.mxu0 0
    %3873 = vmatprep.subr.bf16.mxu0 0
    %3874 = vmatpush1.bf16.msra.mxu0 0
    %3875 = vmatprep.subr.bf16.mxu0 0
    %3876 = vmatpush1.bf16.msra.mxu0 0
    %3877 = vmatprep.subr.bf16.mxu0 0
    %3878 = vmatpush1.bf16.msra.mxu0 0
    %3879 = vmatprep.subr.bf16.mxu0 0
    %3880 = vmatpush1.bf16.msra.mxu0 0
    %3881 = vmatprep.subr.bf16.mxu0 0
    %3882 = vmatpush1.bf16.msra.mxu0 0
    %3883 = vmatprep.mubr.bf16.mxu0 0
    %3884 = vmatmul.mubr.bf16.gmra.mrb[0].mxu0 %v3846
    %v3885 = vpop.f32.mrb[0].mxu0
    %v3886 = vadd.f32 0.0, %v3885
    %v3887 = vpop.f32.mrb[0].mxu0
    %v3888 = vpop.f32.mrb[0].mxu0
    %v3889 = vadd.f32 0.0, %v3888
    %v3890 = vpop.f32.mrb[0].mxu0
    %3891 = vdwg.mxu0
    %v3892 = vadd.f32 %v3714, %v3886
    %v3893 = vadd.f32 %v3715, %v3889
    %3895 = vrot.lane.b32.xlu0 %v3394, 16
    %v3896 = vpop.permute.xlu0 %3895
    %3899 = vrot.lane.b32.xlu0 %v3617, 32
    %v3900 = vpop.permute.xlu0 %3899
    %3903 = vrot.lane.b32.xlu0 %v3793, 48
    %v3904 = vpop.permute.xlu0 %3903
    %v3906 = vsel %vm539, %v3265, %v3896
    %v3907 = vsel %vm263, %v3906, %v3900
    %v3908 = vsel %vm2031, %v3907, %v3904
    %v3910 = vlaneseq
    %v3911 = vshrl.u32 %v3910, 7
    %v3912 = vsub.s32 0, %v3911
    %v3913 = vrot.slane %v3187, %v3912
    %v3915 = vadd.f32 %v3892, %v3913
    %v3916 = vadd.f32 %v3893, %v3913
    %v3917 = vadd.f32 %v3067, %v3915
    %v3918 = vadd.f32 %v3068, %v3916
    %3920 = vrot.lane.b32.xlu0 %v3908, 64
    %v3921 = vpop.permute.xlu0 %3920
    %vm3923 = vcmask 1048064
    %3924 = vst.msk [vmem:[#allocation18] sm:$0xff] %vm3923, %v3921
    %v3925 = vsel %vm263, %v3917, 0.0
    %3926 = vadd.xlane.f32.xlu0 %v3925
    %v3927 = vpop.xlane.xlu0 %3926
    %v3928 = vsel %vm263, %v3918, 0.0
    %3929 = vadd.xlane.f32.xlu0 %v3928
    %v3930 = vpop.xlane.xlu0 %3929
    %v3931 = vmul.f32 %v3927, %v372
    %v3932 = vmul.f32 %v3930, %v372
    %v3933 = vsub.f32 %v3917, %v3931
    %v3934 = vsub.f32 %v3918, %v3932
    %v3935 = vmul.f32 %v3933, %v3933
    %v3936 = vmul.f32 %v3934, %v3934
    %v3937 = vsel %vm263, %v3935, 0.0
    %3938 = vadd.xlane.f32.xlu0 %v3937
    %v3939 = vpop.xlane.xlu0 %3938
    %v3940 = vsel %vm263, %v3936, 0.0
    %3941 = vadd.xlane.f32.xlu0 %v3940
    %v3942 = vpop.xlane.xlu0 %3941
    %v3943 = vmul.f32 %v3939, 0.032258064
    %v3944 = vmul.f32 %v3942, 0.032258064
    %v3945 = vrsqrt.pop %v3943
    %v3946 = vmul.f32 %v3943, %v3945
    %vm3947 = vcmp.eq.f32.partialorder %v3943, inf
    %v3948 = vsel %vm3947, %v3943, %v3946
    %vm3949 = vcmp.eq.f32.partialorder %v3943, 0.0
    %v3950 = vand.u32 %v3943, 2147483648
    %v3951 = vsel %vm3949, %v3950, %v3948
    %v3952 = vrsqrt.pop %v3944
    %v3953 = vmul.f32 %v3944, %v3952
    %vm3954 = vcmp.eq.f32.partialorder %v3944, inf
    %v3955 = vsel %vm3954, %v3944, %v3953
    %vm3956 = vcmp.eq.f32.partialorder %v3944, 0.0
    %v3957 = vand.u32 %v3944, 2147483648
    %v3958 = vsel %vm3956, %v3957, %v3955
    %v3959 = vadd.f32 %v3951, 1e-06
    %v3960 = vadd.f32 %v3958, 1e-06
    %v3961 = vrcp.pop %v3959
    %v3962 = vrcp.pop %v3960
    %v3963 = vlaneseq
    %v3964 = vshrl.u32 %v3963, 7
    %v3965 = vsub.s32 2, %v3964
    %v3966 = vrot.slane %v2235, %v3965
    %v3967 = vmul.f32 %v3966, %v3933
    %v3968 = vmul.f32 %v3966, %v3934
    %v3969 = vmul.f32 %v3967, %v3961
    %v3970 = vmul.f32 %v3968, %v3962
    %v3971 = vlaneseq
    %v3972 = vshrl.u32 %v3971, 7
    %v3973 = vsub.s32 2, %v3972
    %v3974 = vrot.slane %v2237, %v3973
    %v3975 = vadd.f32 %v3969, %v3974
    %v3976 = vadd.f32 %v3970, %v3974
    %v3977 = vpack.c.bf16 %v3976, %v3975
    %s3978 = scalar_lea.vmem [#allocation14], 32
    %v3979 = vld [vmem:[%s3978] sm:$0xff]
    %v3980 = vld [vmem:[%s3978 + $0x8] sm:$0xff]
    %v3981 = vld [vmem:[%s3978 + $0x10] sm:$0xff]
    %v3982 = vld [vmem:[%s3978 + $0x18] sm:$0xff]
    %v3983 = vpack.c.bf16 %v3980, %v3979
    %v3984 = vpack.c.bf16 %v3982, %v3981
    %s3985 = scalar_lea.vmem [#allocation16], 1
    %v3986 = vld [vmem:[%s3985] sm:$0x1]
    %v3988 = vlaneseq
    %v3989 = vshrl.u32 %v3988, 7
    %v3990 = vsub.s32 0, %v3989
    %v3991 = vrot.slane %v3986, %v3990
    %v3994 = vsel %vm263, %v3977, 0
    %3996 = vmatprep.subr.bf16.mxu0 0
    %3997 = vmatpush1.bf16.msra.mxu0 %v3983
    %3998 = vmatprep.subr.bf16.mxu0 0
    %3999 = vmatpush1.bf16.msra.mxu0 %v3984
    %4000 = vmatprep.subr.bf16.mxu0 0
    %4001 = vmatpush1.bf16.msra.mxu0 0
    %4002 = vmatprep.subr.bf16.mxu0 0
    %4003 = vmatpush1.bf16.msra.mxu0 0
    %4004 = vmatprep.subr.bf16.mxu0 0
    %4005 = vmatpush1.bf16.msra.mxu0 0
    %4006 = vmatprep.subr.bf16.mxu0 0
    %4007 = vmatpush1.bf16.msra.mxu0 0
    %4008 = vmatprep.subr.bf16.mxu0 0
    %4009 = vmatpush1.bf16.msra.mxu0 0
    %4010 = vmatprep.subr.bf16.mxu0 0
    %4011 = vmatpush1.bf16.msra.mxu0 0
    %4012 = vmatprep.subr.bf16.mxu0 0
    %4013 = vmatpush1.bf16.msra.mxu0 0
    %4014 = vmatprep.subr.bf16.mxu0 0
    %4015 = vmatpush1.bf16.msra.mxu0 0
    %4016 = vmatprep.subr.bf16.mxu0 0
    %4017 = vmatpush1.bf16.msra.mxu0 0
    %4018 = vmatprep.subr.bf16.mxu0 0
    %4019 = vmatpush1.bf16.msra.mxu0 0
    %4020 = vmatprep.subr.bf16.mxu0 0
    %4021 = vmatpush1.bf16.msra.mxu0 0
    %4022 = vmatprep.subr.bf16.mxu0 0
    %4023 = vmatpush1.bf16.msra.mxu0 0
    %4024 = vmatprep.subr.bf16.mxu0 0
    %4025 = vmatpush1.bf16.msra.mxu0 0
    %4026 = vmatprep.subr.bf16.mxu0 0
    %4027 = vmatpush1.bf16.msra.mxu0 0
    %4028 = vmatprep.mubr.bf16.mxu0 0
    %4029 = vmatmul.mubr.bf16.gmra.mrb[0].mxu0 %v3994
    %v4030 = vpop.f32.mrb[0].mxu0
    %v4031 = vadd.f32 %v3991, %v4030
    %v4032 = vpop.f32.mrb[0].mxu0
    %v4033 = vpop.f32.mrb[0].mxu0
    %v4034 = vadd.f32 %v3991, %v4033
    %v4035 = vpop.f32.mrb[0].mxu0
    %4036 = vdwg.mxu0
    %v4037 = vmax.f32 %v4031, 0.0
    %v4038 = vmax.f32 %v4034, 0.0
    %v4039 = vpack.c.bf16 %v4038, %v4037
    %s4040 = scalar_lea.vmem %s19, 128
    %v4041 = vld [vmem:[%s4040] sm:$0xff]
    %v4042 = vld [vmem:[%s4040 + $0x8] sm:$0xff]
    %v4043 = vld [vmem:[%s4040 + $0x10] sm:$0xff]
    %v4044 = vld [vmem:[%s4040 + $0x18] sm:$0xff]
    %v4045 = vld [vmem:[%s4040 + $0x20] sm:$0xff]
    %v4046 = vld [vmem:[%s4040 + $0x28] sm:$0xff]
    %v4047 = vld [vmem:[%s4040 + $0x30] sm:$0xff]
    %v4048 = vld [vmem:[%s4040 + $0x38] sm:$0xff]
    %v4049 = vld [vmem:[%s4040 + $0x40] sm:$0xff]
    %v4050 = vld [vmem:[%s4040 + $0x48] sm:$0xff]
    %v4051 = vld [vmem:[%s4040 + $0x50] sm:$0xff]
    %v4052 = vld [vmem:[%s4040 + $0x58] sm:$0xff]
    %v4053 = vld [vmem:[%s4040 + $0x60] sm:$0xff]
    %v4054 = vld [vmem:[%s4040 + $0x68] sm:$0xff]
    %v4055 = vld [vmem:[%s4040 + $0x70] sm:$0xff]
    %v4056 = vld [vmem:[%s4040 + $0x78] sm:$0xff]
    %v4057 = vpack.c.bf16 %v4042, %v4041
    %v4058 = vpack.c.bf16 %v4044, %v4043
    %v4059 = vpack.c.bf16 %v4046, %v4045
    %v4060 = vpack.c.bf16 %v4048, %v4047
    %v4061 = vpack.c.bf16 %v4050, %v4049
    %v4062 = vpack.c.bf16 %v4052, %v4051
    %v4063 = vpack.c.bf16 %v4054, %v4053
    %v4064 = vpack.c.bf16 %v4056, %v4055
    %4065 = vmatprep.subr.bf16.mxu0 0
    %4066 = vmatpush1.bf16.msra.mxu0 %v4057
    %4067 = vmatprep.subr.bf16.mxu0 0
    %4068 = vmatpush1.bf16.msra.mxu0 %v4058
    %4069 = vmatprep.subr.bf16.mxu0 0
    %4070 = vmatpush1.bf16.msra.mxu0 %v4059
    %4071 = vmatprep.subr.bf16.mxu0 0
    %4072 = vmatpush1.bf16.msra.mxu0 %v4060
    %4073 = vmatprep.subr.bf16.mxu0 0
    %4074 = vmatpush1.bf16.msra.mxu0 %v4061
    %4075 = vmatprep.subr.bf16.mxu0 0
    %4076 = vmatpush1.bf16.msra.mxu0 %v4062
    %4077 = vmatprep.subr.bf16.mxu0 0
    %4078 = vmatpush1.bf16.msra.mxu0 %v4063
    %4079 = vmatprep.subr.bf16.mxu0 0
    %4080 = vmatpush1.bf16.msra.mxu0 %v4064
    %4081 = vmatprep.subr.bf16.mxu0 0
    %4082 = vmatpush1.bf16.msra.mxu0 0
    %4083 = vmatprep.subr.bf16.mxu0 0
    %4084 = vmatpush1.bf16.msra.mxu0 0
    %4085 = vmatprep.subr.bf16.mxu0 0
    %4086 = vmatpush1.bf16.msra.mxu0 0
    %4087 = vmatprep.subr.bf16.mxu0 0
    %4088 = vmatpush1.bf16.msra.mxu0 0
    %4089 = vmatprep.subr.bf16.mxu0 0
    %4090 = vmatpush1.bf16.msra.mxu0 0
    %4091 = vmatprep.subr.bf16.mxu0 0
    %4092 = vmatpush1.bf16.msra.mxu0 0
    %4093 = vmatprep.subr.bf16.mxu0 0
    %4094 = vmatpush1.bf16.msra.mxu0 0
    %4095 = vmatprep.subr.bf16.mxu0 0
    %4096 = vmatpush1.bf16.msra.mxu0 0
    %4097 = vmatprep.mubr.bf16.mxu0 0
    %4098 = vmatmul.mubr.bf16.gmra.mrb[0].mxu0 %v4039
    %v4099 = vpop.f32.mrb[0].mxu0
    %v4100 = vadd.f32 0.0, %v4099
    %v4101 = vpop.f32.mrb[0].mxu0
    %v4102 = vpop.f32.mrb[0].mxu0
    %v4103 = vadd.f32 0.0, %v4102
    %v4104 = vpop.f32.mrb[0].mxu0
    %4105 = vdwg.mxu0
    %v4106 = vadd.f32 %v3917, %v4100
    %v4107 = vadd.f32 %v3918, %v4103
    %s4108 = scalar_lea.vmem %s20, 1
    %v4109 = vld [vmem:[%s4108] sm:$0x1]
    %v4111 = vlaneseq
    %v4112 = vshrl.u32 %v4111, 7
    %v4113 = vsub.s32 0, %v4112
    %v4114 = vrot.slane %v4109, %v4113
    %v4116 = vadd.f32 %v4106, %v4114
    %v4117 = vadd.f32 %v4107, %v4114
    %v4118 = vld [vmem:[%s21] sm:$0x1]
    %v4119 = vld [vmem:[%s22] sm:$0x1]
    %v4120 = vsel %vm263, %v4116, 0.0
    %4121 = vadd.xlane.f32.xlu0 %v4120
    %v4122 = vpop.xlane.xlu0 %4121
    %v4123 = vsel %vm263, %v4117, 0.0
    %4124 = vadd.xlane.f32.xlu0 %v4123
    %v4125 = vpop.xlane.xlu0 %4124
    %v4126 = vmul.f32 %v4122, %v372
    %v4127 = vmul.f32 %v4125, %v372
    %v4128 = vsub.f32 %v4116, %v4126
    %v4129 = vsub.f32 %v4117, %v4127
    %v4130 = vmul.f32 %v4128, %v4128
    %v4131 = vmul.f32 %v4129, %v4129
    %v4132 = vsel %vm263, %v4130, 0.0
    %4133 = vadd.xlane.f32.xlu0 %v4132
    %v4134 = vpop.xlane.xlu0 %4133
    %v4135 = vsel %vm263, %v4131, 0.0
    %4136 = vadd.xlane.f32.xlu0 %v4135
    %v4137 = vpop.xlane.xlu0 %4136
    %v4138 = vmul.f32 %v4134, 0.032258064
    %v4139 = vmul.f32 %v4137, 0.032258064
    %v4140 = vrsqrt.pop %v4138
    %v4141 = vmul.f32 %v4138, %v4140
    %vm4142 = vcmp.eq.f32.partialorder %v4138, inf
    %v4143 = vsel %vm4142, %v4138, %v4141
    %vm4144 = vcmp.eq.f32.partialorder %v4138, 0.0
    %v4145 = vand.u32 %v4138, 2147483648
    %v4146 = vsel %vm4144, %v4145, %v4143
    %v4147 = vrsqrt.pop %v4139
    %v4148 = vmul.f32 %v4139, %v4147
    %vm4149 = vcmp.eq.f32.partialorder %v4139, inf
    %v4150 = vsel %vm4149, %v4139, %v4148
    %vm4151 = vcmp.eq.f32.partialorder %v4139, 0.0
    %v4152 = vand.u32 %v4139, 2147483648
    %v4153 = vsel %vm4151, %v4152, %v4150
    %v4154 = vadd.f32 %v4146, 1e-06
    %v4155 = vadd.f32 %v4153, 1e-06
    %v4156 = vrcp.pop %v4154
    %v4157 = vrcp.pop %v4155
    %v4159 = vlaneseq
    %v4160 = vshrl.u32 %v4159, 7
    %v4161 = vsub.s32 0, %v4160
    %v4162 = vrot.slane %v4118, %v4161
    %v4164 = vmul.f32 %v4162, %v4128
    %v4165 = vmul.f32 %v4162, %v4129
    %v4166 = vmul.f32 %v4164, %v4156
    %v4167 = vmul.f32 %v4165, %v4157
    %v4169 = vlaneseq
    %v4170 = vshrl.u32 %v4169, 7
    %v4171 = vsub.s32 0, %v4170
    %v4172 = vrot.slane %v4119, %v4171
    %v4174 = vadd.f32 %v4166, %v4172
    %v4175 = vadd.f32 %v4167, %v4172
    %4176 = vst.msk [vmem:[#allocation17] sm:$0xff] %vm263, %v4174
    %4177 = vst.msk [vmem:[#allocation17 + $0x8] sm:$0xff] %vm263, %v4175
    // Predicated region
    $region130: #{tpu_custom_call.1} parent=1 // pred_check
      _
    $region131: #{tpu_custom_call.1} parent=1 // pred_check_branch
      %4179 = sbr.rel (0) target = $region133
    $region132: #{tpu_custom_call.1} parent=1 // pred_region
      %s4181 = ssub.s32 256, 256
      %4182 = vsyncadd [#allocation4], %s4181
      %s4183 = sshll.u32 [#allocation17], 4
      %s4184 = int_to_ptr.vmem [resolvable:$true] %s4183
      %4189 = dma.vmem_to_hbm [thread:$0]  %s4184, 256, %s23, [#allocation4], 128, 128, 8
    $region133: #{tpu_custom_call.1} parent=1 // pred_fallthru
      _
    // Predicated region
    $region134: #{tpu_custom_call.1} parent=1 // pred_check
      _
    $region135: #{tpu_custom_call.1} parent=1 // pred_check_branch
      %4191 = sbr.rel (0) target = $region137
    $region136: #{tpu_custom_call.1} parent=1 // pred_region
      %s4193 = ssub.s32 128, 128
      %4194 = vsyncadd [#allocation19], %s4193
      %s4196 = sshll.u32 [#allocation18], 4
      %s4197 = int_to_ptr.vmem [resolvable:$true] %s4196
      %4199 = dma.vmem_to_hbm [thread:$0]  %s4197, 128, %s24, [#allocation19]
    $region137: #{tpu_custom_call.1} parent=1 // pred_fallthru
      _
    // Predicated region
    $region138: #{tpu_custom_call.1} parent=1 // pred_check
      _
    $region139: #{tpu_custom_call.1} parent=1 // pred_check_branch
      %4201 = sbr.rel (0) target = $region141
    $region140: #{tpu_custom_call.1} parent=1 // pred_region
      %4202 = dma.done [#allocation4], 256
    $region141: #{tpu_custom_call.1} parent=1 // pred_fallthru
      _
    // Predicated region
    $region142: #{tpu_custom_call.1} parent=1 // pred_check
      _
    $region143: #{tpu_custom_call.1} parent=1 // pred_check_branch
      %4204 = sbr.rel (0) target = $region145
    $region144: #{tpu_custom_call.1} parent=1 // pred_region
      %4205 = dma.done [#allocation19], 128
    $region145: #{tpu_custom_call.1} parent=1 // pred_fallthru
      _
    %4206 = vsyncpa [#allocation3], 1
    %4207 = vsyncpa [#allocation6], 1
    %4208 = vsyncpa [#allocation9], 1
    %4209 = vsyncpa [#allocation12], 1
    %4210 = vsyncpa [#allocation15], 1
    %4211 = vsyncpa [#allocation4], 1
    %4212 = vsyncpa [#allocation19], 1

</llo_original>
